<compile_context>
chip_gen: v5e
topology: v5e:2x2
jax: 0.10.0
libtpu: 0.0.40
codegen_flags: <defaults>
</compile_context>

<pallas_src>
import jax
import jax.numpy as jnp
from jax.experimental import pallas as pl
from jax.experimental.pallas import tpu as pltpu

B = 2            # batch
S = 6            # sequence length (fc expects embedding_dim * 6)
D = 64           # embedding_dim
H = 2            # nhead
DH = D // H      # head dim
DFF = 2048       # TransformerEncoderLayer default dim_feedforward
L = 2            # num_layers
VOCAB = 64
OUT = 63
OUT_PAD = 64     # lane-friendly padded output width
EPS = 1e-5       # LayerNorm eps (PyTorch default)


def _layernorm(x, g, b):
    mu = jnp.mean(x, axis=-1, keepdims=True)
    xc = x - mu
    var = jnp.mean(xc * xc, axis=-1, keepdims=True)
    return xc * jax.lax.rsqrt(var + EPS) * g + b


def transformer_kernel(x_ref, bias_ref,
                       inproj_wT_ref, inproj_b_ref,
                       outproj_wT_ref,
                       vecs_ref,
                       lin1_wT_ref, lin1_b_ref, lin2_wT_ref,
                       fc_w_ref, fc_b_ref,
                       o_ref,
                       x_vmem):
    l = pl.program_id(0)

    # load token rows once; carry x in VMEM scratch across layers (seq-first rows)
    @pl.when(l == 0)
    def _():
        x_vmem[...] = x_ref[...]

    x = x_vmem[...]                                   # (S*B, D) f32
    bias = bias_ref[...]                              # (S*B, S*B) additive mask
    scale = 1.0 / (DH ** 0.5)

    # packed per-layer D-wide vectors: [outproj_b, ln1_g, ln1_b, ln2_g, ln2_b, lin2_b]
    vecs = vecs_ref[...]                              # (6, D) f32
    outproj_b = vecs[0:1, :]
    ln1_g = vecs[1:2, :]
    ln1_b = vecs[2:3, :]
    ln2_g = vecs[3:4, :]
    ln2_b = vecs[4:5, :]
    lin2_b = vecs[5:6, :]

    # ---------------- self attention (this layer) ----------------
    # bf16 LHS x bf16 weights, f32 accumulation on the MXU.
    qkv = jnp.dot(x.astype(jnp.bfloat16), inproj_wT_ref[...],
                  preferred_element_type=jnp.float32) + inproj_b_ref[...]
    q = qkv[:, 0 * D:1 * D]
    k = qkv[:, 1 * D:2 * D]
    v = qkv[:, 2 * D:3 * D]

    heads = []
    for h in range(H):
        c0, c1 = h * DH, (h + 1) * DH
        s = jax.lax.dot_general(
            q[:, c0:c1], k[:, c0:c1], (((1,), (1,)), ((), ())),
            preferred_element_type=jnp.float32) * scale
        s = s + bias                                   # block-diagonal mask
        s = s - jnp.max(s, axis=-1, keepdims=True)
        p = jnp.exp(s)
        # approx reciprocal (EUP slot); small deliberate numerics trade-off.
        p = p * pl.reciprocal(jnp.sum(p, axis=-1, keepdims=True), approx=True)
        heads.append(jnp.dot(p, v[:, c0:c1], preferred_element_type=jnp.float32))

    # fused output projection: single K=64 matmul over concatenated heads
    concat = jnp.concatenate(heads, axis=-1)           # (S*B, D) f32
    attn_out = jnp.dot(concat.astype(jnp.bfloat16), outproj_wT_ref[...],
                       preferred_element_type=jnp.float32) + outproj_b

    x = _layernorm(x + attn_out, ln1_g, ln1_b)

    # ---------------- feed forward ----------------
    h1 = jnp.dot(x.astype(jnp.bfloat16), lin1_wT_ref[...],
                 preferred_element_type=jnp.float32) + lin1_b_ref[...]
    h1 = jnp.maximum(h1, 0.0)
    ff = jnp.dot(h1.astype(jnp.bfloat16), lin2_wT_ref[...],
                 preferred_element_type=jnp.float32) + lin2_b
    x = _layernorm(x + ff, ln2_g, ln2_b)

    x_vmem[...] = x

    # ---------------- final fc (last layer only) ----------------
    # seq-first rows => rows for position s are the contiguous block
    # x[s*B:(s+1)*B].  y[b] = fc_b + sum_s x_s[b] @ fc_w[s]   (f32, tiny).
    @pl.when(l == L - 1)
    def _():
        acc = jnp.zeros((B, OUT_PAD), jnp.float32) + fc_b_ref[...]
        for s_idx in range(S):
            xs = x[s_idx * B:(s_idx + 1) * B, :]               # (B, D)
            acc = acc + jnp.dot(xs, fc_w_ref[s_idx],
                                preferred_element_type=jnp.float32)
        o_ref[...] = acc


def ball_transformer_forward(tokens, p):
    # embedding lookup (glue, plain JAX); flatten SEQ-FIRST: row = s*B + b
    x = p["embedding"][tokens].astype(jnp.float32)            # (B, S, D)
    x = jnp.transpose(x, (1, 0, 2)).reshape(S * B, D)         # (S*B, D)

    # additive same-batch attention bias (constant, computed once per call)
    r = jnp.arange(B * S)
    same = (r[:, None] % B) == (r[None, :] % B)
    attn_bias = jnp.where(same, 0.0, -1e9).astype(jnp.float32)

    # pad fc to a 64-wide lane-dense output; slice back to 63 after the kernel
    fc_w_pad = jnp.zeros((S, D, OUT_PAD), jnp.float32)
    fc_w_pad = fc_w_pad.at[:, :, :OUT].set(p["fc_w"].astype(jnp.float32))
    fc_b_pad = jnp.zeros((1, OUT_PAD), jnp.float32)
    fc_b_pad = fc_b_pad.at[:, :OUT].set(p["fc_b"].astype(jnp.float32))

    grid_spec = pltpu.PrefetchScalarGridSpec(
        num_scalar_prefetch=0,
        grid=(L,),
        in_specs=[
            pl.BlockSpec((S * B, D), lambda l: (0, 0)),             # x (once)
            pl.BlockSpec((S * B, S * B), lambda l: (0, 0)),         # attn bias
            pl.BlockSpec((None, D, 3 * D), lambda l: (l, 0, 0)),    # inproj_wT (bf16)
            pl.BlockSpec((None, 1, 3 * D), lambda l: (l, 0, 0)),    # inproj_b
            pl.BlockSpec((None, D, D), lambda l: (l, 0, 0)),        # outproj_wT (bf16)
            pl.BlockSpec((None, 6, D), lambda l: (l, 0, 0)),        # packed vecs
            pl.BlockSpec((None, D, DFF), lambda l: (l, 0, 0)),      # lin1_wT (bf16)
            pl.BlockSpec((None, 1, DFF), lambda l: (l, 0, 0)),      # lin1_b
            pl.BlockSpec((None, DFF, D), lambda l: (l, 0, 0)),      # lin2_wT (bf16)
            pl.BlockSpec((S, D, OUT_PAD), lambda l: (0, 0, 0)),     # fc_w (pad)
            pl.BlockSpec((1, OUT_PAD), lambda l: (0, 0)),           # fc_b (pad)
        ],
        out_specs=pl.BlockSpec((B, OUT_PAD), lambda l: (0, 0)),
        scratch_shapes=[pltpu.VMEM((S * B, D), jnp.float32)],
    )

    out = pl.pallas_call(
        transformer_kernel,
        out_shape=jax.ShapeDtypeStruct((B, OUT_PAD), jnp.float32),
        grid_spec=grid_spec,
        compiler_params=pltpu.CompilerParams(
            dimension_semantics=("arbitrary",)),
    )(x, attn_bias,
      p["inproj_wT"], p["inproj_b"],
      p["outproj_wT"],
      p["vecs"],
      p["lin1_wT"], p["lin1_b"], p["lin2_wT"],
      fc_w_pad, fc_b_pad)

    return out[:, :OUT]


def init_params(key):
    ks = jax.random.split(key, 12)

    def nrm(k, shape, scale=0.05, dtype=jnp.float32):
        return (jax.random.normal(k, shape, jnp.float32) * scale).astype(dtype)

    p = {}
    p["embedding"] = jax.random.normal(ks[0], (VOCAB, D), jnp.float32)
    # MultiheadAttention in_proj (3D, D) / out_proj (D, D), pre-transposed, bf16.
    p["inproj_wT"] = nrm(ks[1], (L, D, 3 * D), dtype=jnp.bfloat16)
    p["inproj_b"] = nrm(ks[2], (L, 1, 3 * D), 0.01)
    p["outproj_wT"] = nrm(ks[3], (L, D, D), dtype=jnp.bfloat16)
    outproj_b = nrm(ks[4], (L, D), 0.01)
    # FFN linear1 (DFF, D) / linear2 (D, DFF), pre-transposed, bf16.
    p["lin1_wT"] = nrm(ks[5], (L, D, DFF), dtype=jnp.bfloat16)
    p["lin1_b"] = nrm(ks[6], (L, 1, DFF), 0.01)
    p["lin2_wT"] = nrm(ks[7], (L, DFF, D), dtype=jnp.bfloat16)
    lin2_b = nrm(ks[8], (L, D), 0.01)
    ln1_g = jnp.ones((L, D), jnp.float32)
    ln1_b = jnp.zeros((L, D), jnp.float32)
    ln2_g = jnp.ones((L, D), jnp.float32)
    ln2_b = jnp.zeros((L, D), jnp.float32)
    # packed per-layer D-wide vectors -> single (L, 6, D) slab (one DMA/step)
    p["vecs"] = jnp.stack([outproj_b, ln1_g, ln1_b, ln2_g, ln2_b, lin2_b],
                          axis=1)                                   # (L, 6, D)
    # fc: PyTorch weight is (63, S*D); store as (S, D, 63), f32 (tiny).
    fc_w = nrm(ks[9], (OUT, S * D))
    p["fc_w"] = fc_w.reshape(OUT, S, D).transpose(1, 2, 0)
    p["fc_b"] = nrm(ks[10], (1, OUT), 0.01)
    return p


def reference_forward(tokens, p):
    """Pure-JAX f32 reference matching the PyTorch forward (eval mode)."""
    x = p["embedding"][tokens].astype(jnp.float32)                 # (B, S, D)
    scale = 1.0 / (DH ** 0.5)
    for l in range(L):
        vec = p["vecs"][l]                                         # (6, D)
        outproj_b, ln1_g, ln1_b, ln2_g, ln2_b, lin2_b = (vec[i] for i in range(6))
        w_in = p["inproj_wT"][l].astype(jnp.float32)
        qkv = x @ w_in + p["inproj_b"][l]                          # (B, S, 3D)
        q, k, v = qkv[..., :D], qkv[..., D:2 * D], qkv[..., 2 * D:]
        qh = q.reshape(B, S, H, DH)
        kh = k.reshape(B, S, H, DH)
        vh = v.reshape(B, S, H, DH)
        sc = jnp.einsum('bqhd,bkhd->bhqk', qh, kh) * scale
        attn = jax.nn.softmax(sc, axis=-1)
        o = jnp.einsum('bhqk,bkhd->bqhd', attn, vh).reshape(B, S, D)
        o = o @ p["outproj_wT"][l].astype(jnp.float32) + outproj_b
        x = _layernorm(x + o, ln1_g, ln1_b)
        h1 = jax.nn.relu(x @ p["lin1_wT"][l].astype(jnp.float32) + p["lin1_b"][l])
        ff = h1 @ p["lin2_wT"][l].astype(jnp.float32) + lin2_b
        x = _layernorm(x + ff, ln2_g, ln2_b)
    return jnp.einsum('bsd,sdo->bo', x, p["fc_w"]) + p["fc_b"]


if __name__ == "__main__":
    key = jax.random.PRNGKey(0)
    kp, kt = jax.random.split(key)
    params = init_params(kp)
    tokens = jax.random.randint(kt, (B, S), 0, VOCAB, dtype=jnp.int32)

    out = ball_transformer_forward(tokens, params)
    out = jax.block_until_ready(out)

    ref = reference_forward(tokens, params)
    assert out.shape == (B, OUT), out.shape
    assert bool(jnp.all(jnp.isfinite(out)))
    # tolerance accounts for bf16 matmul operands + approx softmax reciprocal
    # vs. the f32-activation reference.
    assert bool(jnp.allclose(out, ref, atol=3e-2, rtol=3e-2)), (
        "max abs err", float(jnp.max(jnp.abs(out - ref))))

    print("KERNEL_OK")
</pallas_src>

<mosaic_0001>
module attributes {stable_mosaic.version = 11 : i64} {
  func.func @transformer_kernel(%arg0: i32, %arg1: memref<12x64xf32, #tpu.memory_space<vmem>>, %arg2: memref<12x12xf32, #tpu.memory_space<vmem>>, %arg3: memref<1x64x192xbf16, #tpu.memory_space<vmem>>, %arg4: memref<1x1x192xf32, #tpu.memory_space<vmem>>, %arg5: memref<1x64x64xbf16, #tpu.memory_space<vmem>>, %arg6: memref<1x6x64xf32, #tpu.memory_space<vmem>>, %arg7: memref<1x64x2048xbf16, #tpu.memory_space<vmem>>, %arg8: memref<1x1x2048xf32, #tpu.memory_space<vmem>>, %arg9: memref<1x2048x64xbf16, #tpu.memory_space<vmem>>, %arg10: memref<6x64x64xf32, #tpu.memory_space<vmem>>, %arg11: memref<1x64xf32, #tpu.memory_space<vmem>>, %arg12: memref<2x64xf32, #tpu.memory_space<vmem>>, %arg13: memref<12x64xf32, #tpu.memory_space<vmem>>) attributes {dimension_semantics = [#tpu.dimension_semantics<arbitrary>], iteration_bounds = array<i64: 2>, scalar_prefetch = 0 : i64, scratch_operands = 1 : i64, tpu.core_type = #tpu.core_type<tc>, window_params = [{pipeline_mode = #tpu.pipeline_mode<synchronous>, transform_indices = @transform_0, window_bounds = array<i64: 12, 64>}, {pipeline_mode = #tpu.pipeline_mode<synchronous>, transform_indices = @transform_1, window_bounds = array<i64: 12, 12>}, {transform_indices = @transform_2, window_bounds = array<i64: 1, 64, 192>}, {transform_indices = @transform_3, window_bounds = array<i64: 1, 1, 192>}, {transform_indices = @transform_4, window_bounds = array<i64: 1, 64, 64>}, {transform_indices = @transform_5, window_bounds = array<i64: 1, 6, 64>}, {transform_indices = @transform_6, window_bounds = array<i64: 1, 64, 2048>}, {transform_indices = @transform_7, window_bounds = array<i64: 1, 1, 2048>}, {transform_indices = @transform_8, window_bounds = array<i64: 1, 2048, 64>}, {pipeline_mode = #tpu.pipeline_mode<synchronous>, transform_indices = @transform_9, window_bounds = array<i64: 6, 64, 64>}, {pipeline_mode = #tpu.pipeline_mode<synchronous>, transform_indices = @transform_10, window_bounds = array<i64: 1, 64>}, {pipeline_mode = #tpu.pipeline_mode<synchronous>, transform_indices = @transform_11, window_bounds = array<i64: 2, 64>}]} {
    %c0_i32 = arith.constant 0 : i32
    %0 = arith.cmpi eq, %arg0, %c0_i32 : i32
    %1 = arith.extui %0 : i1 to i32
    %c0_i32_0 = arith.constant 0 : i32
    %2 = arith.cmpi ne, %1, %c0_i32_0 : i32
    scf.if %2 {
      %c0_52 = arith.constant 0 : index
      %c0_53 = arith.constant 0 : index
      %129 = vector.load %arg1[%c0_52, %c0_53] : memref<12x64xf32, #tpu.memory_space<vmem>>, vector<12x64xf32>
      %c0_54 = arith.constant 0 : index
      %c0_55 = arith.constant 0 : index
      %130 = vector.load %arg13[%c0_54, %c0_55] : memref<12x64xf32, #tpu.memory_space<vmem>>, vector<12x64xf32>
      tpu.vector_store %arg13[%c0_54, %c0_55], %129 {strides = array<i32>} : memref<12x64xf32, #tpu.memory_space<vmem>>, vector<12x64xf32>,
    } else {
    }
    %c0 = arith.constant 0 : index
    %c0_1 = arith.constant 0 : index
    %3 = vector.load %arg13[%c0, %c0_1] : memref<12x64xf32, #tpu.memory_space<vmem>>, vector<12x64xf32>
    %c0_2 = arith.constant 0 : index
    %c0_3 = arith.constant 0 : index
    %4 = vector.load %arg2[%c0_2, %c0_3] : memref<12x12xf32, #tpu.memory_space<vmem>>, vector<12x12xf32>
    %c0_4 = arith.constant 0 : index
    %c0_5 = arith.constant 0 : index
    %c0_6 = arith.constant 0 : index
    %5 = vector.load %arg6[%c0_4, %c0_5, %c0_6] : memref<1x6x64xf32, #tpu.memory_space<vmem>>, vector<1x6x64xf32>
    %6 = vector.shape_cast %5 : vector<1x6x64xf32> to vector<6x64xf32>
    %7 = vector.extract_strided_slice %6 {offsets = [0, 0], sizes = [1, 64], strides = [1, 1]} : vector<6x64xf32> to vector<1x64xf32>
    %8 = vector.extract_strided_slice %6 {offsets = [1, 0], sizes = [1, 64], strides = [1, 1]} : vector<6x64xf32> to vector<1x64xf32>
    %9 = vector.extract_strided_slice %6 {offsets = [2, 0], sizes = [1, 64], strides = [1, 1]} : vector<6x64xf32> to vector<1x64xf32>
    %10 = vector.extract_strided_slice %6 {offsets = [3, 0], sizes = [1, 64], strides = [1, 1]} : vector<6x64xf32> to vector<1x64xf32>
    %11 = vector.extract_strided_slice %6 {offsets = [4, 0], sizes = [1, 64], strides = [1, 1]} : vector<6x64xf32> to vector<1x64xf32>
    %12 = vector.extract_strided_slice %6 {offsets = [5, 0], sizes = [1, 64], strides = [1, 1]} : vector<6x64xf32> to vector<1x64xf32>
    %13 = arith.truncf %3 : vector<12x64xf32> to vector<12x64xbf16>
    %c0_7 = arith.constant 0 : index
    %c0_8 = arith.constant 0 : index
    %c0_9 = arith.constant 0 : index
    %14 = vector.load %arg3[%c0_7, %c0_8, %c0_9] : memref<1x64x192xbf16, #tpu.memory_space<vmem>>, vector<1x64x192xbf16>
    %15 = vector.shape_cast %14 : vector<1x64x192xbf16> to vector<64x192xbf16>
    %cst = arith.constant dense<0.000000e+00> : vector<12x192xf32>
    %16 = tpu.matmul %13, %15, %cst {dimension_numbers = #tpu.dot_dimension_numbers<[1], [0], [0], [1], [0, 0, 1, 1], [], []>} : vector<12x64xbf16>, vector<64x192xbf16>, vector<12x192xf32> -> vector<12x192xf32>
    %c0_10 = arith.constant 0 : index
    %c0_11 = arith.constant 0 : index
    %c0_12 = arith.constant 0 : index
    %17 = vector.load %arg4[%c0_10, %c0_11, %c0_12] : memref<1x1x192xf32, #tpu.memory_space<vmem>>, vector<1x1x192xf32>
    %18 = vector.shape_cast %17 : vector<1x1x192xf32> to vector<1x192xf32>
    %19 = vector.broadcast %18 : vector<1x192xf32> to vector<12x192xf32>
    %20 = arith.addf %16, %19 : vector<12x192xf32>
    %21 = vector.extract_strided_slice %20 {offsets = [0, 0], sizes = [12, 64], strides = [1, 1]} : vector<12x192xf32> to vector<12x64xf32>
    %22 = vector.extract_strided_slice %20 {offsets = [0, 64], sizes = [12, 64], strides = [1, 1]} : vector<12x192xf32> to vector<12x64xf32>
    %23 = vector.extract_strided_slice %20 {offsets = [0, 128], sizes = [12, 64], strides = [1, 1]} : vector<12x192xf32> to vector<12x64xf32>
    %24 = vector.extract_strided_slice %21 {offsets = [0, 0], sizes = [12, 32], strides = [1, 1]} : vector<12x64xf32> to vector<12x32xf32>
    %25 = vector.extract_strided_slice %22 {offsets = [0, 0], sizes = [12, 32], strides = [1, 1]} : vector<12x64xf32> to vector<12x32xf32>
    %cst_13 = arith.constant dense<0.000000e+00> : vector<12x12xf32>
    %26 = tpu.matmul %24, %25, %cst_13 {dimension_numbers = #tpu.dot_dimension_numbers<[1], [1], [0], [0], [0, 0, 1, 0], [], []>} : vector<12x32xf32>, vector<12x32xf32>, vector<12x12xf32> -> vector<12x12xf32>
    %cst_14 = arith.constant 0.176776692 : f32
    %27 = vector.broadcast %cst_14 : f32 to vector<12x12xf32>
    %28 = arith.mulf %26, %27 : vector<12x12xf32>
    %29 = arith.addf %28, %4 : vector<12x12xf32>
    %cst_15 = arith.constant dense<0xFF800000> : vector<12xf32>
    %30 = vector.multi_reduction <maximumf>, %29, %cst_15 [1] : vector<12x12xf32> to vector<12xf32>
    %31 = vector.shape_cast %30 : vector<12xf32> to vector<12x1xf32>
    %32 = vector.broadcast %31 : vector<12x1xf32> to vector<12x12xf32>
    %33 = arith.subf %29, %32 : vector<12x12xf32>
    %34 = math.exp %33 : vector<12x12xf32>
    %cst_16 = arith.constant dense<0.000000e+00> : vector<12xf32>
    %35 = vector.multi_reduction <add>, %34, %cst_16 [1] : vector<12x12xf32> to vector<12xf32>
    %36 = vector.shape_cast %35 : vector<12xf32> to vector<12x1xf32>
    %37 = tpu.reciprocal %36 {approx = true} : vector<12x1xf32> -> vector<12x1xf32>
    %38 = vector.broadcast %37 : vector<12x1xf32> to vector<12x12xf32>
    %39 = arith.mulf %34, %38 : vector<12x12xf32>
    %40 = vector.extract_strided_slice %23 {offsets = [0, 0], sizes = [12, 32], strides = [1, 1]} : vector<12x64xf32> to vector<12x32xf32>
    %cst_17 = arith.constant dense<0.000000e+00> : vector<12x32xf32>
    %41 = tpu.matmul %39, %40, %cst_17 {dimension_numbers = #tpu.dot_dimension_numbers<[1], [0], [0], [1], [0, 0, 1, 1], [], []>} : vector<12x12xf32>, vector<12x32xf32>, vector<12x32xf32> -> vector<12x32xf32>
    %42 = vector.extract_strided_slice %21 {offsets = [0, 32], sizes = [12, 32], strides = [1, 1]} : vector<12x64xf32> to vector<12x32xf32>
    %43 = vector.extract_strided_slice %22 {offsets = [0, 32], sizes = [12, 32], strides = [1, 1]} : vector<12x64xf32> to vector<12x32xf32>
    %cst_18 = arith.constant dense<0.000000e+00> : vector<12x12xf32>
    %44 = tpu.matmul %42, %43, %cst_18 {dimension_numbers = #tpu.dot_dimension_numbers<[1], [1], [0], [0], [0, 0, 1, 0], [], []>} : vector<12x32xf32>, vector<12x32xf32>, vector<12x12xf32> -> vector<12x12xf32>
    %cst_19 = arith.constant 0.176776692 : f32
    %45 = vector.broadcast %cst_19 : f32 to vector<12x12xf32>
    %46 = arith.mulf %44, %45 : vector<12x12xf32>
    %47 = arith.addf %46, %4 : vector<12x12xf32>
    %cst_20 = arith.constant dense<0xFF800000> : vector<12xf32>
    %48 = vector.multi_reduction <maximumf>, %47, %cst_20 [1] : vector<12x12xf32> to vector<12xf32>
    %49 = vector.shape_cast %48 : vector<12xf32> to vector<12x1xf32>
    %50 = vector.broadcast %49 : vector<12x1xf32> to vector<12x12xf32>
    %51 = arith.subf %47, %50 : vector<12x12xf32>
    %52 = math.exp %51 : vector<12x12xf32>
    %cst_21 = arith.constant dense<0.000000e+00> : vector<12xf32>
    %53 = vector.multi_reduction <add>, %52, %cst_21 [1] : vector<12x12xf32> to vector<12xf32>
    %54 = vector.shape_cast %53 : vector<12xf32> to vector<12x1xf32>
    %55 = tpu.reciprocal %54 {approx = true} : vector<12x1xf32> -> vector<12x1xf32>
    %56 = vector.broadcast %55 : vector<12x1xf32> to vector<12x12xf32>
    %57 = arith.mulf %52, %56 : vector<12x12xf32>
    %58 = vector.extract_strided_slice %23 {offsets = [0, 32], sizes = [12, 32], strides = [1, 1]} : vector<12x64xf32> to vector<12x32xf32>
    %cst_22 = arith.constant dense<0.000000e+00> : vector<12x32xf32>
    %59 = tpu.matmul %57, %58, %cst_22 {dimension_numbers = #tpu.dot_dimension_numbers<[1], [0], [0], [1], [0, 0, 1, 1], [], []>} : vector<12x12xf32>, vector<12x32xf32>, vector<12x32xf32> -> vector<12x32xf32>
    %60 = tpu.concatenate %41, %59 in 1 : vector<12x32xf32>, vector<12x32xf32> -> vector<12x64xf32>
    %61 = arith.truncf %60 : vector<12x64xf32> to vector<12x64xbf16>
    %c0_23 = arith.constant 0 : index
    %c0_24 = arith.constant 0 : index
    %c0_25 = arith.constant 0 : index
    %62 = vector.load %arg5[%c0_23, %c0_24, %c0_25] : memref<1x64x64xbf16, #tpu.memory_space<vmem>>, vector<1x64x64xbf16>
    %63 = vector.shape_cast %62 : vector<1x64x64xbf16> to vector<64x64xbf16>
    %cst_26 = arith.constant dense<0.000000e+00> : vector<12x64xf32>
    %64 = tpu.matmul %61, %63, %cst_26 {dimension_numbers = #tpu.dot_dimension_numbers<[1], [0], [0], [1], [0, 0, 1, 1], [], []>} : vector<12x64xbf16>, vector<64x64xbf16>, vector<12x64xf32> -> vector<12x64xf32>
    %65 = vector.broadcast %7 : vector<1x64xf32> to vector<12x64xf32>
    %66 = arith.addf %64, %65 : vector<12x64xf32>
    %67 = arith.addf %3, %66 : vector<12x64xf32>
    %cst_27 = arith.constant dense<0.000000e+00> : vector<12xf32>
    %68 = vector.multi_reduction <add>, %67, %cst_27 [1] : vector<12x64xf32> to vector<12xf32>
    %69 = vector.shape_cast %68 : vector<12xf32> to vector<12x1xf32>
    %cst_28 = arith.constant 6.400000e+01 : f32
    %70 = vector.broadcast %cst_28 : f32 to vector<12x1xf32>
    %71 = arith.divf %69, %70 : vector<12x1xf32>
    %72 = vector.broadcast %71 : vector<12x1xf32> to vector<12x64xf32>
    %73 = arith.subf %67, %72 : vector<12x64xf32>
    %74 = arith.mulf %73, %73 : vector<12x64xf32>
    %cst_29 = arith.constant dense<0.000000e+00> : vector<12xf32>
    %75 = vector.multi_reduction <add>, %74, %cst_29 [1] : vector<12x64xf32> to vector<12xf32>
    %76 = vector.shape_cast %75 : vector<12xf32> to vector<12x1xf32>
    %cst_30 = arith.constant 6.400000e+01 : f32
    %77 = vector.broadcast %cst_30 : f32 to vector<12x1xf32>
    %78 = arith.divf %76, %77 : vector<12x1xf32>
    %cst_31 = arith.constant 9.99999974E-6 : f32
    %79 = vector.broadcast %cst_31 : f32 to vector<12x1xf32>
    %80 = arith.addf %78, %79 : vector<12x1xf32>
    %81 = math.rsqrt %80 : vector<12x1xf32>
    %82 = vector.broadcast %81 : vector<12x1xf32> to vector<12x64xf32>
    %83 = arith.mulf %73, %82 : vector<12x64xf32>
    %84 = vector.broadcast %8 : vector<1x64xf32> to vector<12x64xf32>
    %85 = arith.mulf %83, %84 : vector<12x64xf32>
    %86 = vector.broadcast %9 : vector<1x64xf32> to vector<12x64xf32>
    %87 = arith.addf %85, %86 : vector<12x64xf32>
    %88 = arith.truncf %87 : vector<12x64xf32> to vector<12x64xbf16>
    %c0_32 = arith.constant 0 : index
    %c0_33 = arith.constant 0 : index
    %c0_34 = arith.constant 0 : index
    %89 = vector.load %arg7[%c0_32, %c0_33, %c0_34] : memref<1x64x2048xbf16, #tpu.memory_space<vmem>>, vector<1x64x2048xbf16>
    %90 = vector.shape_cast %89 : vector<1x64x2048xbf16> to vector<64x2048xbf16>
    %cst_35 = arith.constant dense<0.000000e+00> : vector<12x2048xf32>
    %91 = tpu.matmul %88, %90, %cst_35 {dimension_numbers = #tpu.dot_dimension_numbers<[1], [0], [0], [1], [0, 0, 1, 1], [], []>} : vector<12x64xbf16>, vector<64x2048xbf16>, vector<12x2048xf32> -> vector<12x2048xf32>
    %c0_36 = arith.constant 0 : index
    %c0_37 = arith.constant 0 : index
    %c0_38 = arith.constant 0 : index
    %92 = vector.load %arg8[%c0_36, %c0_37, %c0_38] : memref<1x1x2048xf32, #tpu.memory_space<vmem>>, vector<1x1x2048xf32>
    %93 = vector.shape_cast %92 : vector<1x1x2048xf32> to vector<1x2048xf32>
    %94 = vector.broadcast %93 : vector<1x2048xf32> to vector<12x2048xf32>
    %95 = arith.addf %91, %94 : vector<12x2048xf32>
    %cst_39 = arith.constant 0.000000e+00 : f32
    %96 = vector.broadcast %cst_39 : f32 to vector<12x2048xf32>
    %97 = arith.maximumf %95, %96 : vector<12x2048xf32>
    %98 = arith.truncf %97 : vector<12x2048xf32> to vector<12x2048xbf16>
    %c0_40 = arith.constant 0 : index
    %c0_41 = arith.constant 0 : index
    %c0_42 = arith.constant 0 : index
    %99 = vector.load %arg9[%c0_40, %c0_41, %c0_42] : memref<1x2048x64xbf16, #tpu.memory_space<vmem>>, vector<1x2048x64xbf16>
    %100 = vector.shape_cast %99 : vector<1x2048x64xbf16> to vector<2048x64xbf16>
    %cst_43 = arith.constant dense<0.000000e+00> : vector<12x64xf32>
    %101 = tpu.matmul %98, %100, %cst_43 {dimension_numbers = #tpu.dot_dimension_numbers<[1], [0], [0], [1], [0, 0, 1, 1], [], []>} : vector<12x2048xbf16>, vector<2048x64xbf16>, vector<12x64xf32> -> vector<12x64xf32>
    %102 = vector.broadcast %12 : vector<1x64xf32> to vector<12x64xf32>
    %103 = arith.addf %101, %102 : vector<12x64xf32>
    %104 = arith.addf %87, %103 : vector<12x64xf32>
    %cst_44 = arith.constant dense<0.000000e+00> : vector<12xf32>
    %105 = vector.multi_reduction <add>, %104, %cst_44 [1] : vector<12x64xf32> to vector<12xf32>
    %106 = vector.shape_cast %105 : vector<12xf32> to vector<12x1xf32>
    %cst_45 = arith.constant 6.400000e+01 : f32
    %107 = vector.broadcast %cst_45 : f32 to vector<12x1xf32>
    %108 = arith.divf %106, %107 : vector<12x1xf32>
    %109 = vector.broadcast %108 : vector<12x1xf32> to vector<12x64xf32>
    %110 = arith.subf %104, %109 : vector<12x64xf32>
    %111 = arith.mulf %110, %110 : vector<12x64xf32>
    %cst_46 = arith.constant dense<0.000000e+00> : vector<12xf32>
    %112 = vector.multi_reduction <add>, %111, %cst_46 [1] : vector<12x64xf32> to vector<12xf32>
    %113 = vector.shape_cast %112 : vector<12xf32> to vector<12x1xf32>
    %cst_47 = arith.constant 6.400000e+01 : f32
    %114 = vector.broadcast %cst_47 : f32 to vector<12x1xf32>
    %115 = arith.divf %113, %114 : vector<12x1xf32>
    %cst_48 = arith.constant 9.99999974E-6 : f32
    %116 = vector.broadcast %cst_48 : f32 to vector<12x1xf32>
    %117 = arith.addf %115, %116 : vector<12x1xf32>
    %118 = math.rsqrt %117 : vector<12x1xf32>
    %119 = vector.broadcast %118 : vector<12x1xf32> to vector<12x64xf32>
    %120 = arith.mulf %110, %119 : vector<12x64xf32>
    %121 = vector.broadcast %10 : vector<1x64xf32> to vector<12x64xf32>
    %122 = arith.mulf %120, %121 : vector<12x64xf32>
    %123 = vector.broadcast %11 : vector<1x64xf32> to vector<12x64xf32>
    %124 = arith.addf %122, %123 : vector<12x64xf32>
    %c0_49 = arith.constant 0 : index
    %c0_50 = arith.constant 0 : index
    %125 = vector.load %arg13[%c0_49, %c0_50] : memref<12x64xf32, #tpu.memory_space<vmem>>, vector<12x64xf32>
    tpu.vector_store %arg13[%c0_49, %c0_50], %124 {strides = array<i32>} : memref<12x64xf32, #tpu.memory_space<vmem>>, vector<12x64xf32>,
    %c1_i32 = arith.constant 1 : i32
    %126 = arith.cmpi eq, %arg0, %c1_i32 : i32
    %127 = arith.extui %126 : i1 to i32
    %c0_i32_51 = arith.constant 0 : i32
    %128 = arith.cmpi ne, %127, %c0_i32_51 : i32
    scf.if %128 {
      %cst_52 = arith.constant 0.000000e+00 : f32
      %129 = vector.broadcast %cst_52 : f32 to vector<2x64xf32>
      %c0_53 = arith.constant 0 : index
      %c0_54 = arith.constant 0 : index
      %130 = vector.load %arg11[%c0_53, %c0_54] : memref<1x64xf32, #tpu.memory_space<vmem>>, vector<1x64xf32>
      %131 = vector.broadcast %130 : vector<1x64xf32> to vector<2x64xf32>
      %132 = arith.addf %129, %131 : vector<2x64xf32>
      %133 = vector.extract_strided_slice %124 {offsets = [0, 0], sizes = [2, 64], strides = [1, 1]} : vector<12x64xf32> to vector<2x64xf32>
      %c0_55 = arith.constant 0 : index
      %c0_56 = arith.constant 0 : index
      %c0_57 = arith.constant 0 : index
      %134 = vector.load %arg10[%c0_55, %c0_56, %c0_57] : memref<6x64x64xf32, #tpu.memory_space<vmem>>, vector<1x64x64xf32>
      %135 = vector.shape_cast %134 : vector<1x64x64xf32> to vector<64x64xf32>
      %cst_58 = arith.constant dense<0.000000e+00> : vector<2x64xf32>
      %136 = tpu.matmul %133, %135, %cst_58 {dimension_numbers = #tpu.dot_dimension_numbers<[1], [0], [0], [1], [0, 0, 1, 1], [], []>} : vector<2x64xf32>, vector<64x64xf32>, vector<2x64xf32> -> vector<2x64xf32>
      %137 = arith.addf %132, %136 : vector<2x64xf32>
      %138 = vector.extract_strided_slice %124 {offsets = [2, 0], sizes = [2, 64], strides = [1, 1]} : vector<12x64xf32> to vector<2x64xf32>
      %c1 = arith.constant 1 : index
      %c0_59 = arith.constant 0 : index
      %c0_60 = arith.constant 0 : index
      %139 = vector.load %arg10[%c1, %c0_59, %c0_60] : memref<6x64x64xf32, #tpu.memory_space<vmem>>, vector<1x64x64xf32>
      %140 = vector.shape_cast %139 : vector<1x64x64xf32> to vector<64x64xf32>
      %cst_61 = arith.constant dense<0.000000e+00> : vector<2x64xf32>
      %141 = tpu.matmul %138, %140, %cst_61 {dimension_numbers = #tpu.dot_dimension_numbers<[1], [0], [0], [1], [0, 0, 1, 1], [], []>} : vector<2x64xf32>, vector<64x64xf32>, vector<2x64xf32> -> vector<2x64xf32>
      %142 = arith.addf %137, %141 : vector<2x64xf32>
      %143 = vector.extract_strided_slice %124 {offsets = [4, 0], sizes = [2, 64], strides = [1, 1]} : vector<12x64xf32> to vector<2x64xf32>
      %c2 = arith.constant 2 : index
      %c0_62 = arith.constant 0 : index
      %c0_63 = arith.constant 0 : index
      %144 = vector.load %arg10[%c2, %c0_62, %c0_63] : memref<6x64x64xf32, #tpu.memory_space<vmem>>, vector<1x64x64xf32>
      %145 = vector.shape_cast %144 : vector<1x64x64xf32> to vector<64x64xf32>
      %cst_64 = arith.constant dense<0.000000e+00> : vector<2x64xf32>
      %146 = tpu.matmul %143, %145, %cst_64 {dimension_numbers = #tpu.dot_dimension_numbers<[1], [0], [0], [1], [0, 0, 1, 1], [], []>} : vector<2x64xf32>, vector<64x64xf32>, vector<2x64xf32> -> vector<2x64xf32>
      %147 = arith.addf %142, %146 : vector<2x64xf32>
      %148 = vector.extract_strided_slice %124 {offsets = [6, 0], sizes = [2, 64], strides = [1, 1]} : vector<12x64xf32> to vector<2x64xf32>
      %c3 = arith.constant 3 : index
      %c0_65 = arith.constant 0 : index
      %c0_66 = arith.constant 0 : index
      %149 = vector.load %arg10[%c3, %c0_65, %c0_66] : memref<6x64x64xf32, #tpu.memory_space<vmem>>, vector<1x64x64xf32>
      %150 = vector.shape_cast %149 : vector<1x64x64xf32> to vector<64x64xf32>
      %cst_67 = arith.constant dense<0.000000e+00> : vector<2x64xf32>
      %151 = tpu.matmul %148, %150, %cst_67 {dimension_numbers = #tpu.dot_dimension_numbers<[1], [0], [0], [1], [0, 0, 1, 1], [], []>} : vector<2x64xf32>, vector<64x64xf32>, vector<2x64xf32> -> vector<2x64xf32>
      %152 = arith.addf %147, %151 : vector<2x64xf32>
      %153 = vector.extract_strided_slice %124 {offsets = [8, 0], sizes = [2, 64], strides = [1, 1]} : vector<12x64xf32> to vector<2x64xf32>
      %c4 = arith.constant 4 : index
      %c0_68 = arith.constant 0 : index
      %c0_69 = arith.constant 0 : index
      %154 = vector.load %arg10[%c4, %c0_68, %c0_69] : memref<6x64x64xf32, #tpu.memory_space<vmem>>, vector<1x64x64xf32>
      %155 = vector.shape_cast %154 : vector<1x64x64xf32> to vector<64x64xf32>
      %cst_70 = arith.constant dense<0.000000e+00> : vector<2x64xf32>
      %156 = tpu.matmul %153, %155, %cst_70 {dimension_numbers = #tpu.dot_dimension_numbers<[1], [0], [0], [1], [0, 0, 1, 1], [], []>} : vector<2x64xf32>, vector<64x64xf32>, vector<2x64xf32> -> vector<2x64xf32>
      %157 = arith.addf %152, %156 : vector<2x64xf32>
      %158 = vector.extract_strided_slice %124 {offsets = [10, 0], sizes = [2, 64], strides = [1, 1]} : vector<12x64xf32> to vector<2x64xf32>
      %c5 = arith.constant 5 : index
      %c0_71 = arith.constant 0 : index
      %c0_72 = arith.constant 0 : index
      %159 = vector.load %arg10[%c5, %c0_71, %c0_72] : memref<6x64x64xf32, #tpu.memory_space<vmem>>, vector<1x64x64xf32>
      %160 = vector.shape_cast %159 : vector<1x64x64xf32> to vector<64x64xf32>
      %cst_73 = arith.constant dense<0.000000e+00> : vector<2x64xf32>
      %161 = tpu.matmul %158, %160, %cst_73 {dimension_numbers = #tpu.dot_dimension_numbers<[1], [0], [0], [1], [0, 0, 1, 1], [], []>} : vector<2x64xf32>, vector<64x64xf32>, vector<2x64xf32> -> vector<2x64xf32>
      %162 = arith.addf %157, %161 : vector<2x64xf32>
      %c0_74 = arith.constant 0 : index
      %c0_75 = arith.constant 0 : index
      %163 = vector.load %arg12[%c0_74, %c0_75] : memref<2x64xf32, #tpu.memory_space<vmem>>, vector<2x64xf32>
      tpu.vector_store %arg12[%c0_74, %c0_75], %162 {strides = array<i32>} : memref<2x64xf32, #tpu.memory_space<vmem>>, vector<2x64xf32>,
    } else {
    }
    return
  }
  func.func @transform_0(%arg0: i32) -> (i32, i32) {
    %c0_i32 = arith.constant 0 : i32
    %c0_i32_0 = arith.constant 0 : i32
    %c0_i32_1 = arith.constant 0 : i32
    return %c0_i32, %c0_i32_0 : i32, i32
  }
  func.func @transform_1(%arg0: i32) -> (i32, i32) {
    %c0_i32 = arith.constant 0 : i32
    %c0_i32_0 = arith.constant 0 : i32
    %c0_i32_1 = arith.constant 0 : i32
    return %c0_i32, %c0_i32_0 : i32, i32
  }
  func.func @transform_2(%arg0: i32) -> (i32, i32, i32) {
    %c0_i32 = arith.constant 0 : i32
    %c0_i32_0 = arith.constant 0 : i32
    %c0_i32_1 = arith.constant 0 : i32
    return %arg0, %c0_i32, %c0_i32_0 : i32, i32, i32
  }
  func.func @transform_3(%arg0: i32) -> (i32, i32, i32) {
    %c0_i32 = arith.constant 0 : i32
    %c0_i32_0 = arith.constant 0 : i32
    %c0_i32_1 = arith.constant 0 : i32
    return %arg0, %c0_i32, %c0_i32_0 : i32, i32, i32
  }
  func.func @transform_4(%arg0: i32) -> (i32, i32, i32) {
    %c0_i32 = arith.constant 0 : i32
    %c0_i32_0 = arith.constant 0 : i32
    %c0_i32_1 = arith.constant 0 : i32
    return %arg0, %c0_i32, %c0_i32_0 : i32, i32, i32
  }
  func.func @transform_5(%arg0: i32) -> (i32, i32, i32) {
    %c0_i32 = arith.constant 0 : i32
    %c0_i32_0 = arith.constant 0 : i32
    %c0_i32_1 = arith.constant 0 : i32
    return %arg0, %c0_i32, %c0_i32_0 : i32, i32, i32
  }
  func.func @transform_6(%arg0: i32) -> (i32, i32, i32) {
    %c0_i32 = arith.constant 0 : i32
    %c0_i32_0 = arith.constant 0 : i32
    %c0_i32_1 = arith.constant 0 : i32
    return %arg0, %c0_i32, %c0_i32_0 : i32, i32, i32
  }
  func.func @transform_7(%arg0: i32) -> (i32, i32, i32) {
    %c0_i32 = arith.constant 0 : i32
    %c0_i32_0 = arith.constant 0 : i32
    %c0_i32_1 = arith.constant 0 : i32
    return %arg0, %c0_i32, %c0_i32_0 : i32, i32, i32
  }
  func.func @transform_8(%arg0: i32) -> (i32, i32, i32) {
    %c0_i32 = arith.constant 0 : i32
    %c0_i32_0 = arith.constant 0 : i32
    %c0_i32_1 = arith.constant 0 : i32
    return %arg0, %c0_i32, %c0_i32_0 : i32, i32, i32
  }
  func.func @transform_9(%arg0: i32) -> (i32, i32, i32) {
    %c0_i32 = arith.constant 0 : i32
    %c0_i32_0 = arith.constant 0 : i32
    %c0_i32_1 = arith.constant 0 : i32
    %c0_i32_2 = arith.constant 0 : i32
    return %c0_i32, %c0_i32_0, %c0_i32_1 : i32, i32, i32
  }
  func.func @transform_10(%arg0: i32) -> (i32, i32) {
    %c0_i32 = arith.constant 0 : i32
    %c0_i32_0 = arith.constant 0 : i32
    %c0_i32_1 = arith.constant 0 : i32
    return %c0_i32, %c0_i32_0 : i32, i32
  }
  func.func @transform_11(%arg0: i32) -> (i32, i32) {
    %c0_i32 = arith.constant 0 : i32
    %c0_i32_0 = arith.constant 0 : i32
    %c0_i32_1 = arith.constant 0 : i32
    return %c0_i32, %c0_i32_0 : i32, i32
  }
}

</mosaic_0001>

<llo_original>
// kernel: tpu_custom_call.1
$region0: #{tpu_custom_call.1}
  #allocation0 [shape = 'u32[]', space=smem, size = 0x4, offset = 0x4, fixed_abs, tag = 'smem constant byte address 0x4 - core index']
  #allocation1 [shape = 'u32[72,128]{1,0:T(1,128)}', space=vmem, size = 0x9000, scoped, tag = 'internal scratch']
  #allocation2 [shape = 'f32[12,64]{1,0:T(8,128)}', space=vmem, size = 0x2000, scoped, tag = 'scratch operand']
  %s0 = inlined_call_operand.vmem [shape: f32[12,64], index: 0, kind: input, shape index: {}]
  %s1 = inlined_call_operand.vmem [shape: f32[12,12], index: 1, kind: input, shape index: {}]
  %s2 = inlined_call_operand.vmem [shape: bf16[2,64,192], index: 2, kind: input, shape index: {}]
  %s3 = inlined_call_operand.vmem [shape: f32[2,1,192], index: 3, kind: input, shape index: {}]
  %s4 = inlined_call_operand.vmem [shape: bf16[2,64,64], index: 4, kind: input, shape index: {}]
  %s5 = inlined_call_operand.vmem [shape: f32[2,6,64], index: 5, kind: input, shape index: {}]
  %s6 = inlined_call_operand.vmem [shape: bf16[2,64,2048], index: 6, kind: input, shape index: {}]
  %s7 = inlined_call_operand.vmem [shape: f32[2,1,2048], index: 7, kind: input, shape index: {}]
  %s8 = inlined_call_operand.vmem [shape: bf16[2,2048,64], index: 8, kind: input, shape index: {}]
  %s9 = inlined_call_operand.vmem [shape: f32[6,64,64], index: 9, kind: input, shape index: {}]
  %s10 = inlined_call_operand.vmem [shape: f32[1,64], index: 10, kind: input, shape index: {}]
  %s11 = inlined_call_operand.hbm [shape: f32[2,64], index: 11, kind: output, shape index: {}]
  %s12 = sld [smem:[#allocation0]]
  $region85: #{tpu_custom_call.1} parent=0
    _
  %s14 = ssub.s32 1, %s12
  %s15 = scalar_select 0, %s14, %s12
  $region1: #{tpu_custom_call.1} parent=0
    #allocation3 [shape = 'u8[1024]{0}', space=vmem, size = 0x400, scoped, tag = 'output window, operand 0, single buffered']
    #allocation4 [shape = 's32[2]{0}', space=sflag, size = 0x8, scoped, tag = 'scoped memory for tpu_custom_call.1']
    %16 = vsyncpa [#allocation4], 0
    loop: start=0, step=1, limit=4
    $region2: #{tpu_custom_call.1} parent=1 // loop_pre_header
      _
    $region3: #{tpu_custom_call.1} parent=1 // loop_header
      %s18 = sphi 0, %s22
      %p19 = scmp.ge.s32.totalorder %s18, 4
      %s26 = sphi 0, %s26
      %s28 = sphi 0, %s26
      %s29 = sphi 0, %s28
      %s43 = sphi 0, %s29
      %s47 = sphi 0, %s47
      %s49 = sphi 0, %s47
      %s50 = sphi 0, %s49
      %s64 = sphi 0, %s50
      %s70 = sphi 0, %s72
      %s73 = sphi 0, %s70
      %s74 = sphi 0, %s73
      %s90 = sphi 0, %s74
      %s96 = sphi 0, %s98
      %s99 = sphi 0, %s96
      %s100 = sphi 0, %s99
      %s116 = sphi 0, %s100
      %s122 = sphi 0, %s124
      %s125 = sphi 0, %s122
      %s126 = sphi 0, %s125
      %s142 = sphi 0, %s126
      %s148 = sphi 0, %s150
      %s151 = sphi 0, %s148
      %s152 = sphi 0, %s151
      %s168 = sphi 0, %s152
      %s174 = sphi 0, %s176
      %s177 = sphi 0, %s174
      %s178 = sphi 0, %s177
      %s194 = sphi 0, %s178
      %s200 = sphi 0, %s202
      %s203 = sphi 0, %s200
      %s204 = sphi 0, %s203
      %s220 = sphi 0, %s204
      %s226 = sphi 0, %s228
      %s229 = sphi 0, %s226
      %s230 = sphi 0, %s229
      %s246 = sphi 0, %s230
      %s250 = sphi 0, %s250
      %s252 = sphi 0, %s250
      %s253 = sphi 0, %s252
      %s267 = sphi 0, %s253
      %s271 = sphi 0, %s271
      %s273 = sphi 0, %s271
      %s274 = sphi 0, %s273
      %s288 = sphi 0, %s274
      %s292 = sphi 0, %s292
      %s294 = sphi 0, %s292
      %s295 = sphi 0, %s294
      %s309 = sphi 0, %s295
    $region4: #{tpu_custom_call.1} parent=1 // loop_header_branch
      %21 = sbr.rel (%p19) target = $region8
    $region5: #{tpu_custom_call.1} parent=1 // loop_body
      %s23 = ssub.s32 %s18, 1
      %s24 = ssub.s32 %s18, 2
      %s25 = sadd.s32 %s18, 1
      %s27 = sadd.s32 %s26, 1
      %p30 = scmp.eq.s32.totalorder %s18, 1
      %p31 = scmp.ne.s32.totalorder %s26, %s28
      %p32 = scmp.eq.s32.totalorder %s18, 0
      %p33 = por %p31, %p32
      %p34 = scmp.ne.s32.totalorder %s26, %s28
      %p35 = scmp.eq.s32.totalorder %s23, 1
      %p36 = por %p34, %p35
      %p37 = scmp.ne.s32.totalorder %s28, %s29
      %p38 = scmp.eq.s32.totalorder %s23, 0
      %p39 = por %p37, %p38
      %p40 = scmp.ne.s32.totalorder %s28, %s29
      %p41 = scmp.eq.s32.totalorder %s24, 1
      %p42 = por %p40, %p41
      %p44 = scmp.ne.s32.totalorder %s29, %s43
      %p45 = scmp.eq.s32.totalorder %s24, 0
      %p46 = por %p44, %p45
      %s48 = sadd.s32 %s47, 1
      %p51 = scmp.eq.s32.totalorder %s18, 1
      %p52 = scmp.ne.s32.totalorder %s47, %s49
      %p53 = scmp.eq.s32.totalorder %s18, 0
      %p54 = por %p52, %p53
      %p55 = scmp.ne.s32.totalorder %s47, %s49
      %p56 = scmp.eq.s32.totalorder %s23, 1
      %p57 = por %p55, %p56
      %p58 = scmp.ne.s32.totalorder %s49, %s50
      %p59 = scmp.eq.s32.totalorder %s23, 0
      %p60 = por %p58, %p59
      %p61 = scmp.ne.s32.totalorder %s49, %s50
      %p62 = scmp.eq.s32.totalorder %s24, 1
      %p63 = por %p61, %p62
      %p65 = scmp.ne.s32.totalorder %s50, %s64
      %p66 = scmp.eq.s32.totalorder %s24, 0
      %p67 = por %p65, %p66
      %s68 = ssub.s32 %s18, %s25
      %p69 = scmp.eq.s32.totalorder %s68, 0
      %s71 = sadd.s32 %s70, 1
      %s72 = scalar_select %p69, %s70, %s71
      %p75 = pneg %p69
      %p76 = scmp.eq.s32.totalorder %s18, 1
      %p77 = por %p75, %p76
      %p78 = scmp.ne.s32.totalorder %s70, %s73
      %p79 = scmp.eq.s32.totalorder %s18, 0
      %p80 = por %p78, %p79
      %p81 = scmp.ne.s32.totalorder %s70, %s73
      %p82 = scmp.eq.s32.totalorder %s23, 1
      %p83 = por %p81, %p82
      %p84 = scmp.ne.s32.totalorder %s73, %s74
      %p85 = scmp.eq.s32.totalorder %s23, 0
      %p86 = por %p84, %p85
      %p87 = scmp.ne.s32.totalorder %s73, %s74
      %p88 = scmp.eq.s32.totalorder %s24, 1
      %p89 = por %p87, %p88
      %p91 = scmp.ne.s32.totalorder %s74, %s90
      %p92 = scmp.eq.s32.totalorder %s24, 0
      %p93 = por %p91, %p92
      %s94 = ssub.s32 %s18, %s25
      %p95 = scmp.eq.s32.totalorder %s94, 0
      %s97 = sadd.s32 %s96, 1
      %s98 = scalar_select %p95, %s96, %s97
      %p101 = pneg %p95
      %p102 = scmp.eq.s32.totalorder %s18, 1
      %p103 = por %p101, %p102
      %p104 = scmp.ne.s32.totalorder %s96, %s99
      %p105 = scmp.eq.s32.totalorder %s18, 0
      %p106 = por %p104, %p105
      %p107 = scmp.ne.s32.totalorder %s96, %s99
      %p108 = scmp.eq.s32.totalorder %s23, 1
      %p109 = por %p107, %p108
      %p110 = scmp.ne.s32.totalorder %s99, %s100
      %p111 = scmp.eq.s32.totalorder %s23, 0
      %p112 = por %p110, %p111
      %p113 = scmp.ne.s32.totalorder %s99, %s100
      %p114 = scmp.eq.s32.totalorder %s24, 1
      %p115 = por %p113, %p114
      %p117 = scmp.ne.s32.totalorder %s100, %s116
      %p118 = scmp.eq.s32.totalorder %s24, 0
      %p119 = por %p117, %p118
      %s120 = ssub.s32 %s18, %s25
      %p121 = scmp.eq.s32.totalorder %s120, 0
      %s123 = sadd.s32 %s122, 1
      %s124 = scalar_select %p121, %s122, %s123
      %p127 = pneg %p121
      %p128 = scmp.eq.s32.totalorder %s18, 1
      %p129 = por %p127, %p128
      %p130 = scmp.ne.s32.totalorder %s122, %s125
      %p131 = scmp.eq.s32.totalorder %s18, 0
      %p132 = por %p130, %p131
      %p133 = scmp.ne.s32.totalorder %s122, %s125
      %p134 = scmp.eq.s32.totalorder %s23, 1
      %p135 = por %p133, %p134
      %p136 = scmp.ne.s32.totalorder %s125, %s126
      %p137 = scmp.eq.s32.totalorder %s23, 0
      %p138 = por %p136, %p137
      %p139 = scmp.ne.s32.totalorder %s125, %s126
      %p140 = scmp.eq.s32.totalorder %s24, 1
      %p141 = por %p139, %p140
      %p143 = scmp.ne.s32.totalorder %s126, %s142
      %p144 = scmp.eq.s32.totalorder %s24, 0
      %p145 = por %p143, %p144
      %s146 = ssub.s32 %s18, %s25
      %p147 = scmp.eq.s32.totalorder %s146, 0
      %s149 = sadd.s32 %s148, 1
      %s150 = scalar_select %p147, %s148, %s149
      %p153 = pneg %p147
      %p154 = scmp.eq.s32.totalorder %s18, 1
      %p155 = por %p153, %p154
      %p156 = scmp.ne.s32.totalorder %s148, %s151
      %p157 = scmp.eq.s32.totalorder %s18, 0
      %p158 = por %p156, %p157
      %p159 = scmp.ne.s32.totalorder %s148, %s151
      %p160 = scmp.eq.s32.totalorder %s23, 1
      %p161 = por %p159, %p160
      %p162 = scmp.ne.s32.totalorder %s151, %s152
      %p163 = scmp.eq.s32.totalorder %s23, 0
      %p164 = por %p162, %p163
      %p165 = scmp.ne.s32.totalorder %s151, %s152
      %p166 = scmp.eq.s32.totalorder %s24, 1
      %p167 = por %p165, %p166
      %p169 = scmp.ne.s32.totalorder %s152, %s168
      %p170 = scmp.eq.s32.totalorder %s24, 0
      %p171 = por %p169, %p170
      %s172 = ssub.s32 %s18, %s25
      %p173 = scmp.eq.s32.totalorder %s172, 0
      %s175 = sadd.s32 %s174, 1
      %s176 = scalar_select %p173, %s174, %s175
      %p179 = pneg %p173
      %p180 = scmp.eq.s32.totalorder %s18, 1
      %p181 = por %p179, %p180
      %p182 = scmp.ne.s32.totalorder %s174, %s177
      %p183 = scmp.eq.s32.totalorder %s18, 0
      %p184 = por %p182, %p183
      %p185 = scmp.ne.s32.totalorder %s174, %s177
      %p186 = scmp.eq.s32.totalorder %s23, 1
      %p187 = por %p185, %p186
      %p188 = scmp.ne.s32.totalorder %s177, %s178
      %p189 = scmp.eq.s32.totalorder %s23, 0
      %p190 = por %p188, %p189
      %p191 = scmp.ne.s32.totalorder %s177, %s178
      %p192 = scmp.eq.s32.totalorder %s24, 1
      %p193 = por %p191, %p192
      %p195 = scmp.ne.s32.totalorder %s178, %s194
      %p196 = scmp.eq.s32.totalorder %s24, 0
      %p197 = por %p195, %p196
      %s198 = ssub.s32 %s18, %s25
      %p199 = scmp.eq.s32.totalorder %s198, 0
      %s201 = sadd.s32 %s200, 1
      %s202 = scalar_select %p199, %s200, %s201
      %p205 = pneg %p199
      %p206 = scmp.eq.s32.totalorder %s18, 1
      %p207 = por %p205, %p206
      %p208 = scmp.ne.s32.totalorder %s200, %s203
      %p209 = scmp.eq.s32.totalorder %s18, 0
      %p210 = por %p208, %p209
      %p211 = scmp.ne.s32.totalorder %s200, %s203
      %p212 = scmp.eq.s32.totalorder %s23, 1
      %p213 = por %p211, %p212
      %p214 = scmp.ne.s32.totalorder %s203, %s204
      %p215 = scmp.eq.s32.totalorder %s23, 0
      %p216 = por %p214, %p215
      %p217 = scmp.ne.s32.totalorder %s203, %s204
      %p218 = scmp.eq.s32.totalorder %s24, 1
      %p219 = por %p217, %p218
      %p221 = scmp.ne.s32.totalorder %s204, %s220
      %p222 = scmp.eq.s32.totalorder %s24, 0
      %p223 = por %p221, %p222
      %s224 = ssub.s32 %s18, %s25
      %p225 = scmp.eq.s32.totalorder %s224, 0
      %s227 = sadd.s32 %s226, 1
      %s228 = scalar_select %p225, %s226, %s227
      %p231 = pneg %p225
      %p232 = scmp.eq.s32.totalorder %s18, 1
      %p233 = por %p231, %p232
      %p234 = scmp.ne.s32.totalorder %s226, %s229
      %p235 = scmp.eq.s32.totalorder %s18, 0
      %p236 = por %p234, %p235
      %p237 = scmp.ne.s32.totalorder %s226, %s229
      %p238 = scmp.eq.s32.totalorder %s23, 1
      %p239 = por %p237, %p238
      %p240 = scmp.ne.s32.totalorder %s229, %s230
      %p241 = scmp.eq.s32.totalorder %s23, 0
      %p242 = por %p240, %p241
      %p243 = scmp.ne.s32.totalorder %s229, %s230
      %p244 = scmp.eq.s32.totalorder %s24, 1
      %p245 = por %p243, %p244
      %p247 = scmp.ne.s32.totalorder %s230, %s246
      %p248 = scmp.eq.s32.totalorder %s24, 0
      %p249 = por %p247, %p248
      %s251 = sadd.s32 %s250, 1
      %p254 = scmp.eq.s32.totalorder %s18, 1
      %p255 = scmp.ne.s32.totalorder %s250, %s252
      %p256 = scmp.eq.s32.totalorder %s18, 0
      %p257 = por %p255, %p256
      %p258 = scmp.ne.s32.totalorder %s250, %s252
      %p259 = scmp.eq.s32.totalorder %s23, 1
      %p260 = por %p258, %p259
      %p261 = scmp.ne.s32.totalorder %s252, %s253
      %p262 = scmp.eq.s32.totalorder %s23, 0
      %p263 = por %p261, %p262
      %p264 = scmp.ne.s32.totalorder %s252, %s253
      %p265 = scmp.eq.s32.totalorder %s24, 1
      %p266 = por %p264, %p265
      %p268 = scmp.ne.s32.totalorder %s253, %s267
      %p269 = scmp.eq.s32.totalorder %s24, 0
      %p270 = por %p268, %p269
      %s272 = sadd.s32 %s271, 1
      %p275 = scmp.eq.s32.totalorder %s18, 1
      %p276 = scmp.ne.s32.totalorder %s271, %s273
      %p277 = scmp.eq.s32.totalorder %s18, 0
      %p278 = por %p276, %p277
      %p279 = scmp.ne.s32.totalorder %s271, %s273
      %p280 = scmp.eq.s32.totalorder %s23, 1
      %p281 = por %p279, %p280
      %p282 = scmp.ne.s32.totalorder %s273, %s274
      %p283 = scmp.eq.s32.totalorder %s23, 0
      %p284 = por %p282, %p283
      %p285 = scmp.ne.s32.totalorder %s273, %s274
      %p286 = scmp.eq.s32.totalorder %s24, 1
      %p287 = por %p285, %p286
      %p289 = scmp.ne.s32.totalorder %s274, %s288
      %p290 = scmp.eq.s32.totalorder %s24, 0
      %p291 = por %p289, %p290
      %s293 = sadd.s32 %s292, 1
      %p296 = scmp.eq.s32.totalorder %s18, 1
      %p297 = scmp.ne.s32.totalorder %s292, %s294
      %p298 = scmp.eq.s32.totalorder %s18, 0
      %p299 = por %p297, %p298
      %p300 = scmp.ne.s32.totalorder %s292, %s294
      %p301 = scmp.eq.s32.totalorder %s23, 1
      %p302 = por %p300, %p301
      %p303 = scmp.ne.s32.totalorder %s294, %s295
      %p304 = scmp.eq.s32.totalorder %s23, 0
      %p305 = por %p303, %p304
      %p306 = scmp.ne.s32.totalorder %s294, %s295
      %p307 = scmp.eq.s32.totalorder %s24, 1
      %p308 = por %p306, %p307
      %p310 = scmp.ne.s32.totalorder %s295, %s309
      %p311 = scmp.eq.s32.totalorder %s24, 0
      %p312 = por %p310, %p311
      %p313 = scmp.le.s32.totalorder 1, %s18
      %p314 = scmp.lt.s32.totalorder %s18, 3
      %p315 = pnand %p313, %p314
      %p316 = pneg %p315
      // Predicated region
      $region9: #{tpu_custom_call.1} parent=5 // pred_check
        _
      $region10: #{tpu_custom_call.1} parent=5 // pred_check_branch
        %318 = sbr.rel (%p315) target = $region12
      $region11: #{tpu_custom_call.1} parent=5 // pred_region
        %s319 = ssub.s32 %s18, 1
        // Predicated region
        $region13: #{tpu_custom_call.1} parent=11 // pred_check
          %p320 = pneg %p39
        $region14: #{tpu_custom_call.1} parent=11 // pred_check_branch
          %322 = sbr.rel (%p320) target = $region16
        $region15: #{tpu_custom_call.1} parent=11 // pred_region
          _
        $region16: #{tpu_custom_call.1} parent=11 // pred_fallthru
          _
        // Predicated region
        $region17: #{tpu_custom_call.1} parent=11 // pred_check
          %p323 = pneg %p60
        $region18: #{tpu_custom_call.1} parent=11 // pred_check_branch
          %325 = sbr.rel (%p323) target = $region20
        $region19: #{tpu_custom_call.1} parent=11 // pred_region
          _
        $region20: #{tpu_custom_call.1} parent=11 // pred_fallthru
          _
        // Predicated region
        $region21: #{tpu_custom_call.1} parent=11 // pred_check
          %p326 = pneg %p263
        $region22: #{tpu_custom_call.1} parent=11 // pred_check_branch
          %328 = sbr.rel (%p326) target = $region24
        $region23: #{tpu_custom_call.1} parent=11 // pred_region
          _
        $region24: #{tpu_custom_call.1} parent=11 // pred_fallthru
          _
        // Predicated region
        $region25: #{tpu_custom_call.1} parent=11 // pred_check
          %p329 = pneg %p284
        $region26: #{tpu_custom_call.1} parent=11 // pred_check_branch
          %331 = sbr.rel (%p329) target = $region28
        $region27: #{tpu_custom_call.1} parent=11 // pred_region
          _
        $region28: #{tpu_custom_call.1} parent=11 // pred_fallthru
          _
      $region12: #{tpu_custom_call.1} parent=5 // pred_fallthru
        _
      %p332 = scmp.lt.s32.totalorder %s18, 2
      // Predicated region
      $region29: #{tpu_custom_call.1} parent=5 // pred_check
        %p333 = pneg %p332
      $region30: #{tpu_custom_call.1} parent=5 // pred_check_branch
        %335 = sbr.rel (%p333) target = $region32
      $region31: #{tpu_custom_call.1} parent=5 // pred_region
        // Predicated region
        $region33: #{tpu_custom_call.1} parent=31 // pred_check
          %p336 = pneg %p80
        $region34: #{tpu_custom_call.1} parent=31 // pred_check_branch
          %338 = sbr.rel (%p336) target = $region36
        $region35: #{tpu_custom_call.1} parent=31 // pred_region
          %p339 = scmp.lt.s32.totalorder %s18, 1
          %s340 = scalar_select %p339, %s18, 1
          %s341 = smul.addr %s340, 16
          %s342 = smul.addr %s341, 4
          %s343 = scalar_lea.vmem %s2, %s342
        $region36: #{tpu_custom_call.1} parent=31 // pred_fallthru
          _
        // Predicated region
        $region37: #{tpu_custom_call.1} parent=31 // pred_check
          %p344 = pneg %p106
        $region38: #{tpu_custom_call.1} parent=31 // pred_check_branch
          %346 = sbr.rel (%p344) target = $region40
        $region39: #{tpu_custom_call.1} parent=31 // pred_region
          %p347 = scmp.lt.s32.totalorder %s18, 1
          %s348 = scalar_select %p347, %s18, 1
          %s349 = smul.addr %s348, 2
          %s350 = scalar_lea.vmem %s3, %s349
        $region40: #{tpu_custom_call.1} parent=31 // pred_fallthru
          _
        // Predicated region
        $region41: #{tpu_custom_call.1} parent=31 // pred_check
          %p351 = pneg %p132
        $region42: #{tpu_custom_call.1} parent=31 // pred_check_branch
          %353 = sbr.rel (%p351) target = $region44
        $region43: #{tpu_custom_call.1} parent=31 // pred_region
          %p354 = scmp.lt.s32.totalorder %s18, 1
          %s355 = scalar_select %p354, %s18, 1
          %s356 = smul.addr %s355, 8
          %s357 = smul.addr %s356, 4
          %s358 = scalar_lea.vmem %s4, %s357
        $region44: #{tpu_custom_call.1} parent=31 // pred_fallthru
          _
        // Predicated region
        $region45: #{tpu_custom_call.1} parent=31 // pred_check
          %p359 = pneg %p158
        $region46: #{tpu_custom_call.1} parent=31 // pred_check_branch
          %361 = sbr.rel (%p359) target = $region48
        $region47: #{tpu_custom_call.1} parent=31 // pred_region
          %p362 = scmp.lt.s32.totalorder %s18, 1
          %s363 = scalar_select %p362, %s18, 1
          %s364 = smul.addr %s363, 8
          %s365 = scalar_lea.vmem %s5, %s364
        $region48: #{tpu_custom_call.1} parent=31 // pred_fallthru
          _
        // Predicated region
        $region49: #{tpu_custom_call.1} parent=31 // pred_check
          %p366 = pneg %p184
        $region50: #{tpu_custom_call.1} parent=31 // pred_check_branch
          %368 = sbr.rel (%p366) target = $region52
        $region51: #{tpu_custom_call.1} parent=31 // pred_region
          %p369 = scmp.lt.s32.totalorder %s18, 1
          %s370 = scalar_select %p369, %s18, 1
          %s371 = smul.addr %s370, 128
          %s372 = smul.addr %s371, 4
          %s373 = scalar_lea.vmem %s6, %s372
        $region52: #{tpu_custom_call.1} parent=31 // pred_fallthru
          _
        // Predicated region
        $region53: #{tpu_custom_call.1} parent=31 // pred_check
          %p374 = pneg %p210
        $region54: #{tpu_custom_call.1} parent=31 // pred_check_branch
          %376 = sbr.rel (%p374) target = $region56
        $region55: #{tpu_custom_call.1} parent=31 // pred_region
          %p377 = scmp.lt.s32.totalorder %s18, 1
          %s378 = scalar_select %p377, %s18, 1
          %s379 = smul.addr %s378, 16
          %s380 = scalar_lea.vmem %s7, %s379
        $region56: #{tpu_custom_call.1} parent=31 // pred_fallthru
          _
        // Predicated region
        $region57: #{tpu_custom_call.1} parent=31 // pred_check
          %p381 = pneg %p236
        $region58: #{tpu_custom_call.1} parent=31 // pred_check_branch
          %383 = sbr.rel (%p381) target = $region60
        $region59: #{tpu_custom_call.1} parent=31 // pred_region
          %p384 = scmp.lt.s32.totalorder %s18, 1
          %s385 = scalar_select %p384, %s18, 1
          %s386 = smul.addr %s385, 256
          %s387 = smul.addr %s386, 4
          %s388 = scalar_lea.vmem %s8, %s387
        $region60: #{tpu_custom_call.1} parent=31 // pred_fallthru
          _
      $region32: #{tpu_custom_call.1} parent=5 // pred_fallthru
        _
      %p389 = scmp.le.s32.totalorder 1, %s18
      %p390 = scmp.lt.s32.totalorder %s18, 3
      %p391 = pnand %p389, %p390
      %p392 = pneg %p391
      // Predicated region
      $region61: #{tpu_custom_call.1} parent=5 // pred_check
        _
      $region62: #{tpu_custom_call.1} parent=5 // pred_check_branch
        %394 = sbr.rel (%p391) target = $region64
      $region63: #{tpu_custom_call.1} parent=5 // pred_region
        %s395 = ssub.s32 %s18, 1
        %p396 = pneg %p39
        %p397 = pneg %p36
        %p398 = pneg %p60
        %p399 = pneg %p57
        %p400 = scmp.lt.s32.totalorder %s23, 1
        %s401 = scalar_select %p400, %s23, 1
        %s402 = smul.addr %s401, 16
        %s403 = smul.addr %s402, 4
        %s404 = scalar_lea.vmem %s2, %s403
        %p405 = pneg %p86
        %p406 = pneg %p83
        %p407 = scmp.lt.s32.totalorder %s23, 1
        %s408 = scalar_select %p407, %s23, 1
        %s409 = smul.addr %s408, 2
        %s410 = scalar_lea.vmem %s3, %s409
        %p411 = pneg %p112
        %p412 = pneg %p109
        %p413 = scmp.lt.s32.totalorder %s23, 1
        %s414 = scalar_select %p413, %s23, 1
        %s415 = smul.addr %s414, 8
        %s416 = smul.addr %s415, 4
        %s417 = scalar_lea.vmem %s4, %s416
        %p418 = pneg %p138
        %p419 = pneg %p135
        %p420 = scmp.lt.s32.totalorder %s23, 1
        %s421 = scalar_select %p420, %s23, 1
        %s422 = smul.addr %s421, 8
        %s423 = scalar_lea.vmem %s5, %s422
        %p424 = pneg %p164
        %p425 = pneg %p161
        %p426 = scmp.lt.s32.totalorder %s23, 1
        %s427 = scalar_select %p426, %s23, 1
        %s428 = smul.addr %s427, 128
        %s429 = smul.addr %s428, 4
        %s430 = scalar_lea.vmem %s6, %s429
        %p431 = pneg %p190
        %p432 = pneg %p187
        %p433 = scmp.lt.s32.totalorder %s23, 1
        %s434 = scalar_select %p433, %s23, 1
        %s435 = smul.addr %s434, 16
        %s436 = scalar_lea.vmem %s7, %s435
        %p437 = pneg %p216
        %p438 = pneg %p213
        %p439 = scmp.lt.s32.totalorder %s23, 1
        %s440 = scalar_select %p439, %s23, 1
        %s441 = smul.addr %s440, 256
        %s442 = smul.addr %s441, 4
        %s443 = scalar_lea.vmem %s8, %s442
        %p444 = pneg %p242
        %p445 = pneg %p239
        %p446 = pneg %p263
        %p447 = pneg %p260
        %p448 = pneg %p284
        %p449 = pneg %p281
        %p450 = pneg %p305
        %p451 = pneg %p302
        %p452 = scmp.lt.s32.totalorder %s23, 1
        %s453 = scalar_select %p452, %s23, 1
        %s454 = smul.addr %s453, 16
        %s455 = smul.addr %s454, 4
        %s456 = scalar_lea.vmem %s2, %s455
        %p457 = scmp.lt.s32.totalorder %s23, 1
        %s458 = scalar_select %p457, %s23, 1
        %s459 = smul.addr %s458, 2
        %s460 = scalar_lea.vmem %s3, %s459
        %p461 = scmp.lt.s32.totalorder %s23, 1
        %s462 = scalar_select %p461, %s23, 1
        %s463 = smul.addr %s462, 8
        %s464 = smul.addr %s463, 4
        %s465 = scalar_lea.vmem %s4, %s464
        %p466 = scmp.lt.s32.totalorder %s23, 1
        %s467 = scalar_select %p466, %s23, 1
        %s468 = smul.addr %s467, 8
        %s469 = scalar_lea.vmem %s5, %s468
        %p470 = scmp.lt.s32.totalorder %s23, 1
        %s471 = scalar_select %p470, %s23, 1
        %s472 = smul.addr %s471, 128
        %s473 = smul.addr %s472, 4
        %s474 = scalar_lea.vmem %s6, %s473
        %p475 = scmp.lt.s32.totalorder %s23, 1
        %s476 = scalar_select %p475, %s23, 1
        %s477 = smul.addr %s476, 16
        %s478 = scalar_lea.vmem %s7, %s477
        %p479 = scmp.lt.s32.totalorder %s23, 1
        %s480 = scalar_select %p479, %s23, 1
        %s481 = smul.addr %s480, 256
        %s482 = smul.addr %s481, 4
        %s483 = scalar_lea.vmem %s8, %s482
        %p485 = scmp.eq.s32.totalorder %s23, 0
        // Predicated region
        $region65: #{tpu_custom_call.1} parent=63 // pred_check
          %p486 = pneg %p485
        $region66: #{tpu_custom_call.1} parent=63 // pred_check_branch
          %488 = sbr.rel (%p486) target = $region68
        $region67: #{tpu_custom_call.1} parent=63 // pred_region
          %v489 = vld [vmem:[%s0] sm:$0xff]
          %v490 = vld [vmem:[%s0 + $0x8] sm:$0xf]
          %vm491 = vcmask 523264
          %492 = vst.msk [vmem:[#allocation2] sm:$0xff] %vm491, %v489
          %vm493 = vcmask 519168
          %494 = vst.msk [vmem:[#allocation2 + $0x8] sm:$0xf] %vm493, %v490
        $region68: #{tpu_custom_call.1} parent=63 // pred_fallthru
          _
        %v495 = vld [vmem:[#allocation2] sm:$0xff]
        %v496 = vld [vmem:[#allocation2 + $0x8] sm:$0xf]
        %v497 = vld [vmem:[%s1] sm:$0xff]
        %v498 = vld [vmem:[%s1 + $0x8] sm:$0xf]
        %v499 = vld [vmem:[%s469] sm:$0x3f]
        %v500 = vpack.c.bf16 %v496, %v495
        %v501 = vld [vmem:[%s456] sm:$0xff]
        %v502 = vld [vmem:[%s456 + $0x8] sm:$0xff]
        %v503 = vld [vmem:[%s456 + $0x10] sm:$0xff]
        %v504 = vld [vmem:[%s456 + $0x18] sm:$0xff]
        %v505 = vld [vmem:[%s456 + $0x20] sm:$0xff]
        %v506 = vld [vmem:[%s456 + $0x28] sm:$0xff]
        %v507 = vld [vmem:[%s456 + $0x30] sm:$0xff]
        %v508 = vld [vmem:[%s456 + $0x38] sm:$0xff]
        %v509 = vld [vmem:[%s460] sm:$0x3]
        %v511 = vperm.slane %v509, 0
        %v512 = vperm.slane %v509, 1
        %v523 = vunpack.c.l.b16 %v501
        %v524 = vunpack.c.h.b16 %v501
        %v525 = vunpack.c.l.b16 %v502
        %v526 = vunpack.c.h.b16 %v502
        %v527 = vunpack.c.l.b16 %v503
        %v528 = vunpack.c.h.b16 %v503
        %v529 = vunpack.c.l.b16 %v504
        %v530 = vunpack.c.h.b16 %v504
        %v531 = vunpack.c.l.b16 %v505
        %v532 = vunpack.c.h.b16 %v505
        %v533 = vunpack.c.l.b16 %v506
        %v534 = vunpack.c.h.b16 %v506
        %v535 = vunpack.c.l.b16 %v507
        %v536 = vunpack.c.h.b16 %v507
        %v537 = vunpack.c.l.b16 %v508
        %v538 = vunpack.c.h.b16 %v508
        %v539 = vpack.c.b16 %v525, %v523
        %v540 = vpack.c.b16 %v526, %v524
        %v541 = vpack.c.b16 %v529, %v527
        %v542 = vpack.c.b16 %v530, %v528
        %v543 = vpack.c.b16 %v533, %v531
        %v544 = vpack.c.b16 %v534, %v532
        %v545 = vpack.c.b16 %v537, %v535
        %v546 = vpack.c.b16 %v538, %v536
        %vm555 = vcmask 523264
        %v557 = vsel %vm555, %v500, 0
        %559 = vmatpush.bf16.msra.mxu0 0
        %560 = vmatpush.bf16.msra.mxu0 0
        %561 = vmatpush.bf16.msra.mxu0 0
        %562 = vmatpush.bf16.msra.mxu0 0
        %563 = vmatpush.bf16.msra.mxu0 %v545
        %564 = vmatpush.bf16.msra.mxu0 %v543
        %565 = vmatpush.bf16.msra.mxu0 %v541
        %566 = vmatpush.bf16.msra.mxu0 %v539
        %567 = vmatmul.bf16.gmra.mxu0 %v557
        %v568 = vpop.f32.mrf.mxu0
        %v569 = vadd.f32 %v511, %v568
        %v570 = vpop.f32.mrf.mxu0
        %v571 = vadd.f32 %v511, %v570
        %572 = vdwg.mxu0
        %573 = vmatpush.bf16.msra.mxu0 0
        %574 = vmatpush.bf16.msra.mxu0 0
        %575 = vmatpush.bf16.msra.mxu0 0
        %576 = vmatpush.bf16.msra.mxu0 0
        %577 = vmatpush.bf16.msra.mxu0 %v546
        %578 = vmatpush.bf16.msra.mxu0 %v544
        %579 = vmatpush.bf16.msra.mxu0 %v542
        %580 = vmatpush.bf16.msra.mxu0 %v540
        %581 = vmatmul.bf16.gmra.mxu0 %v557
        %v582 = vpop.f32.mrf.mxu0
        %v583 = vadd.f32 %v512, %v582
        %v584 = vpop.f32.mrf.mxu0
        %v585 = vadd.f32 %v512, %v584
        %586 = vdwg.mxu0
        %589 = vrot.lane.b32.xlu0 %v569, 64
        %v590 = vpop.permute.xlu0 %589
        %591 = vrot.lane.b32.xlu0 %v571, 64
        %v592 = vpop.permute.xlu0 %591
        %vm593 = vcmask 261120
        %v594 = vsel %vm593, %v569, 0
        %v596 = vsel %vm593, %v571, 0
        %v598 = vsel %vm593, %v590, 0
        %v600 = vsel %vm593, %v592, 0
        %602 = vmatpush.xpose.msra.mxu0 0.0
        %603 = vmatpush.xpose.msra.mxu0 0.0
        %604 = vmatpush.xpose.msra.mxu0 0.0
        %605 = vmatpush.xpose.msra.mxu0 0.0
        %606 = vmatpush.xpose.msra.mxu0 0.0
        %607 = vmatpush.xpose.msra.mxu0 0.0
        %608 = vmatpush.xpose.msra.mxu0 0.0
        %609 = vmatpush.xpose.msra.mxu0 0.0
        %610 = vmatpush.xpose.msra.mxu0 0.0
        %611 = vmatpush.xpose.msra.mxu0 0.0
        %612 = vmatpush.xpose.msra.mxu0 0.0
        %613 = vmatpush.xpose.msra.mxu0 0.0
        %614 = vmatpush.xpose.msra.mxu0 0.0
        %615 = vmatpush.xpose.msra.mxu0 0.0
        %616 = vmatpush.xpose.msra.mxu0 %v600
        %617 = vmatpush.xpose.msra.mxu0 %v598
        %618 = vmatmul.f32.gmra.mxu0 %v594
        %v619 = vpop.f32.mrf.mxu0
        %v620 = vadd.f32 0.0, %v619
        %621 = vmatmul.f32.gmra.mxu0 %v596
        %v622 = vpop.f32.mrf.mxu0
        %v623 = vadd.f32 0.0, %v622
        %624 = vdwg.mxu0
        %v625 = vmul.f32 %v620, 0.17677669
        %v626 = vmul.f32 %v623, 0.17677669
        %v627 = vadd.f32 %v625, %v497
        %v628 = vadd.f32 %v626, %v498
        %vm629 = vcmask 97280
        %v630 = vsel %vm629, %v627, -inf
        %631 = vmax.xlane.f32.xlu0 %v630
        %v632 = vpop.xlane.xlu0 %631
        %vm633 = vcmask 93184
        %v634 = vsel %vm633, %v628, -inf
        %635 = vmax.xlane.f32.xlu0 %v634
        %v636 = vpop.xlane.xlu0 %635
        %v637 = vsub.f32 %v627, %v632
        %v638 = vsub.f32 %v628, %v636
        %v639 = vmul.f32 %v637, 1.442695
        %v640 = vpow.pop %v639
        %v641 = vmul.f32 %v638, 1.442695
        %v642 = vpow.pop %v641
        %v643 = vsel %vm629, %v640, 0.0
        %644 = vadd.xlane.f32.xlu0 %v643
        %v645 = vpop.xlane.xlu0 %644
        %v646 = vsel %vm633, %v642, 0.0
        %647 = vadd.xlane.f32.xlu0 %v646
        %v648 = vpop.xlane.xlu0 %647
        %v649 = vrcp.pop %v645
        %v650 = vrcp.pop %v648
        %v651 = vmul.f32 %v640, %v649
        %v652 = vmul.f32 %v642, %v650
        %v654 = vsel %vm629, %v651, 0
        %v657 = vsel %vm629, %v652, 0
        %vm659 = vcmask 1043456
        %v661 = vsel %vm659, %v585, 0
        %663 = vmatpush.msra.mxu0 0.0
        %664 = vmatpush.msra.mxu0 0.0
        %665 = vmatpush.msra.mxu0 0.0
        %666 = vmatpush.msra.mxu0 0.0
        %667 = vmatpush.msra.mxu0 0.0
        %668 = vmatpush.msra.mxu0 0.0
        %669 = vmatpush.msra.mxu0 0.0
        %670 = vmatpush.msra.mxu0 0.0
        %671 = vmatpush.msra.mxu0 0.0
        %672 = vmatpush.msra.mxu0 0.0
        %673 = vmatpush.msra.mxu0 0.0
        %674 = vmatpush.msra.mxu0 0.0
        %675 = vmatpush.msra.mxu0 0.0
        %676 = vmatpush.msra.mxu0 0.0
        %677 = vmatpush.msra.mxu0 %v661
        %678 = vmatpush.msra.mxu0 %v583
        %679 = vmatmul.f32.gmra.mxu0 %v654
        %v680 = vpop.f32.mrf.mxu0
        %v681 = vadd.f32 0.0, %v680
        %682 = vmatmul.f32.gmra.mxu0 %v657
        %v683 = vpop.f32.mrf.mxu0
        %v684 = vadd.f32 0.0, %v683
        %685 = vdwg.mxu0
        %686 = vrot.lane.b32.xlu0 %v569, 96
        %v687 = vpop.permute.xlu0 %686
        %688 = vrot.lane.b32.xlu0 %v571, 96
        %v689 = vpop.permute.xlu0 %688
        %690 = vrot.lane.b32.xlu0 %v569, 32
        %v691 = vpop.permute.xlu0 %690
        %692 = vrot.lane.b32.xlu0 %v571, 32
        %v693 = vpop.permute.xlu0 %692
        %v694 = vsel %vm593, %v687, 0
        %v696 = vsel %vm593, %v689, 0
        %v698 = vsel %vm593, %v691, 0
        %v700 = vsel %vm593, %v693, 0
        %702 = vmatpush.xpose.msra.mxu0 0.0
        %703 = vmatpush.xpose.msra.mxu0 0.0
        %704 = vmatpush.xpose.msra.mxu0 0.0
        %705 = vmatpush.xpose.msra.mxu0 0.0
        %706 = vmatpush.xpose.msra.mxu0 0.0
        %707 = vmatpush.xpose.msra.mxu0 0.0
        %708 = vmatpush.xpose.msra.mxu0 0.0
        %709 = vmatpush.xpose.msra.mxu0 0.0
        %710 = vmatpush.xpose.msra.mxu0 0.0
        %711 = vmatpush.xpose.msra.mxu0 0.0
        %712 = vmatpush.xpose.msra.mxu0 0.0
        %713 = vmatpush.xpose.msra.mxu0 0.0
        %714 = vmatpush.xpose.msra.mxu0 0.0
        %715 = vmatpush.xpose.msra.mxu0 0.0
        %716 = vmatpush.xpose.msra.mxu0 %v700
        %717 = vmatpush.xpose.msra.mxu0 %v698
        %718 = vmatmul.f32.gmra.mxu0 %v694
        %v719 = vpop.f32.mrf.mxu0
        %v720 = vadd.f32 0.0, %v719
        %721 = vmatmul.f32.gmra.mxu0 %v696
        %v722 = vpop.f32.mrf.mxu0
        %v723 = vadd.f32 0.0, %v722
        %724 = vdwg.mxu0
        %v725 = vmul.f32 %v720, 0.17677669
        %v726 = vmul.f32 %v723, 0.17677669
        %v727 = vadd.f32 %v725, %v497
        %v728 = vadd.f32 %v726, %v498
        %v729 = vsel %vm629, %v727, -inf
        %730 = vmax.xlane.f32.xlu0 %v729
        %v731 = vpop.xlane.xlu0 %730
        %v732 = vsel %vm633, %v728, -inf
        %733 = vmax.xlane.f32.xlu0 %v732
        %v734 = vpop.xlane.xlu0 %733
        %v735 = vsub.f32 %v727, %v731
        %v736 = vsub.f32 %v728, %v734
        %v737 = vmul.f32 %v735, 1.442695
        %v738 = vpow.pop %v737
        %v739 = vmul.f32 %v736, 1.442695
        %v740 = vpow.pop %v739
        %v741 = vsel %vm629, %v738, 0.0
        %742 = vadd.xlane.f32.xlu0 %v741
        %v743 = vpop.xlane.xlu0 %742
        %v744 = vsel %vm633, %v740, 0.0
        %745 = vadd.xlane.f32.xlu0 %v744
        %v746 = vpop.xlane.xlu0 %745
        %v747 = vrcp.pop %v743
        %v748 = vrcp.pop %v746
        %v749 = vmul.f32 %v738, %v747
        %v750 = vmul.f32 %v740, %v748
        %752 = vrot.lane.b32.xlu0 %v583, 96
        %v753 = vpop.permute.xlu0 %752
        %754 = vrot.lane.b32.xlu0 %v585, 96
        %v755 = vpop.permute.xlu0 %754
        %v758 = vsel %vm629, %v749, 0
        %v761 = vsel %vm629, %v750, 0
        %v763 = vsel %vm659, %v755, 0
        %765 = vmatpush.msra.mxu0 0.0
        %766 = vmatpush.msra.mxu0 0.0
        %767 = vmatpush.msra.mxu0 0.0
        %768 = vmatpush.msra.mxu0 0.0
        %769 = vmatpush.msra.mxu0 0.0
        %770 = vmatpush.msra.mxu0 0.0
        %771 = vmatpush.msra.mxu0 0.0
        %772 = vmatpush.msra.mxu0 0.0
        %773 = vmatpush.msra.mxu0 0.0
        %774 = vmatpush.msra.mxu0 0.0
        %775 = vmatpush.msra.mxu0 0.0
        %776 = vmatpush.msra.mxu0 0.0
        %777 = vmatpush.msra.mxu0 0.0
        %778 = vmatpush.msra.mxu0 0.0
        %779 = vmatpush.msra.mxu0 %v763
        %780 = vmatpush.msra.mxu0 %v753
        %781 = vmatmul.f32.gmra.mxu0 %v758
        %v782 = vpop.f32.mrf.mxu0
        %v783 = vadd.f32 0.0, %v782
        %784 = vmatmul.f32.gmra.mxu0 %v761
        %v785 = vpop.f32.mrf.mxu0
        %v786 = vadd.f32 0.0, %v785
        %787 = vdwg.mxu0
        %790 = vrot.lane.b32.xlu0 %v783, 32
        %v791 = vpop.permute.xlu0 %790
        %792 = vrot.lane.b32.xlu0 %v786, 32
        %v793 = vpop.permute.xlu0 %792
        %v796 = vsel %vm593, %v681, %v791
        %v797 = vsel %vm593, %v684, %v793
        %v798 = vpack.c.bf16 %v797, %v796
        %v799 = vld [vmem:[%s465] sm:$0xf]
        %v800 = vld [vmem:[%s465 + $0x4] sm:$0xf]
        %v801 = vld [vmem:[%s465 + $0x8] sm:$0xf]
        %v802 = vld [vmem:[%s465 + $0xc] sm:$0xf]
        %v803 = vld [vmem:[%s465 + $0x10] sm:$0xf]
        %v804 = vld [vmem:[%s465 + $0x14] sm:$0xf]
        %v805 = vld [vmem:[%s465 + $0x18] sm:$0xf]
        %v806 = vld [vmem:[%s465 + $0x1c] sm:$0xf]
        %v807 = vperm.slane %v499, 0
        %v816 = vunpack.c.l.b16 %v799
        %v817 = vunpack.c.l.b16 %v800
        %v818 = vunpack.c.l.b16 %v801
        %v819 = vunpack.c.l.b16 %v802
        %v820 = vunpack.c.l.b16 %v803
        %v821 = vunpack.c.l.b16 %v804
        %v822 = vunpack.c.l.b16 %v805
        %v823 = vunpack.c.l.b16 %v806
        %v824 = vpack.c.b16 %v817, %v816
        %v825 = vpack.c.b16 %v819, %v818
        %v826 = vpack.c.b16 %v821, %v820
        %v827 = vpack.c.b16 %v823, %v822
        %v833 = vsel %vm555, %v798, 0
        %835 = vmatpush.bf16.msra.mxu0 0
        %836 = vmatpush.bf16.msra.mxu0 0
        %837 = vmatpush.bf16.msra.mxu0 0
        %838 = vmatpush.bf16.msra.mxu0 0
        %839 = vmatpush.bf16.msra.mxu0 %v827
        %840 = vmatpush.bf16.msra.mxu0 %v826
        %841 = vmatpush.bf16.msra.mxu0 %v825
        %842 = vmatpush.bf16.msra.mxu0 %v824
        %843 = vmatmul.bf16.gmra.mxu0 %v833
        %v844 = vpop.f32.mrf.mxu0
        %v845 = vadd.f32 %v807, %v844
        %v846 = vpop.f32.mrf.mxu0
        %v847 = vadd.f32 %v807, %v846
        %848 = vdwg.mxu0
        %v849 = vadd.f32 %v495, %v845
        %v850 = vadd.f32 %v496, %v847
        %v851 = vsel %vm555, %v849, 0.0
        %852 = vadd.xlane.f32.xlu0 %v851
        %v853 = vpop.xlane.xlu0 %852
        %vm854 = vcmask 519168
        %v855 = vsel %vm854, %v850, 0.0
        %856 = vadd.xlane.f32.xlu0 %v855
        %v857 = vpop.xlane.xlu0 %856
        %v858 = vrcp.pop 64.0
        %v859 = vmul.f32 64.0, %v858
        %v860 = vsub.f32 1.0, %v859
        %v861 = vmul.f32 %v858, %v860
        %v862 = vadd.f32 %v858, %v861
        %vm863 = vweird.f32 %v858
        %v864 = vsel %vm863, %v858, %v862
        %v865 = vmul.f32 %v853, %v864
        %v866 = vmul.f32 %v857, %v864
        %v867 = vsub.f32 %v849, %v865
        %v868 = vsub.f32 %v850, %v866
        %v869 = vmul.f32 %v867, %v867
        %v870 = vmul.f32 %v868, %v868
        %v871 = vsel %vm555, %v869, 0.0
        %872 = vadd.xlane.f32.xlu0 %v871
        %v873 = vpop.xlane.xlu0 %872
        %v874 = vsel %vm854, %v870, 0.0
        %875 = vadd.xlane.f32.xlu0 %v874
        %v876 = vpop.xlane.xlu0 %875
        %v877 = vmul.f32 %v873, %v864
        %v878 = vmul.f32 %v876, %v864
        %v879 = vadd.f32 %v877, 1e-05
        %v880 = vadd.f32 %v878, 1e-05
        %v881 = vrsqrt.pop %v879
        %v882 = vmul.f32 %v881, %v879
        %v883 = vmul.f32 %v882, %v881
        %v884 = vmul.f32 0.5, %v883
        %v885 = vsub.f32 1.5, %v884
        %v886 = vmul.f32 %v881, %v885
        %vm887 = vweird.f32 %v879
        %vm888 = vweird.f32 %v881
        %vm889 = vmor %vm887, %vm888
        %v890 = vsel %vm889, %v881, %v886
        %v891 = vrsqrt.pop %v880
        %v892 = vmul.f32 %v891, %v880
        %v893 = vmul.f32 %v892, %v891
        %v894 = vmul.f32 0.5, %v893
        %v895 = vsub.f32 1.5, %v894
        %v896 = vmul.f32 %v891, %v895
        %vm897 = vweird.f32 %v880
        %vm898 = vweird.f32 %v891
        %vm899 = vmor %vm897, %vm898
        %v900 = vsel %vm899, %v891, %v896
        %v901 = vmul.f32 %v867, %v890
        %v902 = vmul.f32 %v868, %v900
        %v903 = vperm.slane %v499, 1
        %v904 = vmul.f32 %v901, %v903
        %v905 = vmul.f32 %v902, %v903
        %v906 = vperm.slane %v499, 2
        %v907 = vadd.f32 %v904, %v906
        %v908 = vadd.f32 %v905, %v906
        %v909 = vpack.c.bf16 %v908, %v907
        %v910 = vld [vmem:[%s474] sm:$0xff]
        %v911 = vld [vmem:[%s474 + $0x8] sm:$0xff]
        %v912 = vld [vmem:[%s474 + $0x10] sm:$0xff]
        %v913 = vld [vmem:[%s474 + $0x18] sm:$0xff]
        %v914 = vld [vmem:[%s474 + $0x20] sm:$0xff]
        %v915 = vld [vmem:[%s474 + $0x28] sm:$0xff]
        %v916 = vld [vmem:[%s474 + $0x30] sm:$0xff]
        %v917 = vld [vmem:[%s474 + $0x38] sm:$0xff]
        %v918 = vld [vmem:[%s474 + $0x40] sm:$0xff]
        %v919 = vld [vmem:[%s474 + $0x48] sm:$0xff]
        %v920 = vld [vmem:[%s474 + $0x50] sm:$0xff]
        %v921 = vld [vmem:[%s474 + $0x58] sm:$0xff]
        %v922 = vld [vmem:[%s474 + $0x60] sm:$0xff]
        %v923 = vld [vmem:[%s474 + $0x68] sm:$0xff]
        %v924 = vld [vmem:[%s474 + $0x70] sm:$0xff]
        %v925 = vld [vmem:[%s474 + $0x78] sm:$0xff]
        %v926 = vld [vmem:[%s474 + $0x80] sm:$0xff]
        %v927 = vld [vmem:[%s474 + $0x88] sm:$0xff]
        %v928 = vld [vmem:[%s474 + $0x90] sm:$0xff]
        %v929 = vld [vmem:[%s474 + $0x98] sm:$0xff]
        %v930 = vld [vmem:[%s474 + $0xa0] sm:$0xff]
        %v931 = vld [vmem:[%s474 + $0xa8] sm:$0xff]
        %v932 = vld [vmem:[%s474 + $0xb0] sm:$0xff]
        %v933 = vld [vmem:[%s474 + $0xb8] sm:$0xff]
        %v934 = vld [vmem:[%s474 + $0xc0] sm:$0xff]
        %v935 = vld [vmem:[%s474 + $0xc8] sm:$0xff]
        %v936 = vld [vmem:[%s474 + $0xd0] sm:$0xff]
        %v937 = vld [vmem:[%s474 + $0xd8] sm:$0xff]
        %v938 = vld [vmem:[%s474 + $0xe0] sm:$0xff]
        %v939 = vld [vmem:[%s474 + $0xe8] sm:$0xff]
        %v940 = vld [vmem:[%s474 + $0xf0] sm:$0xff]
        %v941 = vld [vmem:[%s474 + $0xf8] sm:$0xff]
        %v942 = vld [vmem:[%s474 + $0x100] sm:$0xff]
        %v943 = vld [vmem:[%s474 + $0x108] sm:$0xff]
        %v944 = vld [vmem:[%s474 + $0x110] sm:$0xff]
        %v945 = vld [vmem:[%s474 + $0x118] sm:$0xff]
        %v946 = vld [vmem:[%s474 + $0x120] sm:$0xff]
        %v947 = vld [vmem:[%s474 + $0x128] sm:$0xff]
        %v948 = vld [vmem:[%s474 + $0x130] sm:$0xff]
        %v949 = vld [vmem:[%s474 + $0x138] sm:$0xff]
        %v950 = vld [vmem:[%s474 + $0x140] sm:$0xff]
        %v951 = vld [vmem:[%s474 + $0x148] sm:$0xff]
        %v952 = vld [vmem:[%s474 + $0x150] sm:$0xff]
        %v953 = vld [vmem:[%s474 + $0x158] sm:$0xff]
        %v954 = vld [vmem:[%s474 + $0x160] sm:$0xff]
        %v955 = vld [vmem:[%s474 + $0x168] sm:$0xff]
        %v956 = vld [vmem:[%s474 + $0x170] sm:$0xff]
        %v957 = vld [vmem:[%s474 + $0x178] sm:$0xff]
        %v958 = vld [vmem:[%s474 + $0x180] sm:$0xff]
        %v959 = vld [vmem:[%s474 + $0x188] sm:$0xff]
        %v960 = vld [vmem:[%s474 + $0x190] sm:$0xff]
        %v961 = vld [vmem:[%s474 + $0x198] sm:$0xff]
        %v962 = vld [vmem:[%s474 + $0x1a0] sm:$0xff]
        %v963 = vld [vmem:[%s474 + $0x1a8] sm:$0xff]
        %v964 = vld [vmem:[%s474 + $0x1b0] sm:$0xff]
        %v965 = vld [vmem:[%s474 + $0x1b8] sm:$0xff]
        %v966 = vld [vmem:[%s474 + $0x1c0] sm:$0xff]
        %v967 = vld [vmem:[%s474 + $0x1c8] sm:$0xff]
        %v968 = vld [vmem:[%s474 + $0x1d0] sm:$0xff]
        %v969 = vld [vmem:[%s474 + $0x1d8] sm:$0xff]
        %v970 = vld [vmem:[%s474 + $0x1e0] sm:$0xff]
        %v971 = vld [vmem:[%s474 + $0x1e8] sm:$0xff]
        %v972 = vld [vmem:[%s474 + $0x1f0] sm:$0xff]
        %v973 = vld [vmem:[%s474 + $0x1f8] sm:$0xff]
        %v974 = vld [vmem:[%s478] sm:$0xff]
        %v975 = vld [vmem:[%s478 + $0x8] sm:$0xff]
        %v978 = vperm.slane %v974, 0
        %v979 = vperm.slane %v974, 1
        %v980 = vperm.slane %v974, 2
        %v981 = vperm.slane %v974, 3
        %v982 = vperm.slane %v974, 4
        %v983 = vperm.slane %v974, 5
        %v984 = vperm.slane %v974, 6
        %v985 = vperm.slane %v974, 7
        %v986 = vperm.slane %v975, 0
        %v987 = vperm.slane %v975, 1
        %v988 = vperm.slane %v975, 2
        %v989 = vperm.slane %v975, 3
        %v990 = vperm.slane %v975, 4
        %v991 = vperm.slane %v975, 5
        %v992 = vperm.slane %v975, 6
        %v993 = vperm.slane %v975, 7
        %v1074 = vunpack.c.l.b16 %v910
        %v1075 = vunpack.c.h.b16 %v910
        %v1076 = vunpack.c.l.b16 %v911
        %v1077 = vunpack.c.h.b16 %v911
        %v1078 = vunpack.c.l.b16 %v912
        %v1079 = vunpack.c.h.b16 %v912
        %v1080 = vunpack.c.l.b16 %v913
        %v1081 = vunpack.c.h.b16 %v913
        %v1082 = vunpack.c.l.b16 %v914
        %v1083 = vunpack.c.h.b16 %v914
        %v1084 = vunpack.c.l.b16 %v915
        %v1085 = vunpack.c.h.b16 %v915
        %v1086 = vunpack.c.l.b16 %v916
        %v1087 = vunpack.c.h.b16 %v916
        %v1088 = vunpack.c.l.b16 %v917
        %v1089 = vunpack.c.h.b16 %v917
        %v1090 = vunpack.c.l.b16 %v918
        %v1091 = vunpack.c.h.b16 %v918
        %v1092 = vunpack.c.l.b16 %v919
        %v1093 = vunpack.c.h.b16 %v919
        %v1094 = vunpack.c.l.b16 %v920
        %v1095 = vunpack.c.h.b16 %v920
        %v1096 = vunpack.c.l.b16 %v921
        %v1097 = vunpack.c.h.b16 %v921
        %v1098 = vunpack.c.l.b16 %v922
        %v1099 = vunpack.c.h.b16 %v922
        %v1100 = vunpack.c.l.b16 %v923
        %v1101 = vunpack.c.h.b16 %v923
        %v1102 = vunpack.c.l.b16 %v924
        %v1103 = vunpack.c.h.b16 %v924
        %v1104 = vunpack.c.l.b16 %v925
        %v1105 = vunpack.c.h.b16 %v925
        %v1106 = vunpack.c.l.b16 %v926
        %v1107 = vunpack.c.h.b16 %v926
        %v1108 = vunpack.c.l.b16 %v927
        %v1109 = vunpack.c.h.b16 %v927
        %v1110 = vunpack.c.l.b16 %v928
        %v1111 = vunpack.c.h.b16 %v928
        %v1112 = vunpack.c.l.b16 %v929
        %v1113 = vunpack.c.h.b16 %v929
        %v1114 = vunpack.c.l.b16 %v930
        %v1115 = vunpack.c.h.b16 %v930
        %v1116 = vunpack.c.l.b16 %v931
        %v1117 = vunpack.c.h.b16 %v931
        %v1118 = vunpack.c.l.b16 %v932
        %v1119 = vunpack.c.h.b16 %v932
        %v1120 = vunpack.c.l.b16 %v933
        %v1121 = vunpack.c.h.b16 %v933
        %v1122 = vunpack.c.l.b16 %v934
        %v1123 = vunpack.c.h.b16 %v934
        %v1124 = vunpack.c.l.b16 %v935
        %v1125 = vunpack.c.h.b16 %v935
        %v1126 = vunpack.c.l.b16 %v936
        %v1127 = vunpack.c.h.b16 %v936
        %v1128 = vunpack.c.l.b16 %v937
        %v1129 = vunpack.c.h.b16 %v937
        %v1130 = vunpack.c.l.b16 %v938
        %v1131 = vunpack.c.h.b16 %v938
        %v1132 = vunpack.c.l.b16 %v939
        %v1133 = vunpack.c.h.b16 %v939
        %v1134 = vunpack.c.l.b16 %v940
        %v1135 = vunpack.c.h.b16 %v940
        %v1136 = vunpack.c.l.b16 %v941
        %v1137 = vunpack.c.h.b16 %v941
        %v1138 = vunpack.c.l.b16 %v942
        %v1139 = vunpack.c.h.b16 %v942
        %v1140 = vunpack.c.l.b16 %v943
        %v1141 = vunpack.c.h.b16 %v943
        %v1142 = vunpack.c.l.b16 %v944
        %v1143 = vunpack.c.h.b16 %v944
        %v1144 = vunpack.c.l.b16 %v945
        %v1145 = vunpack.c.h.b16 %v945
        %v1146 = vunpack.c.l.b16 %v946
        %v1147 = vunpack.c.h.b16 %v946
        %v1148 = vunpack.c.l.b16 %v947
        %v1149 = vunpack.c.h.b16 %v947
        %v1150 = vunpack.c.l.b16 %v948
        %v1151 = vunpack.c.h.b16 %v948
        %v1152 = vunpack.c.l.b16 %v949
        %v1153 = vunpack.c.h.b16 %v949
        %v1154 = vunpack.c.l.b16 %v950
        %v1155 = vunpack.c.h.b16 %v950
        %v1156 = vunpack.c.l.b16 %v951
        %v1157 = vunpack.c.h.b16 %v951
        %v1158 = vunpack.c.l.b16 %v952
        %v1159 = vunpack.c.h.b16 %v952
        %v1160 = vunpack.c.l.b16 %v953
        %v1161 = vunpack.c.h.b16 %v953
        %v1162 = vunpack.c.l.b16 %v954
        %v1163 = vunpack.c.h.b16 %v954
        %v1164 = vunpack.c.l.b16 %v955
        %v1165 = vunpack.c.h.b16 %v955
        %v1166 = vunpack.c.l.b16 %v956
        %v1167 = vunpack.c.h.b16 %v956
        %v1168 = vunpack.c.l.b16 %v957
        %v1169 = vunpack.c.h.b16 %v957
        %v1170 = vunpack.c.l.b16 %v958
        %v1171 = vunpack.c.h.b16 %v958
        %v1172 = vunpack.c.l.b16 %v959
        %v1173 = vunpack.c.h.b16 %v959
        %v1174 = vunpack.c.l.b16 %v960
        %v1175 = vunpack.c.h.b16 %v960
        %v1176 = vunpack.c.l.b16 %v961
        %v1177 = vunpack.c.h.b16 %v961
        %v1178 = vunpack.c.l.b16 %v962
        %v1179 = vunpack.c.h.b16 %v962
        %v1180 = vunpack.c.l.b16 %v963
        %v1181 = vunpack.c.h.b16 %v963
        %v1182 = vunpack.c.l.b16 %v964
        %v1183 = vunpack.c.h.b16 %v964
        %v1184 = vunpack.c.l.b16 %v965
        %v1185 = vunpack.c.h.b16 %v965
        %v1186 = vunpack.c.l.b16 %v966
        %v1187 = vunpack.c.h.b16 %v966
        %v1188 = vunpack.c.l.b16 %v967
        %v1189 = vunpack.c.h.b16 %v967
        %v1190 = vunpack.c.l.b16 %v968
        %v1191 = vunpack.c.h.b16 %v968
        %v1192 = vunpack.c.l.b16 %v969
        %v1193 = vunpack.c.h.b16 %v969
        %v1194 = vunpack.c.l.b16 %v970
        %v1195 = vunpack.c.h.b16 %v970
        %v1196 = vunpack.c.l.b16 %v971
        %v1197 = vunpack.c.h.b16 %v971
        %v1198 = vunpack.c.l.b16 %v972
        %v1199 = vunpack.c.h.b16 %v972
        %v1200 = vunpack.c.l.b16 %v973
        %v1201 = vunpack.c.h.b16 %v973
        %v1202 = vpack.c.b16 %v1090, %v1074
        %v1203 = vpack.c.b16 %v1091, %v1075
        %v1204 = vpack.c.b16 %v1092, %v1076
        %v1205 = vpack.c.b16 %v1093, %v1077
        %v1206 = vpack.c.b16 %v1094, %v1078
        %v1207 = vpack.c.b16 %v1095, %v1079
        %v1208 = vpack.c.b16 %v1096, %v1080
        %v1209 = vpack.c.b16 %v1097, %v1081
        %v1210 = vpack.c.b16 %v1098, %v1082
        %v1211 = vpack.c.b16 %v1099, %v1083
        %v1212 = vpack.c.b16 %v1100, %v1084
        %v1213 = vpack.c.b16 %v1101, %v1085
        %v1214 = vpack.c.b16 %v1102, %v1086
        %v1215 = vpack.c.b16 %v1103, %v1087
        %v1216 = vpack.c.b16 %v1104, %v1088
        %v1217 = vpack.c.b16 %v1105, %v1089
        %v1218 = vpack.c.b16 %v1122, %v1106
        %v1219 = vpack.c.b16 %v1123, %v1107
        %v1220 = vpack.c.b16 %v1124, %v1108
        %v1221 = vpack.c.b16 %v1125, %v1109
        %v1222 = vpack.c.b16 %v1126, %v1110
        %v1223 = vpack.c.b16 %v1127, %v1111
        %v1224 = vpack.c.b16 %v1128, %v1112
        %v1225 = vpack.c.b16 %v1129, %v1113
        %v1226 = vpack.c.b16 %v1130, %v1114
        %v1227 = vpack.c.b16 %v1131, %v1115
        %v1228 = vpack.c.b16 %v1132, %v1116
        %v1229 = vpack.c.b16 %v1133, %v1117
        %v1230 = vpack.c.b16 %v1134, %v1118
        %v1231 = vpack.c.b16 %v1135, %v1119
        %v1232 = vpack.c.b16 %v1136, %v1120
        %v1233 = vpack.c.b16 %v1137, %v1121
        %v1234 = vpack.c.b16 %v1154, %v1138
        %v1235 = vpack.c.b16 %v1155, %v1139
        %v1236 = vpack.c.b16 %v1156, %v1140
        %v1237 = vpack.c.b16 %v1157, %v1141
        %v1238 = vpack.c.b16 %v1158, %v1142
        %v1239 = vpack.c.b16 %v1159, %v1143
        %v1240 = vpack.c.b16 %v1160, %v1144
        %v1241 = vpack.c.b16 %v1161, %v1145
        %v1242 = vpack.c.b16 %v1162, %v1146
        %v1243 = vpack.c.b16 %v1163, %v1147
        %v1244 = vpack.c.b16 %v1164, %v1148
        %v1245 = vpack.c.b16 %v1165, %v1149
        %v1246 = vpack.c.b16 %v1166, %v1150
        %v1247 = vpack.c.b16 %v1167, %v1151
        %v1248 = vpack.c.b16 %v1168, %v1152
        %v1249 = vpack.c.b16 %v1169, %v1153
        %v1250 = vpack.c.b16 %v1186, %v1170
        %v1251 = vpack.c.b16 %v1187, %v1171
        %v1252 = vpack.c.b16 %v1188, %v1172
        %v1253 = vpack.c.b16 %v1189, %v1173
        %v1254 = vpack.c.b16 %v1190, %v1174
        %v1255 = vpack.c.b16 %v1191, %v1175
        %v1256 = vpack.c.b16 %v1192, %v1176
        %v1257 = vpack.c.b16 %v1193, %v1177
        %v1258 = vpack.c.b16 %v1194, %v1178
        %v1259 = vpack.c.b16 %v1195, %v1179
        %v1260 = vpack.c.b16 %v1196, %v1180
        %v1261 = vpack.c.b16 %v1197, %v1181
        %v1262 = vpack.c.b16 %v1198, %v1182
        %v1263 = vpack.c.b16 %v1199, %v1183
        %v1264 = vpack.c.b16 %v1200, %v1184
        %v1265 = vpack.c.b16 %v1201, %v1185
        %v1331 = vsel %vm555, %v909, 0
        %1333 = vmatpush.bf16.msra.mxu0 0
        %1334 = vmatpush.bf16.msra.mxu0 0
        %1335 = vmatpush.bf16.msra.mxu0 0
        %1336 = vmatpush.bf16.msra.mxu0 0
        %1337 = vmatpush.bf16.msra.mxu0 %v1250
        %1338 = vmatpush.bf16.msra.mxu0 %v1234
        %1339 = vmatpush.bf16.msra.mxu0 %v1218
        %1340 = vmatpush.bf16.msra.mxu0 %v1202
        %1341 = vmatmul.bf16.gmra.mxu0 %v1331
        %v1342 = vpop.f32.mrf.mxu0
        %v1343 = vadd.f32 %v978, %v1342
        %v1344 = vpop.f32.mrf.mxu0
        %v1345 = vadd.f32 %v978, %v1344
        %1346 = vdwg.mxu0
        %1347 = vmatpush.bf16.msra.mxu0 0
        %1348 = vmatpush.bf16.msra.mxu0 0
        %1349 = vmatpush.bf16.msra.mxu0 0
        %1350 = vmatpush.bf16.msra.mxu0 0
        %1351 = vmatpush.bf16.msra.mxu0 %v1251
        %1352 = vmatpush.bf16.msra.mxu0 %v1235
        %1353 = vmatpush.bf16.msra.mxu0 %v1219
        %1354 = vmatpush.bf16.msra.mxu0 %v1203
        %1355 = vmatmul.bf16.gmra.mxu0 %v1331
        %v1356 = vpop.f32.mrf.mxu0
        %v1357 = vadd.f32 %v979, %v1356
        %v1358 = vpop.f32.mrf.mxu0
        %v1359 = vadd.f32 %v979, %v1358
        %1360 = vdwg.mxu0
        %1361 = vmatpush.bf16.msra.mxu0 0
        %1362 = vmatpush.bf16.msra.mxu0 0
        %1363 = vmatpush.bf16.msra.mxu0 0
        %1364 = vmatpush.bf16.msra.mxu0 0
        %1365 = vmatpush.bf16.msra.mxu0 %v1252
        %1366 = vmatpush.bf16.msra.mxu0 %v1236
        %1367 = vmatpush.bf16.msra.mxu0 %v1220
        %1368 = vmatpush.bf16.msra.mxu0 %v1204
        %1369 = vmatmul.bf16.gmra.mxu0 %v1331
        %v1370 = vpop.f32.mrf.mxu0
        %v1371 = vadd.f32 %v980, %v1370
        %v1372 = vpop.f32.mrf.mxu0
        %v1373 = vadd.f32 %v980, %v1372
        %1374 = vdwg.mxu0
        %1375 = vmatpush.bf16.msra.mxu0 0
        %1376 = vmatpush.bf16.msra.mxu0 0
        %1377 = vmatpush.bf16.msra.mxu0 0
        %1378 = vmatpush.bf16.msra.mxu0 0
        %1379 = vmatpush.bf16.msra.mxu0 %v1253
        %1380 = vmatpush.bf16.msra.mxu0 %v1237
        %1381 = vmatpush.bf16.msra.mxu0 %v1221
        %1382 = vmatpush.bf16.msra.mxu0 %v1205
        %1383 = vmatmul.bf16.gmra.mxu0 %v1331
        %v1384 = vpop.f32.mrf.mxu0
        %v1385 = vadd.f32 %v981, %v1384
        %v1386 = vpop.f32.mrf.mxu0
        %v1387 = vadd.f32 %v981, %v1386
        %1388 = vdwg.mxu0
        %1389 = vmatpush.bf16.msra.mxu0 0
        %1390 = vmatpush.bf16.msra.mxu0 0
        %1391 = vmatpush.bf16.msra.mxu0 0
        %1392 = vmatpush.bf16.msra.mxu0 0
        %1393 = vmatpush.bf16.msra.mxu0 %v1254
        %1394 = vmatpush.bf16.msra.mxu0 %v1238
        %1395 = vmatpush.bf16.msra.mxu0 %v1222
        %1396 = vmatpush.bf16.msra.mxu0 %v1206
        %1397 = vmatmul.bf16.gmra.mxu0 %v1331
        %v1398 = vpop.f32.mrf.mxu0
        %v1399 = vadd.f32 %v982, %v1398
        %v1400 = vpop.f32.mrf.mxu0
        %v1401 = vadd.f32 %v982, %v1400
        %1402 = vdwg.mxu0
        %1403 = vmatpush.bf16.msra.mxu0 0
        %1404 = vmatpush.bf16.msra.mxu0 0
        %1405 = vmatpush.bf16.msra.mxu0 0
        %1406 = vmatpush.bf16.msra.mxu0 0
        %1407 = vmatpush.bf16.msra.mxu0 %v1255
        %1408 = vmatpush.bf16.msra.mxu0 %v1239
        %1409 = vmatpush.bf16.msra.mxu0 %v1223
        %1410 = vmatpush.bf16.msra.mxu0 %v1207
        %1411 = vmatmul.bf16.gmra.mxu0 %v1331
        %v1412 = vpop.f32.mrf.mxu0
        %v1413 = vadd.f32 %v983, %v1412
        %v1414 = vpop.f32.mrf.mxu0
        %v1415 = vadd.f32 %v983, %v1414
        %1416 = vdwg.mxu0
        %1417 = vmatpush.bf16.msra.mxu0 0
        %1418 = vmatpush.bf16.msra.mxu0 0
        %1419 = vmatpush.bf16.msra.mxu0 0
        %1420 = vmatpush.bf16.msra.mxu0 0
        %1421 = vmatpush.bf16.msra.mxu0 %v1256
        %1422 = vmatpush.bf16.msra.mxu0 %v1240
        %1423 = vmatpush.bf16.msra.mxu0 %v1224
        %1424 = vmatpush.bf16.msra.mxu0 %v1208
        %1425 = vmatmul.bf16.gmra.mxu0 %v1331
        %v1426 = vpop.f32.mrf.mxu0
        %v1427 = vadd.f32 %v984, %v1426
        %v1428 = vpop.f32.mrf.mxu0
        %v1429 = vadd.f32 %v984, %v1428
        %1430 = vdwg.mxu0
        %1431 = vmatpush.bf16.msra.mxu0 0
        %1432 = vmatpush.bf16.msra.mxu0 0
        %1433 = vmatpush.bf16.msra.mxu0 0
        %1434 = vmatpush.bf16.msra.mxu0 0
        %1435 = vmatpush.bf16.msra.mxu0 %v1257
        %1436 = vmatpush.bf16.msra.mxu0 %v1241
        %1437 = vmatpush.bf16.msra.mxu0 %v1225
        %1438 = vmatpush.bf16.msra.mxu0 %v1209
        %1439 = vmatmul.bf16.gmra.mxu0 %v1331
        %v1440 = vpop.f32.mrf.mxu0
        %v1441 = vadd.f32 %v985, %v1440
        %v1442 = vpop.f32.mrf.mxu0
        %v1443 = vadd.f32 %v985, %v1442
        %1444 = vdwg.mxu0
        %1445 = vmatpush.bf16.msra.mxu0 0
        %1446 = vmatpush.bf16.msra.mxu0 0
        %1447 = vmatpush.bf16.msra.mxu0 0
        %1448 = vmatpush.bf16.msra.mxu0 0
        %1449 = vmatpush.bf16.msra.mxu0 %v1258
        %1450 = vmatpush.bf16.msra.mxu0 %v1242
        %1451 = vmatpush.bf16.msra.mxu0 %v1226
        %1452 = vmatpush.bf16.msra.mxu0 %v1210
        %1453 = vmatmul.bf16.gmra.mxu0 %v1331
        %v1454 = vpop.f32.mrf.mxu0
        %v1455 = vadd.f32 %v986, %v1454
        %v1456 = vpop.f32.mrf.mxu0
        %v1457 = vadd.f32 %v986, %v1456
        %1458 = vdwg.mxu0
        %1459 = vmatpush.bf16.msra.mxu0 0
        %1460 = vmatpush.bf16.msra.mxu0 0
        %1461 = vmatpush.bf16.msra.mxu0 0
        %1462 = vmatpush.bf16.msra.mxu0 0
        %1463 = vmatpush.bf16.msra.mxu0 %v1259
        %1464 = vmatpush.bf16.msra.mxu0 %v1243
        %1465 = vmatpush.bf16.msra.mxu0 %v1227
        %1466 = vmatpush.bf16.msra.mxu0 %v1211
        %1467 = vmatmul.bf16.gmra.mxu0 %v1331
        %v1468 = vpop.f32.mrf.mxu0
        %v1469 = vadd.f32 %v987, %v1468
        %v1470 = vpop.f32.mrf.mxu0
        %v1471 = vadd.f32 %v987, %v1470
        %1472 = vdwg.mxu0
        %1473 = vmatpush.bf16.msra.mxu0 0
        %1474 = vmatpush.bf16.msra.mxu0 0
        %1475 = vmatpush.bf16.msra.mxu0 0
        %1476 = vmatpush.bf16.msra.mxu0 0
        %1477 = vmatpush.bf16.msra.mxu0 %v1260
        %1478 = vmatpush.bf16.msra.mxu0 %v1244
        %1479 = vmatpush.bf16.msra.mxu0 %v1228
        %1480 = vmatpush.bf16.msra.mxu0 %v1212
        %1481 = vmatmul.bf16.gmra.mxu0 %v1331
        %v1482 = vpop.f32.mrf.mxu0
        %v1483 = vadd.f32 %v988, %v1482
        %v1484 = vpop.f32.mrf.mxu0
        %v1485 = vadd.f32 %v988, %v1484
        %1486 = vdwg.mxu0
        %1487 = vmatpush.bf16.msra.mxu0 0
        %1488 = vmatpush.bf16.msra.mxu0 0
        %1489 = vmatpush.bf16.msra.mxu0 0
        %1490 = vmatpush.bf16.msra.mxu0 0
        %1491 = vmatpush.bf16.msra.mxu0 %v1261
        %1492 = vmatpush.bf16.msra.mxu0 %v1245
        %1493 = vmatpush.bf16.msra.mxu0 %v1229
        %1494 = vmatpush.bf16.msra.mxu0 %v1213
        %1495 = vmatmul.bf16.gmra.mxu0 %v1331
        %v1496 = vpop.f32.mrf.mxu0
        %v1497 = vadd.f32 %v989, %v1496
        %v1498 = vpop.f32.mrf.mxu0
        %v1499 = vadd.f32 %v989, %v1498
        %1500 = vdwg.mxu0
        %1501 = vmatpush.bf16.msra.mxu0 0
        %1502 = vmatpush.bf16.msra.mxu0 0
        %1503 = vmatpush.bf16.msra.mxu0 0
        %1504 = vmatpush.bf16.msra.mxu0 0
        %1505 = vmatpush.bf16.msra.mxu0 %v1262
        %1506 = vmatpush.bf16.msra.mxu0 %v1246
        %1507 = vmatpush.bf16.msra.mxu0 %v1230
        %1508 = vmatpush.bf16.msra.mxu0 %v1214
        %1509 = vmatmul.bf16.gmra.mxu0 %v1331
        %v1510 = vpop.f32.mrf.mxu0
        %v1511 = vadd.f32 %v990, %v1510
        %v1512 = vpop.f32.mrf.mxu0
        %v1513 = vadd.f32 %v990, %v1512
        %1514 = vdwg.mxu0
        %1515 = vmatpush.bf16.msra.mxu0 0
        %1516 = vmatpush.bf16.msra.mxu0 0
        %1517 = vmatpush.bf16.msra.mxu0 0
        %1518 = vmatpush.bf16.msra.mxu0 0
        %1519 = vmatpush.bf16.msra.mxu0 %v1263
        %1520 = vmatpush.bf16.msra.mxu0 %v1247
        %1521 = vmatpush.bf16.msra.mxu0 %v1231
        %1522 = vmatpush.bf16.msra.mxu0 %v1215
        %1523 = vmatmul.bf16.gmra.mxu0 %v1331
        %v1524 = vpop.f32.mrf.mxu0
        %v1525 = vadd.f32 %v991, %v1524
        %v1526 = vpop.f32.mrf.mxu0
        %v1527 = vadd.f32 %v991, %v1526
        %1528 = vdwg.mxu0
        %1529 = vmatpush.bf16.msra.mxu0 0
        %1530 = vmatpush.bf16.msra.mxu0 0
        %1531 = vmatpush.bf16.msra.mxu0 0
        %1532 = vmatpush.bf16.msra.mxu0 0
        %1533 = vmatpush.bf16.msra.mxu0 %v1264
        %1534 = vmatpush.bf16.msra.mxu0 %v1248
        %1535 = vmatpush.bf16.msra.mxu0 %v1232
        %1536 = vmatpush.bf16.msra.mxu0 %v1216
        %1537 = vmatmul.bf16.gmra.mxu0 %v1331
        %v1538 = vpop.f32.mrf.mxu0
        %v1539 = vadd.f32 %v992, %v1538
        %v1540 = vpop.f32.mrf.mxu0
        %v1541 = vadd.f32 %v992, %v1540
        %1542 = vdwg.mxu0
        %1543 = vmatpush.bf16.msra.mxu0 0
        %1544 = vmatpush.bf16.msra.mxu0 0
        %1545 = vmatpush.bf16.msra.mxu0 0
        %1546 = vmatpush.bf16.msra.mxu0 0
        %1547 = vmatpush.bf16.msra.mxu0 %v1265
        %1548 = vmatpush.bf16.msra.mxu0 %v1249
        %1549 = vmatpush.bf16.msra.mxu0 %v1233
        %1550 = vmatpush.bf16.msra.mxu0 %v1217
        %1551 = vmatmul.bf16.gmra.mxu0 %v1331
        %v1552 = vpop.f32.mrf.mxu0
        %v1553 = vadd.f32 %v993, %v1552
        %v1554 = vpop.f32.mrf.mxu0
        %v1555 = vadd.f32 %v993, %v1554
        %1556 = vdwg.mxu0
        %v1557 = vmax.f32 %v1343, 0.0
        %v1558 = vmax.f32 %v1357, 0.0
        %v1559 = vmax.f32 %v1371, 0.0
        %v1560 = vmax.f32 %v1385, 0.0
        %v1561 = vmax.f32 %v1399, 0.0
        %v1562 = vmax.f32 %v1413, 0.0
        %v1563 = vmax.f32 %v1427, 0.0
        %v1564 = vmax.f32 %v1441, 0.0
        %v1565 = vmax.f32 %v1455, 0.0
        %v1566 = vmax.f32 %v1469, 0.0
        %v1567 = vmax.f32 %v1483, 0.0
        %v1568 = vmax.f32 %v1497, 0.0
        %v1569 = vmax.f32 %v1511, 0.0
        %v1570 = vmax.f32 %v1525, 0.0
        %v1571 = vmax.f32 %v1539, 0.0
        %v1572 = vmax.f32 %v1553, 0.0
        %v1573 = vmax.f32 %v1345, 0.0
        %v1574 = vmax.f32 %v1359, 0.0
        %v1575 = vmax.f32 %v1373, 0.0
        %v1576 = vmax.f32 %v1387, 0.0
        %v1577 = vmax.f32 %v1401, 0.0
        %v1578 = vmax.f32 %v1415, 0.0
        %v1579 = vmax.f32 %v1429, 0.0
        %v1580 = vmax.f32 %v1443, 0.0
        %v1581 = vmax.f32 %v1457, 0.0
        %v1582 = vmax.f32 %v1471, 0.0
        %v1583 = vmax.f32 %v1485, 0.0
        %v1584 = vmax.f32 %v1499, 0.0
        %v1585 = vmax.f32 %v1513, 0.0
        %v1586 = vmax.f32 %v1527, 0.0
        %v1587 = vmax.f32 %v1541, 0.0
        %v1588 = vmax.f32 %v1555, 0.0
        %v1589 = vpack.c.bf16 %v1573, %v1557
        %v1590 = vpack.c.bf16 %v1574, %v1558
        %v1591 = vpack.c.bf16 %v1575, %v1559
        %v1592 = vpack.c.bf16 %v1576, %v1560
        %v1593 = vpack.c.bf16 %v1577, %v1561
        %v1594 = vpack.c.bf16 %v1578, %v1562
        %v1595 = vpack.c.bf16 %v1579, %v1563
        %v1596 = vpack.c.bf16 %v1580, %v1564
        %v1597 = vpack.c.bf16 %v1581, %v1565
        %v1598 = vpack.c.bf16 %v1582, %v1566
        %v1599 = vpack.c.bf16 %v1583, %v1567
        %v1600 = vpack.c.bf16 %v1584, %v1568
        %v1601 = vpack.c.bf16 %v1585, %v1569
        %v1602 = vpack.c.bf16 %v1586, %v1570
        %v1603 = vpack.c.bf16 %v1587, %v1571
        %v1604 = vpack.c.bf16 %v1588, %v1572
        %v1605 = vld [vmem:[%s483] sm:$0xf]
        %v1606 = vld [vmem:[%s483 + $0x4] sm:$0xf]
        %v1607 = vld [vmem:[%s483 + $0x8] sm:$0xf]
        %v1608 = vld [vmem:[%s483 + $0xc] sm:$0xf]
        %v1609 = vld [vmem:[%s483 + $0x10] sm:$0xf]
        %v1610 = vld [vmem:[%s483 + $0x14] sm:$0xf]
        %v1611 = vld [vmem:[%s483 + $0x18] sm:$0xf]
        %v1612 = vld [vmem:[%s483 + $0x1c] sm:$0xf]
        %v1613 = vld [vmem:[%s483 + $0x20] sm:$0xf]
        %v1614 = vld [vmem:[%s483 + $0x24] sm:$0xf]
        %v1615 = vld [vmem:[%s483 + $0x28] sm:$0xf]
        %v1616 = vld [vmem:[%s483 + $0x2c] sm:$0xf]
        %v1617 = vld [vmem:[%s483 + $0x30] sm:$0xf]
        %v1618 = vld [vmem:[%s483 + $0x34] sm:$0xf]
        %v1619 = vld [vmem:[%s483 + $0x38] sm:$0xf]
        %v1620 = vld [vmem:[%s483 + $0x3c] sm:$0xf]
        %v1621 = vld [vmem:[%s483 + $0x40] sm:$0xf]
        %v1622 = vld [vmem:[%s483 + $0x44] sm:$0xf]
        %v1623 = vld [vmem:[%s483 + $0x48] sm:$0xf]
        %v1624 = vld [vmem:[%s483 + $0x4c] sm:$0xf]
        %v1625 = vld [vmem:[%s483 + $0x50] sm:$0xf]
        %v1626 = vld [vmem:[%s483 + $0x54] sm:$0xf]
        %v1627 = vld [vmem:[%s483 + $0x58] sm:$0xf]
        %v1628 = vld [vmem:[%s483 + $0x5c] sm:$0xf]
        %v1629 = vld [vmem:[%s483 + $0x60] sm:$0xf]
        %v1630 = vld [vmem:[%s483 + $0x64] sm:$0xf]
        %v1631 = vld [vmem:[%s483 + $0x68] sm:$0xf]
        %v1632 = vld [vmem:[%s483 + $0x6c] sm:$0xf]
        %v1633 = vld [vmem:[%s483 + $0x70] sm:$0xf]
        %v1634 = vld [vmem:[%s483 + $0x74] sm:$0xf]
        %v1635 = vld [vmem:[%s483 + $0x78] sm:$0xf]
        %v1636 = vld [vmem:[%s483 + $0x7c] sm:$0xf]
        %v1637 = vld [vmem:[%s483 + $0x80] sm:$0xf]
        %v1638 = vld [vmem:[%s483 + $0x84] sm:$0xf]
        %v1639 = vld [vmem:[%s483 + $0x88] sm:$0xf]
        %v1640 = vld [vmem:[%s483 + $0x8c] sm:$0xf]
        %v1641 = vld [vmem:[%s483 + $0x90] sm:$0xf]
        %v1642 = vld [vmem:[%s483 + $0x94] sm:$0xf]
        %v1643 = vld [vmem:[%s483 + $0x98] sm:$0xf]
        %v1644 = vld [vmem:[%s483 + $0x9c] sm:$0xf]
        %v1645 = vld [vmem:[%s483 + $0xa0] sm:$0xf]
        %v1646 = vld [vmem:[%s483 + $0xa4] sm:$0xf]
        %v1647 = vld [vmem:[%s483 + $0xa8] sm:$0xf]
        %v1648 = vld [vmem:[%s483 + $0xac] sm:$0xf]
        %v1649 = vld [vmem:[%s483 + $0xb0] sm:$0xf]
        %v1650 = vld [vmem:[%s483 + $0xb4] sm:$0xf]
        %v1651 = vld [vmem:[%s483 + $0xb8] sm:$0xf]
        %v1652 = vld [vmem:[%s483 + $0xbc] sm:$0xf]
        %v1653 = vld [vmem:[%s483 + $0xc0] sm:$0xf]
        %v1654 = vld [vmem:[%s483 + $0xc4] sm:$0xf]
        %v1655 = vld [vmem:[%s483 + $0xc8] sm:$0xf]
        %v1656 = vld [vmem:[%s483 + $0xcc] sm:$0xf]
        %v1657 = vld [vmem:[%s483 + $0xd0] sm:$0xf]
        %v1658 = vld [vmem:[%s483 + $0xd4] sm:$0xf]
        %v1659 = vld [vmem:[%s483 + $0xd8] sm:$0xf]
        %v1660 = vld [vmem:[%s483 + $0xdc] sm:$0xf]
        %v1661 = vld [vmem:[%s483 + $0xe0] sm:$0xf]
        %v1662 = vld [vmem:[%s483 + $0xe4] sm:$0xf]
        %v1663 = vld [vmem:[%s483 + $0xe8] sm:$0xf]
        %v1664 = vld [vmem:[%s483 + $0xec] sm:$0xf]
        %v1665 = vld [vmem:[%s483 + $0xf0] sm:$0xf]
        %v1666 = vld [vmem:[%s483 + $0xf4] sm:$0xf]
        %v1667 = vld [vmem:[%s483 + $0xf8] sm:$0xf]
        %v1668 = vld [vmem:[%s483 + $0xfc] sm:$0xf]
        %v1669 = vld [vmem:[%s483 + $0x100] sm:$0xf]
        %v1670 = vld [vmem:[%s483 + $0x104] sm:$0xf]
        %v1671 = vld [vmem:[%s483 + $0x108] sm:$0xf]
        %v1672 = vld [vmem:[%s483 + $0x10c] sm:$0xf]
        %v1673 = vld [vmem:[%s483 + $0x110] sm:$0xf]
        %v1674 = vld [vmem:[%s483 + $0x114] sm:$0xf]
        %v1675 = vld [vmem:[%s483 + $0x118] sm:$0xf]
        %v1676 = vld [vmem:[%s483 + $0x11c] sm:$0xf]
        %v1677 = vld [vmem:[%s483 + $0x120] sm:$0xf]
        %v1678 = vld [vmem:[%s483 + $0x124] sm:$0xf]
        %v1679 = vld [vmem:[%s483 + $0x128] sm:$0xf]
        %v1680 = vld [vmem:[%s483 + $0x12c] sm:$0xf]
        %v1681 = vld [vmem:[%s483 + $0x130] sm:$0xf]
        %v1682 = vld [vmem:[%s483 + $0x134] sm:$0xf]
        %v1683 = vld [vmem:[%s483 + $0x138] sm:$0xf]
        %v1684 = vld [vmem:[%s483 + $0x13c] sm:$0xf]
        %v1685 = vld [vmem:[%s483 + $0x140] sm:$0xf]
        %v1686 = vld [vmem:[%s483 + $0x144] sm:$0xf]
        %v1687 = vld [vmem:[%s483 + $0x148] sm:$0xf]
        %v1688 = vld [vmem:[%s483 + $0x14c] sm:$0xf]
        %v1689 = vld [vmem:[%s483 + $0x150] sm:$0xf]
        %v1690 = vld [vmem:[%s483 + $0x154] sm:$0xf]
        %v1691 = vld [vmem:[%s483 + $0x158] sm:$0xf]
        %v1692 = vld [vmem:[%s483 + $0x15c] sm:$0xf]
        %v1693 = vld [vmem:[%s483 + $0x160] sm:$0xf]
        %v1694 = vld [vmem:[%s483 + $0x164] sm:$0xf]
        %v1695 = vld [vmem:[%s483 + $0x168] sm:$0xf]
        %v1696 = vld [vmem:[%s483 + $0x16c] sm:$0xf]
        %v1697 = vld [vmem:[%s483 + $0x170] sm:$0xf]
        %v1698 = vld [vmem:[%s483 + $0x174] sm:$0xf]
        %v1699 = vld [vmem:[%s483 + $0x178] sm:$0xf]
        %v1700 = vld [vmem:[%s483 + $0x17c] sm:$0xf]
        %v1701 = vld [vmem:[%s483 + $0x180] sm:$0xf]
        %v1702 = vld [vmem:[%s483 + $0x184] sm:$0xf]
        %v1703 = vld [vmem:[%s483 + $0x188] sm:$0xf]
        %v1704 = vld [vmem:[%s483 + $0x18c] sm:$0xf]
        %v1705 = vld [vmem:[%s483 + $0x190] sm:$0xf]
        %v1706 = vld [vmem:[%s483 + $0x194] sm:$0xf]
        %v1707 = vld [vmem:[%s483 + $0x198] sm:$0xf]
        %v1708 = vld [vmem:[%s483 + $0x19c] sm:$0xf]
        %v1709 = vld [vmem:[%s483 + $0x1a0] sm:$0xf]
        %v1710 = vld [vmem:[%s483 + $0x1a4] sm:$0xf]
        %v1711 = vld [vmem:[%s483 + $0x1a8] sm:$0xf]
        %v1712 = vld [vmem:[%s483 + $0x1ac] sm:$0xf]
        %v1713 = vld [vmem:[%s483 + $0x1b0] sm:$0xf]
        %v1714 = vld [vmem:[%s483 + $0x1b4] sm:$0xf]
        %v1715 = vld [vmem:[%s483 + $0x1b8] sm:$0xf]
        %v1716 = vld [vmem:[%s483 + $0x1bc] sm:$0xf]
        %v1717 = vld [vmem:[%s483 + $0x1c0] sm:$0xf]
        %v1718 = vld [vmem:[%s483 + $0x1c4] sm:$0xf]
        %v1719 = vld [vmem:[%s483 + $0x1c8] sm:$0xf]
        %v1720 = vld [vmem:[%s483 + $0x1cc] sm:$0xf]
        %v1721 = vld [vmem:[%s483 + $0x1d0] sm:$0xf]
        %v1722 = vld [vmem:[%s483 + $0x1d4] sm:$0xf]
        %v1723 = vld [vmem:[%s483 + $0x1d8] sm:$0xf]
        %v1724 = vld [vmem:[%s483 + $0x1dc] sm:$0xf]
        %v1725 = vld [vmem:[%s483 + $0x1e0] sm:$0xf]
        %v1726 = vld [vmem:[%s483 + $0x1e4] sm:$0xf]
        %v1727 = vld [vmem:[%s483 + $0x1e8] sm:$0xf]
        %v1728 = vld [vmem:[%s483 + $0x1ec] sm:$0xf]
        %v1729 = vld [vmem:[%s483 + $0x1f0] sm:$0xf]
        %v1730 = vld [vmem:[%s483 + $0x1f4] sm:$0xf]
        %v1731 = vld [vmem:[%s483 + $0x1f8] sm:$0xf]
        %v1732 = vld [vmem:[%s483 + $0x1fc] sm:$0xf]
        %v1733 = vld [vmem:[%s483 + $0x200] sm:$0xf]
        %v1734 = vld [vmem:[%s483 + $0x204] sm:$0xf]
        %v1735 = vld [vmem:[%s483 + $0x208] sm:$0xf]
        %v1736 = vld [vmem:[%s483 + $0x20c] sm:$0xf]
        %v1737 = vld [vmem:[%s483 + $0x210] sm:$0xf]
        %v1738 = vld [vmem:[%s483 + $0x214] sm:$0xf]
        %v1739 = vld [vmem:[%s483 + $0x218] sm:$0xf]
        %v1740 = vld [vmem:[%s483 + $0x21c] sm:$0xf]
        %v1741 = vld [vmem:[%s483 + $0x220] sm:$0xf]
        %v1742 = vld [vmem:[%s483 + $0x224] sm:$0xf]
        %v1743 = vld [vmem:[%s483 + $0x228] sm:$0xf]
        %v1744 = vld [vmem:[%s483 + $0x22c] sm:$0xf]
        %v1745 = vld [vmem:[%s483 + $0x230] sm:$0xf]
        %v1746 = vld [vmem:[%s483 + $0x234] sm:$0xf]
        %v1747 = vld [vmem:[%s483 + $0x238] sm:$0xf]
        %v1748 = vld [vmem:[%s483 + $0x23c] sm:$0xf]
        %v1749 = vld [vmem:[%s483 + $0x240] sm:$0xf]
        %v1750 = vld [vmem:[%s483 + $0x244] sm:$0xf]
        %v1751 = vld [vmem:[%s483 + $0x248] sm:$0xf]
        %v1752 = vld [vmem:[%s483 + $0x24c] sm:$0xf]
        %v1753 = vld [vmem:[%s483 + $0x250] sm:$0xf]
        %v1754 = vld [vmem:[%s483 + $0x254] sm:$0xf]
        %v1755 = vld [vmem:[%s483 + $0x258] sm:$0xf]
        %v1756 = vld [vmem:[%s483 + $0x25c] sm:$0xf]
        %v1757 = vld [vmem:[%s483 + $0x260] sm:$0xf]
        %v1758 = vld [vmem:[%s483 + $0x264] sm:$0xf]
        %v1759 = vld [vmem:[%s483 + $0x268] sm:$0xf]
        %v1760 = vld [vmem:[%s483 + $0x26c] sm:$0xf]
        %v1761 = vld [vmem:[%s483 + $0x270] sm:$0xf]
        %v1762 = vld [vmem:[%s483 + $0x274] sm:$0xf]
        %v1763 = vld [vmem:[%s483 + $0x278] sm:$0xf]
        %v1764 = vld [vmem:[%s483 + $0x27c] sm:$0xf]
        %v1765 = vld [vmem:[%s483 + $0x280] sm:$0xf]
        %v1766 = vld [vmem:[%s483 + $0x284] sm:$0xf]
        %v1767 = vld [vmem:[%s483 + $0x288] sm:$0xf]
        %v1768 = vld [vmem:[%s483 + $0x28c] sm:$0xf]
        %v1769 = vld [vmem:[%s483 + $0x290] sm:$0xf]
        %v1770 = vld [vmem:[%s483 + $0x294] sm:$0xf]
        %v1771 = vld [vmem:[%s483 + $0x298] sm:$0xf]
        %v1772 = vld [vmem:[%s483 + $0x29c] sm:$0xf]
        %v1773 = vld [vmem:[%s483 + $0x2a0] sm:$0xf]
        %v1774 = vld [vmem:[%s483 + $0x2a4] sm:$0xf]
        %v1775 = vld [vmem:[%s483 + $0x2a8] sm:$0xf]
        %v1776 = vld [vmem:[%s483 + $0x2ac] sm:$0xf]
        %v1777 = vld [vmem:[%s483 + $0x2b0] sm:$0xf]
        %v1778 = vld [vmem:[%s483 + $0x2b4] sm:$0xf]
        %v1779 = vld [vmem:[%s483 + $0x2b8] sm:$0xf]
        %v1780 = vld [vmem:[%s483 + $0x2bc] sm:$0xf]
        %v1781 = vld [vmem:[%s483 + $0x2c0] sm:$0xf]
        %v1782 = vld [vmem:[%s483 + $0x2c4] sm:$0xf]
        %v1783 = vld [vmem:[%s483 + $0x2c8] sm:$0xf]
        %v1784 = vld [vmem:[%s483 + $0x2cc] sm:$0xf]
        %v1785 = vld [vmem:[%s483 + $0x2d0] sm:$0xf]
        %v1786 = vld [vmem:[%s483 + $0x2d4] sm:$0xf]
        %v1787 = vld [vmem:[%s483 + $0x2d8] sm:$0xf]
        %v1788 = vld [vmem:[%s483 + $0x2dc] sm:$0xf]
        %v1789 = vld [vmem:[%s483 + $0x2e0] sm:$0xf]
        %v1790 = vld [vmem:[%s483 + $0x2e4] sm:$0xf]
        %v1791 = vld [vmem:[%s483 + $0x2e8] sm:$0xf]
        %v1792 = vld [vmem:[%s483 + $0x2ec] sm:$0xf]
        %v1793 = vld [vmem:[%s483 + $0x2f0] sm:$0xf]
        %v1794 = vld [vmem:[%s483 + $0x2f4] sm:$0xf]
        %v1795 = vld [vmem:[%s483 + $0x2f8] sm:$0xf]
        %v1796 = vld [vmem:[%s483 + $0x2fc] sm:$0xf]
        %v1797 = vld [vmem:[%s483 + $0x300] sm:$0xf]
        %v1798 = vld [vmem:[%s483 + $0x304] sm:$0xf]
        %v1799 = vld [vmem:[%s483 + $0x308] sm:$0xf]
        %v1800 = vld [vmem:[%s483 + $0x30c] sm:$0xf]
        %v1801 = vld [vmem:[%s483 + $0x310] sm:$0xf]
        %v1802 = vld [vmem:[%s483 + $0x314] sm:$0xf]
        %v1803 = vld [vmem:[%s483 + $0x318] sm:$0xf]
        %v1804 = vld [vmem:[%s483 + $0x31c] sm:$0xf]
        %v1805 = vld [vmem:[%s483 + $0x320] sm:$0xf]
        %v1806 = vld [vmem:[%s483 + $0x324] sm:$0xf]
        %v1807 = vld [vmem:[%s483 + $0x328] sm:$0xf]
        %v1808 = vld [vmem:[%s483 + $0x32c] sm:$0xf]
        %v1809 = vld [vmem:[%s483 + $0x330] sm:$0xf]
        %v1810 = vld [vmem:[%s483 + $0x334] sm:$0xf]
        %v1811 = vld [vmem:[%s483 + $0x338] sm:$0xf]
        %v1812 = vld [vmem:[%s483 + $0x33c] sm:$0xf]
        %v1813 = vld [vmem:[%s483 + $0x340] sm:$0xf]
        %v1814 = vld [vmem:[%s483 + $0x344] sm:$0xf]
        %v1815 = vld [vmem:[%s483 + $0x348] sm:$0xf]
        %v1816 = vld [vmem:[%s483 + $0x34c] sm:$0xf]
        %v1817 = vld [vmem:[%s483 + $0x350] sm:$0xf]
        %v1818 = vld [vmem:[%s483 + $0x354] sm:$0xf]
        %v1819 = vld [vmem:[%s483 + $0x358] sm:$0xf]
        %v1820 = vld [vmem:[%s483 + $0x35c] sm:$0xf]
        %v1821 = vld [vmem:[%s483 + $0x360] sm:$0xf]
        %v1822 = vld [vmem:[%s483 + $0x364] sm:$0xf]
        %v1823 = vld [vmem:[%s483 + $0x368] sm:$0xf]
        %v1824 = vld [vmem:[%s483 + $0x36c] sm:$0xf]
        %v1825 = vld [vmem:[%s483 + $0x370] sm:$0xf]
        %v1826 = vld [vmem:[%s483 + $0x374] sm:$0xf]
        %v1827 = vld [vmem:[%s483 + $0x378] sm:$0xf]
        %v1828 = vld [vmem:[%s483 + $0x37c] sm:$0xf]
        %v1829 = vld [vmem:[%s483 + $0x380] sm:$0xf]
        %v1830 = vld [vmem:[%s483 + $0x384] sm:$0xf]
        %v1831 = vld [vmem:[%s483 + $0x388] sm:$0xf]
        %v1832 = vld [vmem:[%s483 + $0x38c] sm:$0xf]
        %v1833 = vld [vmem:[%s483 + $0x390] sm:$0xf]
        %v1834 = vld [vmem:[%s483 + $0x394] sm:$0xf]
        %v1835 = vld [vmem:[%s483 + $0x398] sm:$0xf]
        %v1836 = vld [vmem:[%s483 + $0x39c] sm:$0xf]
        %v1837 = vld [vmem:[%s483 + $0x3a0] sm:$0xf]
        %v1838 = vld [vmem:[%s483 + $0x3a4] sm:$0xf]
        %v1839 = vld [vmem:[%s483 + $0x3a8] sm:$0xf]
        %v1840 = vld [vmem:[%s483 + $0x3ac] sm:$0xf]
        %v1841 = vld [vmem:[%s483 + $0x3b0] sm:$0xf]
        %v1842 = vld [vmem:[%s483 + $0x3b4] sm:$0xf]
        %v1843 = vld [vmem:[%s483 + $0x3b8] sm:$0xf]
        %v1844 = vld [vmem:[%s483 + $0x3bc] sm:$0xf]
        %v1845 = vld [vmem:[%s483 + $0x3c0] sm:$0xf]
        %v1846 = vld [vmem:[%s483 + $0x3c4] sm:$0xf]
        %v1847 = vld [vmem:[%s483 + $0x3c8] sm:$0xf]
        %v1848 = vld [vmem:[%s483 + $0x3cc] sm:$0xf]
        %v1849 = vld [vmem:[%s483 + $0x3d0] sm:$0xf]
        %v1850 = vld [vmem:[%s483 + $0x3d4] sm:$0xf]
        %v1851 = vld [vmem:[%s483 + $0x3d8] sm:$0xf]
        %v1852 = vld [vmem:[%s483 + $0x3dc] sm:$0xf]
        %v1853 = vld [vmem:[%s483 + $0x3e0] sm:$0xf]
        %v1854 = vld [vmem:[%s483 + $0x3e4] sm:$0xf]
        %v1855 = vld [vmem:[%s483 + $0x3e8] sm:$0xf]
        %v1856 = vld [vmem:[%s483 + $0x3ec] sm:$0xf]
        %v1857 = vld [vmem:[%s483 + $0x3f0] sm:$0xf]
        %v1858 = vld [vmem:[%s483 + $0x3f4] sm:$0xf]
        %v1859 = vld [vmem:[%s483 + $0x3f8] sm:$0xf]
        %v1860 = vld [vmem:[%s483 + $0x3fc] sm:$0xf]
        %v1861 = vperm.slane %v499, 5
        %v2118 = vunpack.c.l.b16 %v1605
        %v2119 = vunpack.c.l.b16 %v1606
        %v2120 = vunpack.c.l.b16 %v1607
        %v2121 = vunpack.c.l.b16 %v1608
        %v2122 = vunpack.c.l.b16 %v1609
        %v2123 = vunpack.c.l.b16 %v1610
        %v2124 = vunpack.c.l.b16 %v1611
        %v2125 = vunpack.c.l.b16 %v1612
        %v2126 = vunpack.c.l.b16 %v1613
        %v2127 = vunpack.c.l.b16 %v1614
        %v2128 = vunpack.c.l.b16 %v1615
        %v2129 = vunpack.c.l.b16 %v1616
        %v2130 = vunpack.c.l.b16 %v1617
        %v2131 = vunpack.c.l.b16 %v1618
        %v2132 = vunpack.c.l.b16 %v1619
        %v2133 = vunpack.c.l.b16 %v1620
        %v2134 = vunpack.c.l.b16 %v1621
        %v2135 = vunpack.c.l.b16 %v1622
        %v2136 = vunpack.c.l.b16 %v1623
        %v2137 = vunpack.c.l.b16 %v1624
        %v2138 = vunpack.c.l.b16 %v1625
        %v2139 = vunpack.c.l.b16 %v1626
        %v2140 = vunpack.c.l.b16 %v1627
        %v2141 = vunpack.c.l.b16 %v1628
        %v2142 = vunpack.c.l.b16 %v1629
        %v2143 = vunpack.c.l.b16 %v1630
        %v2144 = vunpack.c.l.b16 %v1631
        %v2145 = vunpack.c.l.b16 %v1632
        %v2146 = vunpack.c.l.b16 %v1633
        %v2147 = vunpack.c.l.b16 %v1634
        %v2148 = vunpack.c.l.b16 %v1635
        %v2149 = vunpack.c.l.b16 %v1636
        %v2150 = vunpack.c.l.b16 %v1637
        %v2151 = vunpack.c.l.b16 %v1638
        %v2152 = vunpack.c.l.b16 %v1639
        %v2153 = vunpack.c.l.b16 %v1640
        %v2154 = vunpack.c.l.b16 %v1641
        %v2155 = vunpack.c.l.b16 %v1642
        %v2156 = vunpack.c.l.b16 %v1643
        %v2157 = vunpack.c.l.b16 %v1644
        %v2158 = vunpack.c.l.b16 %v1645
        %v2159 = vunpack.c.l.b16 %v1646
        %v2160 = vunpack.c.l.b16 %v1647
        %v2161 = vunpack.c.l.b16 %v1648
        %v2162 = vunpack.c.l.b16 %v1649
        %v2163 = vunpack.c.l.b16 %v1650
        %v2164 = vunpack.c.l.b16 %v1651
        %v2165 = vunpack.c.l.b16 %v1652
        %v2166 = vunpack.c.l.b16 %v1653
        %v2167 = vunpack.c.l.b16 %v1654
        %v2168 = vunpack.c.l.b16 %v1655
        %v2169 = vunpack.c.l.b16 %v1656
        %v2170 = vunpack.c.l.b16 %v1657
        %v2171 = vunpack.c.l.b16 %v1658
        %v2172 = vunpack.c.l.b16 %v1659
        %v2173 = vunpack.c.l.b16 %v1660
        %v2174 = vunpack.c.l.b16 %v1661
        %v2175 = vunpack.c.l.b16 %v1662
        %v2176 = vunpack.c.l.b16 %v1663
        %v2177 = vunpack.c.l.b16 %v1664
        %v2178 = vunpack.c.l.b16 %v1665
        %v2179 = vunpack.c.l.b16 %v1666
        %v2180 = vunpack.c.l.b16 %v1667
        %v2181 = vunpack.c.l.b16 %v1668
        %v2182 = vunpack.c.l.b16 %v1669
        %v2183 = vunpack.c.l.b16 %v1670
        %v2184 = vunpack.c.l.b16 %v1671
        %v2185 = vunpack.c.l.b16 %v1672
        %v2186 = vunpack.c.l.b16 %v1673
        %v2187 = vunpack.c.l.b16 %v1674
        %v2188 = vunpack.c.l.b16 %v1675
        %v2189 = vunpack.c.l.b16 %v1676
        %v2190 = vunpack.c.l.b16 %v1677
        %v2191 = vunpack.c.l.b16 %v1678
        %v2192 = vunpack.c.l.b16 %v1679
        %v2193 = vunpack.c.l.b16 %v1680
        %v2194 = vunpack.c.l.b16 %v1681
        %v2195 = vunpack.c.l.b16 %v1682
        %v2196 = vunpack.c.l.b16 %v1683
        %v2197 = vunpack.c.l.b16 %v1684
        %v2198 = vunpack.c.l.b16 %v1685
        %v2199 = vunpack.c.l.b16 %v1686
        %v2200 = vunpack.c.l.b16 %v1687
        %v2201 = vunpack.c.l.b16 %v1688
        %v2202 = vunpack.c.l.b16 %v1689
        %v2203 = vunpack.c.l.b16 %v1690
        %v2204 = vunpack.c.l.b16 %v1691
        %v2205 = vunpack.c.l.b16 %v1692
        %v2206 = vunpack.c.l.b16 %v1693
        %v2207 = vunpack.c.l.b16 %v1694
        %v2208 = vunpack.c.l.b16 %v1695
        %v2209 = vunpack.c.l.b16 %v1696
        %v2210 = vunpack.c.l.b16 %v1697
        %v2211 = vunpack.c.l.b16 %v1698
        %v2212 = vunpack.c.l.b16 %v1699
        %v2213 = vunpack.c.l.b16 %v1700
        %v2214 = vunpack.c.l.b16 %v1701
        %v2215 = vunpack.c.l.b16 %v1702
        %v2216 = vunpack.c.l.b16 %v1703
        %v2217 = vunpack.c.l.b16 %v1704
        %v2218 = vunpack.c.l.b16 %v1705
        %v2219 = vunpack.c.l.b16 %v1706
        %v2220 = vunpack.c.l.b16 %v1707
        %v2221 = vunpack.c.l.b16 %v1708
        %v2222 = vunpack.c.l.b16 %v1709
        %v2223 = vunpack.c.l.b16 %v1710
        %v2224 = vunpack.c.l.b16 %v1711
        %v2225 = vunpack.c.l.b16 %v1712
        %v2226 = vunpack.c.l.b16 %v1713
        %v2227 = vunpack.c.l.b16 %v1714
        %v2228 = vunpack.c.l.b16 %v1715
        %v2229 = vunpack.c.l.b16 %v1716
        %v2230 = vunpack.c.l.b16 %v1717
        %v2231 = vunpack.c.l.b16 %v1718
        %v2232 = vunpack.c.l.b16 %v1719
        %v2233 = vunpack.c.l.b16 %v1720
        %v2234 = vunpack.c.l.b16 %v1721
        %v2235 = vunpack.c.l.b16 %v1722
        %v2236 = vunpack.c.l.b16 %v1723
        %v2237 = vunpack.c.l.b16 %v1724
        %v2238 = vunpack.c.l.b16 %v1725
        %v2239 = vunpack.c.l.b16 %v1726
        %v2240 = vunpack.c.l.b16 %v1727
        %v2241 = vunpack.c.l.b16 %v1728
        %v2242 = vunpack.c.l.b16 %v1729
        %v2243 = vunpack.c.l.b16 %v1730
        %v2244 = vunpack.c.l.b16 %v1731
        %v2245 = vunpack.c.l.b16 %v1732
        %v2246 = vunpack.c.l.b16 %v1733
        %v2247 = vunpack.c.l.b16 %v1734
        %v2248 = vunpack.c.l.b16 %v1735
        %v2249 = vunpack.c.l.b16 %v1736
        %v2250 = vunpack.c.l.b16 %v1737
        %v2251 = vunpack.c.l.b16 %v1738
        %v2252 = vunpack.c.l.b16 %v1739
        %v2253 = vunpack.c.l.b16 %v1740
        %v2254 = vunpack.c.l.b16 %v1741
        %v2255 = vunpack.c.l.b16 %v1742
        %v2256 = vunpack.c.l.b16 %v1743
        %v2257 = vunpack.c.l.b16 %v1744
        %v2258 = vunpack.c.l.b16 %v1745
        %v2259 = vunpack.c.l.b16 %v1746
        %v2260 = vunpack.c.l.b16 %v1747
        %v2261 = vunpack.c.l.b16 %v1748
        %v2262 = vunpack.c.l.b16 %v1749
        %v2263 = vunpack.c.l.b16 %v1750
        %v2264 = vunpack.c.l.b16 %v1751
        %v2265 = vunpack.c.l.b16 %v1752
        %v2266 = vunpack.c.l.b16 %v1753
        %v2267 = vunpack.c.l.b16 %v1754
        %v2268 = vunpack.c.l.b16 %v1755
        %v2269 = vunpack.c.l.b16 %v1756
        %v2270 = vunpack.c.l.b16 %v1757
        %v2271 = vunpack.c.l.b16 %v1758
        %v2272 = vunpack.c.l.b16 %v1759
        %v2273 = vunpack.c.l.b16 %v1760
        %v2274 = vunpack.c.l.b16 %v1761
        %v2275 = vunpack.c.l.b16 %v1762
        %v2276 = vunpack.c.l.b16 %v1763
        %v2277 = vunpack.c.l.b16 %v1764
        %v2278 = vunpack.c.l.b16 %v1765
        %v2279 = vunpack.c.l.b16 %v1766
        %v2280 = vunpack.c.l.b16 %v1767
        %v2281 = vunpack.c.l.b16 %v1768
        %v2282 = vunpack.c.l.b16 %v1769
        %v2283 = vunpack.c.l.b16 %v1770
        %v2284 = vunpack.c.l.b16 %v1771
        %v2285 = vunpack.c.l.b16 %v1772
        %v2286 = vunpack.c.l.b16 %v1773
        %v2287 = vunpack.c.l.b16 %v1774
        %v2288 = vunpack.c.l.b16 %v1775
        %v2289 = vunpack.c.l.b16 %v1776
        %v2290 = vunpack.c.l.b16 %v1777
        %v2291 = vunpack.c.l.b16 %v1778
        %v2292 = vunpack.c.l.b16 %v1779
        %v2293 = vunpack.c.l.b16 %v1780
        %v2294 = vunpack.c.l.b16 %v1781
        %v2295 = vunpack.c.l.b16 %v1782
        %v2296 = vunpack.c.l.b16 %v1783
        %v2297 = vunpack.c.l.b16 %v1784
        %v2298 = vunpack.c.l.b16 %v1785
        %v2299 = vunpack.c.l.b16 %v1786
        %v2300 = vunpack.c.l.b16 %v1787
        %v2301 = vunpack.c.l.b16 %v1788
        %v2302 = vunpack.c.l.b16 %v1789
        %v2303 = vunpack.c.l.b16 %v1790
        %v2304 = vunpack.c.l.b16 %v1791
        %v2305 = vunpack.c.l.b16 %v1792
        %v2306 = vunpack.c.l.b16 %v1793
        %v2307 = vunpack.c.l.b16 %v1794
        %v2308 = vunpack.c.l.b16 %v1795
        %v2309 = vunpack.c.l.b16 %v1796
        %v2310 = vunpack.c.l.b16 %v1797
        %v2311 = vunpack.c.l.b16 %v1798
        %v2312 = vunpack.c.l.b16 %v1799
        %v2313 = vunpack.c.l.b16 %v1800
        %v2314 = vunpack.c.l.b16 %v1801
        %v2315 = vunpack.c.l.b16 %v1802
        %v2316 = vunpack.c.l.b16 %v1803
        %v2317 = vunpack.c.l.b16 %v1804
        %v2318 = vunpack.c.l.b16 %v1805
        %v2319 = vunpack.c.l.b16 %v1806
        %v2320 = vunpack.c.l.b16 %v1807
        %v2321 = vunpack.c.l.b16 %v1808
        %v2322 = vunpack.c.l.b16 %v1809
        %v2323 = vunpack.c.l.b16 %v1810
        %v2324 = vunpack.c.l.b16 %v1811
        %v2325 = vunpack.c.l.b16 %v1812
        %v2326 = vunpack.c.l.b16 %v1813
        %v2327 = vunpack.c.l.b16 %v1814
        %v2328 = vunpack.c.l.b16 %v1815
        %v2329 = vunpack.c.l.b16 %v1816
        %v2330 = vunpack.c.l.b16 %v1817
        %v2331 = vunpack.c.l.b16 %v1818
        %v2332 = vunpack.c.l.b16 %v1819
        %v2333 = vunpack.c.l.b16 %v1820
        %v2334 = vunpack.c.l.b16 %v1821
        %v2335 = vunpack.c.l.b16 %v1822
        %v2336 = vunpack.c.l.b16 %v1823
        %v2337 = vunpack.c.l.b16 %v1824
        %v2338 = vunpack.c.l.b16 %v1825
        %v2339 = vunpack.c.l.b16 %v1826
        %v2340 = vunpack.c.l.b16 %v1827
        %v2341 = vunpack.c.l.b16 %v1828
        %v2342 = vunpack.c.l.b16 %v1829
        %v2343 = vunpack.c.l.b16 %v1830
        %v2344 = vunpack.c.l.b16 %v1831
        %v2345 = vunpack.c.l.b16 %v1832
        %v2346 = vunpack.c.l.b16 %v1833
        %v2347 = vunpack.c.l.b16 %v1834
        %v2348 = vunpack.c.l.b16 %v1835
        %v2349 = vunpack.c.l.b16 %v1836
        %v2350 = vunpack.c.l.b16 %v1837
        %v2351 = vunpack.c.l.b16 %v1838
        %v2352 = vunpack.c.l.b16 %v1839
        %v2353 = vunpack.c.l.b16 %v1840
        %v2354 = vunpack.c.l.b16 %v1841
        %v2355 = vunpack.c.l.b16 %v1842
        %v2356 = vunpack.c.l.b16 %v1843
        %v2357 = vunpack.c.l.b16 %v1844
        %v2358 = vunpack.c.l.b16 %v1845
        %v2359 = vunpack.c.l.b16 %v1846
        %v2360 = vunpack.c.l.b16 %v1847
        %v2361 = vunpack.c.l.b16 %v1848
        %v2362 = vunpack.c.l.b16 %v1849
        %v2363 = vunpack.c.l.b16 %v1850
        %v2364 = vunpack.c.l.b16 %v1851
        %v2365 = vunpack.c.l.b16 %v1852
        %v2366 = vunpack.c.l.b16 %v1853
        %v2367 = vunpack.c.l.b16 %v1854
        %v2368 = vunpack.c.l.b16 %v1855
        %v2369 = vunpack.c.l.b16 %v1856
        %v2370 = vunpack.c.l.b16 %v1857
        %v2371 = vunpack.c.l.b16 %v1858
        %v2372 = vunpack.c.l.b16 %v1859
        %v2373 = vunpack.c.l.b16 %v1860
        %v2374 = vpack.c.b16 %v2119, %v2118
        %v2375 = vpack.c.b16 %v2121, %v2120
        %v2376 = vpack.c.b16 %v2123, %v2122
        %v2377 = vpack.c.b16 %v2125, %v2124
        %v2378 = vpack.c.b16 %v2127, %v2126
        %v2379 = vpack.c.b16 %v2129, %v2128
        %v2380 = vpack.c.b16 %v2131, %v2130
        %v2381 = vpack.c.b16 %v2133, %v2132
        %v2382 = vpack.c.b16 %v2135, %v2134
        %v2383 = vpack.c.b16 %v2137, %v2136
        %v2384 = vpack.c.b16 %v2139, %v2138
        %v2385 = vpack.c.b16 %v2141, %v2140
        %v2386 = vpack.c.b16 %v2143, %v2142
        %v2387 = vpack.c.b16 %v2145, %v2144
        %v2388 = vpack.c.b16 %v2147, %v2146
        %v2389 = vpack.c.b16 %v2149, %v2148
        %v2390 = vpack.c.b16 %v2151, %v2150
        %v2391 = vpack.c.b16 %v2153, %v2152
        %v2392 = vpack.c.b16 %v2155, %v2154
        %v2393 = vpack.c.b16 %v2157, %v2156
        %v2394 = vpack.c.b16 %v2159, %v2158
        %v2395 = vpack.c.b16 %v2161, %v2160
        %v2396 = vpack.c.b16 %v2163, %v2162
        %v2397 = vpack.c.b16 %v2165, %v2164
        %v2398 = vpack.c.b16 %v2167, %v2166
        %v2399 = vpack.c.b16 %v2169, %v2168
        %v2400 = vpack.c.b16 %v2171, %v2170
        %v2401 = vpack.c.b16 %v2173, %v2172
        %v2402 = vpack.c.b16 %v2175, %v2174
        %v2403 = vpack.c.b16 %v2177, %v2176
        %v2404 = vpack.c.b16 %v2179, %v2178
        %v2405 = vpack.c.b16 %v2181, %v2180
        %v2406 = vpack.c.b16 %v2183, %v2182
        %v2407 = vpack.c.b16 %v2185, %v2184
        %v2408 = vpack.c.b16 %v2187, %v2186
        %v2409 = vpack.c.b16 %v2189, %v2188
        %v2410 = vpack.c.b16 %v2191, %v2190
        %v2411 = vpack.c.b16 %v2193, %v2192
        %v2412 = vpack.c.b16 %v2195, %v2194
        %v2413 = vpack.c.b16 %v2197, %v2196
        %v2414 = vpack.c.b16 %v2199, %v2198
        %v2415 = vpack.c.b16 %v2201, %v2200
        %v2416 = vpack.c.b16 %v2203, %v2202
        %v2417 = vpack.c.b16 %v2205, %v2204
        %v2418 = vpack.c.b16 %v2207, %v2206
        %v2419 = vpack.c.b16 %v2209, %v2208
        %v2420 = vpack.c.b16 %v2211, %v2210
        %v2421 = vpack.c.b16 %v2213, %v2212
        %v2422 = vpack.c.b16 %v2215, %v2214
        %v2423 = vpack.c.b16 %v2217, %v2216
        %v2424 = vpack.c.b16 %v2219, %v2218
        %v2425 = vpack.c.b16 %v2221, %v2220
        %v2426 = vpack.c.b16 %v2223, %v2222
        %v2427 = vpack.c.b16 %v2225, %v2224
        %v2428 = vpack.c.b16 %v2227, %v2226
        %v2429 = vpack.c.b16 %v2229, %v2228
        %v2430 = vpack.c.b16 %v2231, %v2230
        %v2431 = vpack.c.b16 %v2233, %v2232
        %v2432 = vpack.c.b16 %v2235, %v2234
        %v2433 = vpack.c.b16 %v2237, %v2236
        %v2434 = vpack.c.b16 %v2239, %v2238
        %v2435 = vpack.c.b16 %v2241, %v2240
        %v2436 = vpack.c.b16 %v2243, %v2242
        %v2437 = vpack.c.b16 %v2245, %v2244
        %v2438 = vpack.c.b16 %v2247, %v2246
        %v2439 = vpack.c.b16 %v2249, %v2248
        %v2440 = vpack.c.b16 %v2251, %v2250
        %v2441 = vpack.c.b16 %v2253, %v2252
        %v2442 = vpack.c.b16 %v2255, %v2254
        %v2443 = vpack.c.b16 %v2257, %v2256
        %v2444 = vpack.c.b16 %v2259, %v2258
        %v2445 = vpack.c.b16 %v2261, %v2260
        %v2446 = vpack.c.b16 %v2263, %v2262
        %v2447 = vpack.c.b16 %v2265, %v2264
        %v2448 = vpack.c.b16 %v2267, %v2266
        %v2449 = vpack.c.b16 %v2269, %v2268
        %v2450 = vpack.c.b16 %v2271, %v2270
        %v2451 = vpack.c.b16 %v2273, %v2272
        %v2452 = vpack.c.b16 %v2275, %v2274
        %v2453 = vpack.c.b16 %v2277, %v2276
        %v2454 = vpack.c.b16 %v2279, %v2278
        %v2455 = vpack.c.b16 %v2281, %v2280
        %v2456 = vpack.c.b16 %v2283, %v2282
        %v2457 = vpack.c.b16 %v2285, %v2284
        %v2458 = vpack.c.b16 %v2287, %v2286
        %v2459 = vpack.c.b16 %v2289, %v2288
        %v2460 = vpack.c.b16 %v2291, %v2290
        %v2461 = vpack.c.b16 %v2293, %v2292
        %v2462 = vpack.c.b16 %v2295, %v2294
        %v2463 = vpack.c.b16 %v2297, %v2296
        %v2464 = vpack.c.b16 %v2299, %v2298
        %v2465 = vpack.c.b16 %v2301, %v2300
        %v2466 = vpack.c.b16 %v2303, %v2302
        %v2467 = vpack.c.b16 %v2305, %v2304
        %v2468 = vpack.c.b16 %v2307, %v2306
        %v2469 = vpack.c.b16 %v2309, %v2308
        %v2470 = vpack.c.b16 %v2311, %v2310
        %v2471 = vpack.c.b16 %v2313, %v2312
        %v2472 = vpack.c.b16 %v2315, %v2314
        %v2473 = vpack.c.b16 %v2317, %v2316
        %v2474 = vpack.c.b16 %v2319, %v2318
        %v2475 = vpack.c.b16 %v2321, %v2320
        %v2476 = vpack.c.b16 %v2323, %v2322
        %v2477 = vpack.c.b16 %v2325, %v2324
        %v2478 = vpack.c.b16 %v2327, %v2326
        %v2479 = vpack.c.b16 %v2329, %v2328
        %v2480 = vpack.c.b16 %v2331, %v2330
        %v2481 = vpack.c.b16 %v2333, %v2332
        %v2482 = vpack.c.b16 %v2335, %v2334
        %v2483 = vpack.c.b16 %v2337, %v2336
        %v2484 = vpack.c.b16 %v2339, %v2338
        %v2485 = vpack.c.b16 %v2341, %v2340
        %v2486 = vpack.c.b16 %v2343, %v2342
        %v2487 = vpack.c.b16 %v2345, %v2344
        %v2488 = vpack.c.b16 %v2347, %v2346
        %v2489 = vpack.c.b16 %v2349, %v2348
        %v2490 = vpack.c.b16 %v2351, %v2350
        %v2491 = vpack.c.b16 %v2353, %v2352
        %v2492 = vpack.c.b16 %v2355, %v2354
        %v2493 = vpack.c.b16 %v2357, %v2356
        %v2494 = vpack.c.b16 %v2359, %v2358
        %v2495 = vpack.c.b16 %v2361, %v2360
        %v2496 = vpack.c.b16 %v2363, %v2362
        %v2497 = vpack.c.b16 %v2365, %v2364
        %v2498 = vpack.c.b16 %v2367, %v2366
        %v2499 = vpack.c.b16 %v2369, %v2368
        %v2500 = vpack.c.b16 %v2371, %v2370
        %v2501 = vpack.c.b16 %v2373, %v2372
        %2630 = vmatpush.bf16.msra.mxu0 %v2381
        %2631 = vmatpush.bf16.msra.mxu0 %v2380
        %2632 = vmatpush.bf16.msra.mxu0 %v2379
        %2633 = vmatpush.bf16.msra.mxu0 %v2378
        %2634 = vmatpush.bf16.msra.mxu0 %v2377
        %2635 = vmatpush.bf16.msra.mxu0 %v2376
        %2636 = vmatpush.bf16.msra.mxu0 %v2375
        %2637 = vmatpush.bf16.msra.mxu0 %v2374
        %2638 = vmatmul.bf16.gmra.mxu0 %v1589
        %v2639 = vpop.f32.mrf.mxu0
        %v2640 = vadd.f32 %v1861, %v2639
        %v2641 = vpop.f32.mrf.mxu0
        %v2642 = vadd.f32 %v1861, %v2641
        %2643 = vdwg.mxu0
        %2644 = vmatpush.bf16.msra.mxu0 %v2389
        %2645 = vmatpush.bf16.msra.mxu0 %v2388
        %2646 = vmatpush.bf16.msra.mxu0 %v2387
        %2647 = vmatpush.bf16.msra.mxu0 %v2386
        %2648 = vmatpush.bf16.msra.mxu0 %v2385
        %2649 = vmatpush.bf16.msra.mxu0 %v2384
        %2650 = vmatpush.bf16.msra.mxu0 %v2383
        %2651 = vmatpush.bf16.msra.mxu0 %v2382
        %2652 = vmatmul.bf16.gmra.mxu0 %v1590
        %v2653 = vpop.f32.mrf.mxu0
        %v2654 = vadd.f32 %v2640, %v2653
        %v2655 = vpop.f32.mrf.mxu0
        %v2656 = vadd.f32 %v2642, %v2655
        %2657 = vdwg.mxu0
        %2658 = vmatpush.bf16.msra.mxu0 %v2397
        %2659 = vmatpush.bf16.msra.mxu0 %v2396
        %2660 = vmatpush.bf16.msra.mxu0 %v2395
        %2661 = vmatpush.bf16.msra.mxu0 %v2394
        %2662 = vmatpush.bf16.msra.mxu0 %v2393
        %2663 = vmatpush.bf16.msra.mxu0 %v2392
        %2664 = vmatpush.bf16.msra.mxu0 %v2391
        %2665 = vmatpush.bf16.msra.mxu0 %v2390
        %2666 = vmatmul.bf16.gmra.mxu0 %v1591
        %v2667 = vpop.f32.mrf.mxu0
        %v2668 = vadd.f32 %v2654, %v2667
        %v2669 = vpop.f32.mrf.mxu0
        %v2670 = vadd.f32 %v2656, %v2669
        %2671 = vdwg.mxu0
        %2672 = vmatpush.bf16.msra.mxu0 %v2405
        %2673 = vmatpush.bf16.msra.mxu0 %v2404
        %2674 = vmatpush.bf16.msra.mxu0 %v2403
        %2675 = vmatpush.bf16.msra.mxu0 %v2402
        %2676 = vmatpush.bf16.msra.mxu0 %v2401
        %2677 = vmatpush.bf16.msra.mxu0 %v2400
        %2678 = vmatpush.bf16.msra.mxu0 %v2399
        %2679 = vmatpush.bf16.msra.mxu0 %v2398
        %2680 = vmatmul.bf16.gmra.mxu0 %v1592
        %v2681 = vpop.f32.mrf.mxu0
        %v2682 = vadd.f32 %v2668, %v2681
        %v2683 = vpop.f32.mrf.mxu0
        %v2684 = vadd.f32 %v2670, %v2683
        %2685 = vdwg.mxu0
        %2686 = vmatpush.bf16.msra.mxu0 %v2413
        %2687 = vmatpush.bf16.msra.mxu0 %v2412
        %2688 = vmatpush.bf16.msra.mxu0 %v2411
        %2689 = vmatpush.bf16.msra.mxu0 %v2410
        %2690 = vmatpush.bf16.msra.mxu0 %v2409
        %2691 = vmatpush.bf16.msra.mxu0 %v2408
        %2692 = vmatpush.bf16.msra.mxu0 %v2407
        %2693 = vmatpush.bf16.msra.mxu0 %v2406
        %2694 = vmatmul.bf16.gmra.mxu0 %v1593
        %v2695 = vpop.f32.mrf.mxu0
        %v2696 = vadd.f32 %v2682, %v2695
        %v2697 = vpop.f32.mrf.mxu0
        %v2698 = vadd.f32 %v2684, %v2697
        %2699 = vdwg.mxu0
        %2700 = vmatpush.bf16.msra.mxu0 %v2421
        %2701 = vmatpush.bf16.msra.mxu0 %v2420
        %2702 = vmatpush.bf16.msra.mxu0 %v2419
        %2703 = vmatpush.bf16.msra.mxu0 %v2418
        %2704 = vmatpush.bf16.msra.mxu0 %v2417
        %2705 = vmatpush.bf16.msra.mxu0 %v2416
        %2706 = vmatpush.bf16.msra.mxu0 %v2415
        %2707 = vmatpush.bf16.msra.mxu0 %v2414
        %2708 = vmatmul.bf16.gmra.mxu0 %v1594
        %v2709 = vpop.f32.mrf.mxu0
        %v2710 = vadd.f32 %v2696, %v2709
        %v2711 = vpop.f32.mrf.mxu0
        %v2712 = vadd.f32 %v2698, %v2711
        %2713 = vdwg.mxu0
        %2714 = vmatpush.bf16.msra.mxu0 %v2429
        %2715 = vmatpush.bf16.msra.mxu0 %v2428
        %2716 = vmatpush.bf16.msra.mxu0 %v2427
        %2717 = vmatpush.bf16.msra.mxu0 %v2426
        %2718 = vmatpush.bf16.msra.mxu0 %v2425
        %2719 = vmatpush.bf16.msra.mxu0 %v2424
        %2720 = vmatpush.bf16.msra.mxu0 %v2423
        %2721 = vmatpush.bf16.msra.mxu0 %v2422
        %2722 = vmatmul.bf16.gmra.mxu0 %v1595
        %v2723 = vpop.f32.mrf.mxu0
        %v2724 = vadd.f32 %v2710, %v2723
        %v2725 = vpop.f32.mrf.mxu0
        %v2726 = vadd.f32 %v2712, %v2725
        %2727 = vdwg.mxu0
        %2728 = vmatpush.bf16.msra.mxu0 %v2437
        %2729 = vmatpush.bf16.msra.mxu0 %v2436
        %2730 = vmatpush.bf16.msra.mxu0 %v2435
        %2731 = vmatpush.bf16.msra.mxu0 %v2434
        %2732 = vmatpush.bf16.msra.mxu0 %v2433
        %2733 = vmatpush.bf16.msra.mxu0 %v2432
        %2734 = vmatpush.bf16.msra.mxu0 %v2431
        %2735 = vmatpush.bf16.msra.mxu0 %v2430
        %2736 = vmatmul.bf16.gmra.mxu0 %v1596
        %v2737 = vpop.f32.mrf.mxu0
        %v2738 = vadd.f32 %v2724, %v2737
        %v2739 = vpop.f32.mrf.mxu0
        %v2740 = vadd.f32 %v2726, %v2739
        %2741 = vdwg.mxu0
        %2742 = vmatpush.bf16.msra.mxu0 %v2445
        %2743 = vmatpush.bf16.msra.mxu0 %v2444
        %2744 = vmatpush.bf16.msra.mxu0 %v2443
        %2745 = vmatpush.bf16.msra.mxu0 %v2442
        %2746 = vmatpush.bf16.msra.mxu0 %v2441
        %2747 = vmatpush.bf16.msra.mxu0 %v2440
        %2748 = vmatpush.bf16.msra.mxu0 %v2439
        %2749 = vmatpush.bf16.msra.mxu0 %v2438
        %2750 = vmatmul.bf16.gmra.mxu0 %v1597
        %v2751 = vpop.f32.mrf.mxu0
        %v2752 = vadd.f32 %v2738, %v2751
        %v2753 = vpop.f32.mrf.mxu0
        %v2754 = vadd.f32 %v2740, %v2753
        %2755 = vdwg.mxu0
        %2756 = vmatpush.bf16.msra.mxu0 %v2453
        %2757 = vmatpush.bf16.msra.mxu0 %v2452
        %2758 = vmatpush.bf16.msra.mxu0 %v2451
        %2759 = vmatpush.bf16.msra.mxu0 %v2450
        %2760 = vmatpush.bf16.msra.mxu0 %v2449
        %2761 = vmatpush.bf16.msra.mxu0 %v2448
        %2762 = vmatpush.bf16.msra.mxu0 %v2447
        %2763 = vmatpush.bf16.msra.mxu0 %v2446
        %2764 = vmatmul.bf16.gmra.mxu0 %v1598
        %v2765 = vpop.f32.mrf.mxu0
        %v2766 = vadd.f32 %v2752, %v2765
        %v2767 = vpop.f32.mrf.mxu0
        %v2768 = vadd.f32 %v2754, %v2767
        %2769 = vdwg.mxu0
        %2770 = vmatpush.bf16.msra.mxu0 %v2461
        %2771 = vmatpush.bf16.msra.mxu0 %v2460
        %2772 = vmatpush.bf16.msra.mxu0 %v2459
        %2773 = vmatpush.bf16.msra.mxu0 %v2458
        %2774 = vmatpush.bf16.msra.mxu0 %v2457
        %2775 = vmatpush.bf16.msra.mxu0 %v2456
        %2776 = vmatpush.bf16.msra.mxu0 %v2455
        %2777 = vmatpush.bf16.msra.mxu0 %v2454
        %2778 = vmatmul.bf16.gmra.mxu0 %v1599
        %v2779 = vpop.f32.mrf.mxu0
        %v2780 = vadd.f32 %v2766, %v2779
        %v2781 = vpop.f32.mrf.mxu0
        %v2782 = vadd.f32 %v2768, %v2781
        %2783 = vdwg.mxu0
        %2784 = vmatpush.bf16.msra.mxu0 %v2469
        %2785 = vmatpush.bf16.msra.mxu0 %v2468
        %2786 = vmatpush.bf16.msra.mxu0 %v2467
        %2787 = vmatpush.bf16.msra.mxu0 %v2466
        %2788 = vmatpush.bf16.msra.mxu0 %v2465
        %2789 = vmatpush.bf16.msra.mxu0 %v2464
        %2790 = vmatpush.bf16.msra.mxu0 %v2463
        %2791 = vmatpush.bf16.msra.mxu0 %v2462
        %2792 = vmatmul.bf16.gmra.mxu0 %v1600
        %v2793 = vpop.f32.mrf.mxu0
        %v2794 = vadd.f32 %v2780, %v2793
        %v2795 = vpop.f32.mrf.mxu0
        %v2796 = vadd.f32 %v2782, %v2795
        %2797 = vdwg.mxu0
        %2798 = vmatpush.bf16.msra.mxu0 %v2477
        %2799 = vmatpush.bf16.msra.mxu0 %v2476
        %2800 = vmatpush.bf16.msra.mxu0 %v2475
        %2801 = vmatpush.bf16.msra.mxu0 %v2474
        %2802 = vmatpush.bf16.msra.mxu0 %v2473
        %2803 = vmatpush.bf16.msra.mxu0 %v2472
        %2804 = vmatpush.bf16.msra.mxu0 %v2471
        %2805 = vmatpush.bf16.msra.mxu0 %v2470
        %2806 = vmatmul.bf16.gmra.mxu0 %v1601
        %v2807 = vpop.f32.mrf.mxu0
        %v2808 = vadd.f32 %v2794, %v2807
        %v2809 = vpop.f32.mrf.mxu0
        %v2810 = vadd.f32 %v2796, %v2809
        %2811 = vdwg.mxu0
        %2812 = vmatpush.bf16.msra.mxu0 %v2485
        %2813 = vmatpush.bf16.msra.mxu0 %v2484
        %2814 = vmatpush.bf16.msra.mxu0 %v2483
        %2815 = vmatpush.bf16.msra.mxu0 %v2482
        %2816 = vmatpush.bf16.msra.mxu0 %v2481
        %2817 = vmatpush.bf16.msra.mxu0 %v2480
        %2818 = vmatpush.bf16.msra.mxu0 %v2479
        %2819 = vmatpush.bf16.msra.mxu0 %v2478
        %2820 = vmatmul.bf16.gmra.mxu0 %v1602
        %v2821 = vpop.f32.mrf.mxu0
        %v2822 = vadd.f32 %v2808, %v2821
        %v2823 = vpop.f32.mrf.mxu0
        %v2824 = vadd.f32 %v2810, %v2823
        %2825 = vdwg.mxu0
        %2826 = vmatpush.bf16.msra.mxu0 %v2493
        %2827 = vmatpush.bf16.msra.mxu0 %v2492
        %2828 = vmatpush.bf16.msra.mxu0 %v2491
        %2829 = vmatpush.bf16.msra.mxu0 %v2490
        %2830 = vmatpush.bf16.msra.mxu0 %v2489
        %2831 = vmatpush.bf16.msra.mxu0 %v2488
        %2832 = vmatpush.bf16.msra.mxu0 %v2487
        %2833 = vmatpush.bf16.msra.mxu0 %v2486
        %2834 = vmatmul.bf16.gmra.mxu0 %v1603
        %v2835 = vpop.f32.mrf.mxu0
        %v2836 = vadd.f32 %v2822, %v2835
        %v2837 = vpop.f32.mrf.mxu0
        %v2838 = vadd.f32 %v2824, %v2837
        %2839 = vdwg.mxu0
        %2840 = vmatpush.bf16.msra.mxu0 %v2501
        %2841 = vmatpush.bf16.msra.mxu0 %v2500
        %2842 = vmatpush.bf16.msra.mxu0 %v2499
        %2843 = vmatpush.bf16.msra.mxu0 %v2498
        %2844 = vmatpush.bf16.msra.mxu0 %v2497
        %2845 = vmatpush.bf16.msra.mxu0 %v2496
        %2846 = vmatpush.bf16.msra.mxu0 %v2495
        %2847 = vmatpush.bf16.msra.mxu0 %v2494
        %2848 = vmatmul.bf16.gmra.mxu0 %v1604
        %v2849 = vpop.f32.mrf.mxu0
        %v2850 = vadd.f32 %v2836, %v2849
        %v2851 = vpop.f32.mrf.mxu0
        %v2852 = vadd.f32 %v2838, %v2851
        %2853 = vdwg.mxu0
        %v2854 = vadd.f32 %v907, %v2850
        %v2855 = vadd.f32 %v908, %v2852
        %v2856 = vsel %vm555, %v2854, 0.0
        %2857 = vadd.xlane.f32.xlu0 %v2856
        %v2858 = vpop.xlane.xlu0 %2857
        %v2859 = vsel %vm854, %v2855, 0.0
        %2860 = vadd.xlane.f32.xlu0 %v2859
        %v2861 = vpop.xlane.xlu0 %2860
        %v2862 = vmul.f32 %v2858, %v864
        %v2863 = vmul.f32 %v2861, %v864
        %v2864 = vsub.f32 %v2854, %v2862
        %v2865 = vsub.f32 %v2855, %v2863
        %v2866 = vmul.f32 %v2864, %v2864
        %v2867 = vmul.f32 %v2865, %v2865
        %v2868 = vsel %vm555, %v2866, 0.0
        %2869 = vadd.xlane.f32.xlu0 %v2868
        %v2870 = vpop.xlane.xlu0 %2869
        %v2871 = vsel %vm854, %v2867, 0.0
        %2872 = vadd.xlane.f32.xlu0 %v2871
        %v2873 = vpop.xlane.xlu0 %2872
        %v2874 = vmul.f32 %v2870, %v864
        %v2875 = vmul.f32 %v2873, %v864
        %v2876 = vadd.f32 %v2874, 1e-05
        %v2877 = vadd.f32 %v2875, 1e-05
        %v2878 = vrsqrt.pop %v2876
        %v2879 = vmul.f32 %v2878, %v2876
        %v2880 = vmul.f32 %v2879, %v2878
        %v2881 = vmul.f32 0.5, %v2880
        %v2882 = vsub.f32 1.5, %v2881
        %v2883 = vmul.f32 %v2878, %v2882
        %vm2884 = vweird.f32 %v2876
        %vm2885 = vweird.f32 %v2878
        %vm2886 = vmor %vm2884, %vm2885
        %v2887 = vsel %vm2886, %v2878, %v2883
        %v2888 = vrsqrt.pop %v2877
        %v2889 = vmul.f32 %v2888, %v2877
        %v2890 = vmul.f32 %v2889, %v2888
        %v2891 = vmul.f32 0.5, %v2890
        %v2892 = vsub.f32 1.5, %v2891
        %v2893 = vmul.f32 %v2888, %v2892
        %vm2894 = vweird.f32 %v2877
        %vm2895 = vweird.f32 %v2888
        %vm2896 = vmor %vm2894, %vm2895
        %v2897 = vsel %vm2896, %v2888, %v2893
        %v2898 = vmul.f32 %v2864, %v2887
        %v2899 = vmul.f32 %v2865, %v2897
        %v2900 = vperm.slane %v499, 3
        %v2901 = vmul.f32 %v2898, %v2900
        %v2902 = vmul.f32 %v2899, %v2900
        %v2903 = vperm.slane %v499, 4
        %v2904 = vadd.f32 %v2901, %v2903
        %v2905 = vadd.f32 %v2902, %v2903
        %2906 = vst.msk [vmem:[#allocation2] sm:$0xff] %vm555, %v2904
        %2907 = vst.msk [vmem:[#allocation2 + $0x8] sm:$0xf] %vm854, %v2905
        %p2908 = scmp.eq.s32.totalorder %s23, 1
        // Predicated region
        $region69: #{tpu_custom_call.1} parent=63 // pred_check
          %p2909 = pneg %p2908
        $region70: #{tpu_custom_call.1} parent=63 // pred_check_branch
          %2911 = sbr.rel (%p2909) target = $region72
        $region71: #{tpu_custom_call.1} parent=63 // pred_region
          %v2912 = vld [vmem:[%s10] sm:$0x1]
          %v2914 = vperm.slane %v2912, 0
          %v2916 = vadd.f32 %v2914, 0.0
          %v2917 = vld [vmem:[%s9] sm:$0xff]
          %v2918 = vld [vmem:[%s9 + $0x8] sm:$0xff]
          %v2919 = vld [vmem:[%s9 + $0x10] sm:$0xff]
          %v2920 = vld [vmem:[%s9 + $0x18] sm:$0xff]
          %v2921 = vld [vmem:[%s9 + $0x20] sm:$0xff]
          %v2922 = vld [vmem:[%s9 + $0x28] sm:$0xff]
          %v2923 = vld [vmem:[%s9 + $0x30] sm:$0xff]
          %v2924 = vld [vmem:[%s9 + $0x38] sm:$0xff]
          %v2926 = vsel %vm555, %v2904, 0
          %2928 = vmatpush.msra.mxu0 0.0
          %2929 = vmatpush.msra.mxu0 0.0
          %2930 = vmatpush.msra.mxu0 0.0
          %2931 = vmatpush.msra.mxu0 0.0
          %2932 = vmatpush.msra.mxu0 0.0
          %2933 = vmatpush.msra.mxu0 0.0
          %2934 = vmatpush.msra.mxu0 0.0
          %2935 = vmatpush.msra.mxu0 0.0
          %2936 = vmatpush.msra.mxu0 %v2924
          %2937 = vmatpush.msra.mxu0 %v2923
          %2938 = vmatpush.msra.mxu0 %v2922
          %2939 = vmatpush.msra.mxu0 %v2921
          %2940 = vmatpush.msra.mxu0 %v2920
          %2941 = vmatpush.msra.mxu0 %v2919
          %2942 = vmatpush.msra.mxu0 %v2918
          %2943 = vmatpush.msra.mxu0 %v2917
          %2944 = vmatmul.f32.gmra.mxu0 %v2926
          %v2945 = vpop.f32.mrf.mxu0
          %v2946 = vadd.f32 0.0, %v2945
          %2947 = vdwg.mxu0
          %v2948 = vadd.f32 %v2916, %v2946
          %s2949 = scalar_lea.vmem %s9, 64
          %v2950 = vld [vmem:[%s2949] sm:$0xff]
          %v2951 = vld [vmem:[%s2949 + $0x8] sm:$0xff]
          %v2952 = vld [vmem:[%s2949 + $0x10] sm:$0xff]
          %v2953 = vld [vmem:[%s2949 + $0x18] sm:$0xff]
          %v2954 = vld [vmem:[%s2949 + $0x20] sm:$0xff]
          %v2955 = vld [vmem:[%s2949 + $0x28] sm:$0xff]
          %v2956 = vld [vmem:[%s2949 + $0x30] sm:$0xff]
          %v2957 = vld [vmem:[%s2949 + $0x38] sm:$0xff]
          %v2958 = vrot.slane %v2904, 2
          %v2959 = vsel %vm555, %v2958, 0
          %2961 = vmatpush.msra.mxu0 0.0
          %2962 = vmatpush.msra.mxu0 0.0
          %2963 = vmatpush.msra.mxu0 0.0
          %2964 = vmatpush.msra.mxu0 0.0
          %2965 = vmatpush.msra.mxu0 0.0
          %2966 = vmatpush.msra.mxu0 0.0
          %2967 = vmatpush.msra.mxu0 0.0
          %2968 = vmatpush.msra.mxu0 0.0
          %2969 = vmatpush.msra.mxu0 %v2957
          %2970 = vmatpush.msra.mxu0 %v2956
          %2971 = vmatpush.msra.mxu0 %v2955
          %2972 = vmatpush.msra.mxu0 %v2954
          %2973 = vmatpush.msra.mxu0 %v2953
          %2974 = vmatpush.msra.mxu0 %v2952
          %2975 = vmatpush.msra.mxu0 %v2951
          %2976 = vmatpush.msra.mxu0 %v2950
          %2977 = vmatmul.f32.gmra.mxu0 %v2959
          %v2978 = vpop.f32.mrf.mxu0
          %v2979 = vadd.f32 0.0, %v2978
          %2980 = vdwg.mxu0
          %v2981 = vadd.f32 %v2948, %v2979
          %s2982 = scalar_lea.vmem %s9, 128
          %v2983 = vld [vmem:[%s2982] sm:$0xff]
          %v2984 = vld [vmem:[%s2982 + $0x8] sm:$0xff]
          %v2985 = vld [vmem:[%s2982 + $0x10] sm:$0xff]
          %v2986 = vld [vmem:[%s2982 + $0x18] sm:$0xff]
          %v2987 = vld [vmem:[%s2982 + $0x20] sm:$0xff]
          %v2988 = vld [vmem:[%s2982 + $0x28] sm:$0xff]
          %v2989 = vld [vmem:[%s2982 + $0x30] sm:$0xff]
          %v2990 = vld [vmem:[%s2982 + $0x38] sm:$0xff]
          %v2991 = vrot.slane %v2904, 4
          %v2992 = vsel %vm555, %v2991, 0
          %2994 = vmatpush.msra.mxu0 0.0
          %2995 = vmatpush.msra.mxu0 0.0
          %2996 = vmatpush.msra.mxu0 0.0
          %2997 = vmatpush.msra.mxu0 0.0
          %2998 = vmatpush.msra.mxu0 0.0
          %2999 = vmatpush.msra.mxu0 0.0
          %3000 = vmatpush.msra.mxu0 0.0
          %3001 = vmatpush.msra.mxu0 0.0
          %3002 = vmatpush.msra.mxu0 %v2990
          %3003 = vmatpush.msra.mxu0 %v2989
          %3004 = vmatpush.msra.mxu0 %v2988
          %3005 = vmatpush.msra.mxu0 %v2987
          %3006 = vmatpush.msra.mxu0 %v2986
          %3007 = vmatpush.msra.mxu0 %v2985
          %3008 = vmatpush.msra.mxu0 %v2984
          %3009 = vmatpush.msra.mxu0 %v2983
          %3010 = vmatmul.f32.gmra.mxu0 %v2992
          %v3011 = vpop.f32.mrf.mxu0
          %v3012 = vadd.f32 0.0, %v3011
          %3013 = vdwg.mxu0
          %v3014 = vadd.f32 %v2981, %v3012
          %s3015 = scalar_lea.vmem %s9, 192
          %v3016 = vld [vmem:[%s3015] sm:$0xff]
          %v3017 = vld [vmem:[%s3015 + $0x8] sm:$0xff]
          %v3018 = vld [vmem:[%s3015 + $0x10] sm:$0xff]
          %v3019 = vld [vmem:[%s3015 + $0x18] sm:$0xff]
          %v3020 = vld [vmem:[%s3015 + $0x20] sm:$0xff]
          %v3021 = vld [vmem:[%s3015 + $0x28] sm:$0xff]
          %v3022 = vld [vmem:[%s3015 + $0x30] sm:$0xff]
          %v3023 = vld [vmem:[%s3015 + $0x38] sm:$0xff]
          %v3024 = vrot.slane %v2904, 6
          %v3025 = vsel %vm555, %v3024, 0
          %3027 = vmatpush.msra.mxu0 0.0
          %3028 = vmatpush.msra.mxu0 0.0
          %3029 = vmatpush.msra.mxu0 0.0
          %3030 = vmatpush.msra.mxu0 0.0
          %3031 = vmatpush.msra.mxu0 0.0
          %3032 = vmatpush.msra.mxu0 0.0
          %3033 = vmatpush.msra.mxu0 0.0
          %3034 = vmatpush.msra.mxu0 0.0
          %3035 = vmatpush.msra.mxu0 %v3023
          %3036 = vmatpush.msra.mxu0 %v3022
          %3037 = vmatpush.msra.mxu0 %v3021
          %3038 = vmatpush.msra.mxu0 %v3020
          %3039 = vmatpush.msra.mxu0 %v3019
          %3040 = vmatpush.msra.mxu0 %v3018
          %3041 = vmatpush.msra.mxu0 %v3017
          %3042 = vmatpush.msra.mxu0 %v3016
          %3043 = vmatmul.f32.gmra.mxu0 %v3025
          %v3044 = vpop.f32.mrf.mxu0
          %v3045 = vadd.f32 0.0, %v3044
          %3046 = vdwg.mxu0
          %v3047 = vadd.f32 %v3014, %v3045
          %s3048 = scalar_lea.vmem %s9, 256
          %v3049 = vld [vmem:[%s3048] sm:$0xff]
          %v3050 = vld [vmem:[%s3048 + $0x8] sm:$0xff]
          %v3051 = vld [vmem:[%s3048 + $0x10] sm:$0xff]
          %v3052 = vld [vmem:[%s3048 + $0x18] sm:$0xff]
          %v3053 = vld [vmem:[%s3048 + $0x20] sm:$0xff]
          %v3054 = vld [vmem:[%s3048 + $0x28] sm:$0xff]
          %v3055 = vld [vmem:[%s3048 + $0x30] sm:$0xff]
          %v3056 = vld [vmem:[%s3048 + $0x38] sm:$0xff]
          %v3058 = vsel %vm555, %v2905, 0
          %3060 = vmatpush.msra.mxu0 0.0
          %3061 = vmatpush.msra.mxu0 0.0
          %3062 = vmatpush.msra.mxu0 0.0
          %3063 = vmatpush.msra.mxu0 0.0
          %3064 = vmatpush.msra.mxu0 0.0
          %3065 = vmatpush.msra.mxu0 0.0
          %3066 = vmatpush.msra.mxu0 0.0
          %3067 = vmatpush.msra.mxu0 0.0
          %3068 = vmatpush.msra.mxu0 %v3056
          %3069 = vmatpush.msra.mxu0 %v3055
          %3070 = vmatpush.msra.mxu0 %v3054
          %3071 = vmatpush.msra.mxu0 %v3053
          %3072 = vmatpush.msra.mxu0 %v3052
          %3073 = vmatpush.msra.mxu0 %v3051
          %3074 = vmatpush.msra.mxu0 %v3050
          %3075 = vmatpush.msra.mxu0 %v3049
          %3076 = vmatmul.f32.gmra.mxu0 %v3058
          %v3077 = vpop.f32.mrf.mxu0
          %v3078 = vadd.f32 0.0, %v3077
          %3079 = vdwg.mxu0
          %v3080 = vadd.f32 %v3047, %v3078
          %s3081 = scalar_lea.vmem %s9, 320
          %v3082 = vld [vmem:[%s3081] sm:$0xff]
          %v3083 = vld [vmem:[%s3081 + $0x8] sm:$0xff]
          %v3084 = vld [vmem:[%s3081 + $0x10] sm:$0xff]
          %v3085 = vld [vmem:[%s3081 + $0x18] sm:$0xff]
          %v3086 = vld [vmem:[%s3081 + $0x20] sm:$0xff]
          %v3087 = vld [vmem:[%s3081 + $0x28] sm:$0xff]
          %v3088 = vld [vmem:[%s3081 + $0x30] sm:$0xff]
          %v3089 = vld [vmem:[%s3081 + $0x38] sm:$0xff]
          %v3090 = vrot.slane %v2905, 2
          %v3091 = vsel %vm555, %v3090, 0
          %3093 = vmatpush.msra.mxu0 0.0
          %3094 = vmatpush.msra.mxu0 0.0
          %3095 = vmatpush.msra.mxu0 0.0
          %3096 = vmatpush.msra.mxu0 0.0
          %3097 = vmatpush.msra.mxu0 0.0
          %3098 = vmatpush.msra.mxu0 0.0
          %3099 = vmatpush.msra.mxu0 0.0
          %3100 = vmatpush.msra.mxu0 0.0
          %3101 = vmatpush.msra.mxu0 %v3089
          %3102 = vmatpush.msra.mxu0 %v3088
          %3103 = vmatpush.msra.mxu0 %v3087
          %3104 = vmatpush.msra.mxu0 %v3086
          %3105 = vmatpush.msra.mxu0 %v3085
          %3106 = vmatpush.msra.mxu0 %v3084
          %3107 = vmatpush.msra.mxu0 %v3083
          %3108 = vmatpush.msra.mxu0 %v3082
          %3109 = vmatmul.f32.gmra.mxu0 %v3091
          %v3110 = vpop.f32.mrf.mxu0
          %v3111 = vadd.f32 0.0, %v3110
          %3112 = vdwg.mxu0
          %v3113 = vadd.f32 %v3080, %v3111
          %vm3114 = vcmask 517120
          %3115 = vst.msk [vmem:[#allocation3] sm:$0x3] %vm3114, %v3113
        $region72: #{tpu_custom_call.1} parent=63 // pred_fallthru
          _
        // Predicated region
        $region73: #{tpu_custom_call.1} parent=63 // pred_check
          %p3116 = pneg %p302
        $region74: #{tpu_custom_call.1} parent=63 // pred_check_branch
          %3118 = sbr.rel (%p3116) target = $region76
        $region75: #{tpu_custom_call.1} parent=63 // pred_region
          %3120 = vsyncadd [#allocation4], 0
          %s3122 = sshll.u32 [#allocation3], 4
          %s3123 = int_to_ptr.vmem [resolvable:$true] %s3122
          %s3124 = sshll.u32 %s11, 4
          %s3125 = int_to_ptr.hbm [resolvable:$true] %s3124
          %3127 = dma.vmem_to_hbm [thread:$0]  %s3123, 32, %s3125, [#allocation4]
        $region76: #{tpu_custom_call.1} parent=63 // pred_fallthru
          _
        // Predicated region
        $region77: #{tpu_custom_call.1} parent=63 // pred_check
          %p3128 = pneg %p302
        $region78: #{tpu_custom_call.1} parent=63 // pred_check_branch
          %3130 = sbr.rel (%p3128) target = $region80
        $region79: #{tpu_custom_call.1} parent=63 // pred_region
          %3132 = dma.done [#allocation4], 32
        $region80: #{tpu_custom_call.1} parent=63 // pred_fallthru
          _
      $region64: #{tpu_custom_call.1} parent=5 // pred_fallthru
        _
      %p3133 = scmp.le.s32.totalorder 2, %s18
      // Predicated region
      $region81: #{tpu_custom_call.1} parent=5 // pred_check
        %p3134 = pneg %p3133
      $region82: #{tpu_custom_call.1} parent=5 // pred_check_branch
        %3136 = sbr.rel (%p3134) target = $region84
      $region83: #{tpu_custom_call.1} parent=5 // pred_region
        %s3137 = ssub.s32 %s18, 2
      $region84: #{tpu_custom_call.1} parent=5 // pred_fallthru
        _
    $region6: #{tpu_custom_call.1} parent=1 // loop_footer
      %s22 = sadd.s32 1, %s18
    $region7: #{tpu_custom_call.1} parent=1 // loop_footer_branch
      %17 = sbr.rel target = $region3
    $region8: #{tpu_custom_call.1} parent=1 // loop_exit
      _
    %3138 = vsyncpa [#allocation4], 1
    %s3139 = scalar_lea.sflag [#allocation4], 1
    %3140 = vsyncpa %s3139, 1

</llo_original>
